<compile_context>
chip_gen: v7x
topology: tpu7x:2x2x1
jax: 0.10.0
libtpu: 0.0.40
codegen_flags: <defaults>
</compile_context>

<pallas_src>
import functools

import jax
import jax.numpy as jnp
import numpy as np
from jax.experimental import pallas as pl
from jax.experimental.pallas import tpu as pltpu


def _round_up(x, m):
    return ((x + m - 1) // m) * m


def _sigmoid(x):
    # 1 EUP op (tanh) instead of exp + reciprocal (2 EUP ops).
    return 0.5 * (jnp.tanh(0.5 * x) + 1.0)


# ------------------------------- Pallas kernel --------------------------------

def _timelstm_chunk_kernel(pre_ref, wh_ref, hseq_ref, hlast_ref, clast_ref,
                           *, hidden_pad, chunk, seq_len, needs_guard):
    """One grid step = one chunk of `chunk` timesteps for one batch block.

    pre_ref : (chunk, Bb, 5*Hp)  precomputed non-recurrent gate terms
              [pre_i | pre_cwa | pre_o | t1 | t2] along the lane axis.
    wh_ref  : (Hp, 3*Hp)         recurrent weight, per-gate blocks lane-aligned.
    hseq_ref: (chunk, Bb, Hp)    hidden sequence output for this chunk.
    hlast_ref/clast_ref: (Bb, Hp) carries; output-resident across the chunk axis.
    """
    Hp = hidden_pad
    s = pl.program_id(1)     # chunk index (arbitrary / sequential axis)

    @pl.when(s == 0)
    def _():
        hlast_ref[...] = jnp.zeros_like(hlast_ref)
        clast_ref[...] = jnp.zeros_like(clast_ref)

    wh = wh_ref[...]          # load once per chunk

    def step(j, carry):
        h, c = carry
        # The only recurrent matmul: (Bb, Hp) @ (Hp, 3*Hp) on the MXU.
        hWh = jnp.dot(h.astype(wh.dtype), wh, preferred_element_type=jnp.float32)
        g = pre_ref[j]                                     # (Bb, 5*Hp)

        i_t = _sigmoid(g[:, 0 * Hp:1 * Hp] + hWh[:, 0 * Hp:1 * Hp])
        cwa = jnp.tanh(g[:, 1 * Hp:2 * Hp] + hWh[:, 1 * Hp:2 * Hp])
        o_t = _sigmoid(g[:, 2 * Hp:3 * Hp] + hWh[:, 2 * Hp:3 * Hp])
        t1 = g[:, 3 * Hp:4 * Hp]                           # sigmoid already applied
        t2 = g[:, 4 * Hp:5 * Hp]                           # sigmoid already applied

        it1 = i_t * t1
        c_tilde = _sigmoid((1.0 - it1) * c + it1 * cwa)
        c_new = _sigmoid((1.0 - i_t) * c + i_t * t2 * cwa)
        h_new = o_t + jnp.tanh(c_tilde)

        hseq_ref[j] = h_new                                # lane-dense (Bb, Hp) store

        if needs_guard:                                    # only when S was padded
            valid = (s * chunk + j) < seq_len
            h_new = jnp.where(valid, h_new, h)
            c_new = jnp.where(valid, c_new, c)
        return h_new, c_new

    h0 = hlast_ref[...]
    c0 = clast_ref[...]
    h_f, c_f = jax.lax.fori_loop(0, chunk, step, (h0, c0), unroll=True)
    hlast_ref[...] = h_f
    clast_ref[...] = c_f


# ------------------------------ layer wrapper ----------------------------------

def timelstm_layer(x_seq, xx_seq, td_seq, params, *, seq_chunk=16,
                   batch_block=None, weight_dtype=jnp.float32):
    """One TimeLSTM layer over the full sequence.

    x_seq: (S, B, F), xx_seq/td_seq: (S, B, 1).
    Returns (hidden_seq (S, B, H), h_last (B, H), c_last (B, H)).
    """
    S, B, F = x_seq.shape
    wx, wh, wxm = params["wx"], params["wh"], params["wxm"]
    wt1, wt, bias = params["wt1"], params["wt"], params["bias"]
    H = wh.shape[0]

    Hp = max(_round_up(H, 128), 128)        # lane-dense hidden dim
    Bp = max(_round_up(B, 8), 8)            # full-sublane batch
    T = min(S, seq_chunk)                   # timesteps per grid step
    Sp = _round_up(S, T)
    n_chunks = Sp // T
    Bb = Bp if batch_block is None else batch_block
    assert Bp % Bb == 0
    n_b = Bp // Bb                          # >1 shards batch across cores (v7x)
    needs_guard = (Sp != S)

    x = x_seq.astype(jnp.float32)
    xx = xx_seq.astype(jnp.float32)
    td = td_seq.astype(jnp.float32)

    # PyTorch re-assigns weights_t1 = Parameter(weights_t1.clamp(max=0)) each forward;
    # functionally a clamp of the weight.
    wt1c = jnp.minimum(wt1, 0.0)
    b = bias

    # ---- non-recurrent precompute (one big XLA matmul + broadcasts), all (S, B, H) ----
    xWx = jnp.einsum("sbf,fg->sbg", x, wx)
    pre_i = xWx[..., 0 * H:1 * H] + b[0 * H:1 * H]
    pre_c = xWx[..., 1 * H:2 * H] + b[3 * H:4 * H]
    pre_o = xWx[..., 2 * H:3 * H] + td * wt[:, H:] + b[4 * H:5 * H]
    t1 = _sigmoid(xx * wxm[:, :H] + jnp.tanh(td * wt1c) + b[1 * H:2 * H])
    t2 = _sigmoid(xx * wxm[:, H:] + jnp.tanh(td * wt[:, :H]) + b[2 * H:3 * H])

    def _pad_h(a):
        return jnp.pad(a, ((0, 0), (0, 0), (0, Hp - H)))

    pre = jnp.concatenate([_pad_h(pre_i), _pad_h(pre_c), _pad_h(pre_o),
                           _pad_h(t1), _pad_h(t2)], axis=-1)        # (S, B, 5*Hp)
    pre = jnp.pad(pre, ((0, Sp - S), (0, Bp - B), (0, 0)))          # (Sp, Bp, 5*Hp)

    # ---- recurrent weight, per-gate blocks padded to lane-aligned Hp columns ----
    whp = jnp.zeros((Hp, 3 * Hp), jnp.float32)
    for g_i in range(3):
        whp = whp.at[:H, g_i * Hp:g_i * Hp + H].set(wh[:, g_i * H:(g_i + 1) * H])
    whp = whp.astype(weight_dtype)   # bf16 on v6e/v7x halves weight VMEM/DMA bytes

    kernel = functools.partial(_timelstm_chunk_kernel, hidden_pad=Hp,
                               chunk=T, seq_len=S, needs_guard=needs_guard)

    hseq_p, hlast_p, clast_p = pl.pallas_call(
        kernel,
        out_shape=(
            jax.ShapeDtypeStruct((Sp, Bp, Hp), jnp.float32),
            jax.ShapeDtypeStruct((Bp, Hp), jnp.float32),
            jax.ShapeDtypeStruct((Bp, Hp), jnp.float32),
        ),
        grid=(n_b, n_chunks),
        in_specs=[
            pl.BlockSpec((T, Bb, 5 * Hp), lambda bi, si: (si, bi, 0)),  # pre slab chunk
            pl.BlockSpec((Hp, 3 * Hp), lambda bi, si: (0, 0)),          # Wh resident
        ],
        out_specs=(
            pl.BlockSpec((T, Bb, Hp), lambda bi, si: (si, bi, 0)),      # hidden chunk
            pl.BlockSpec((Bb, Hp), lambda bi, si: (bi, 0)),             # h carry/out
            pl.BlockSpec((Bb, Hp), lambda bi, si: (bi, 0)),             # c carry/out
        ),
        compiler_params=pltpu.CompilerParams(
            dimension_semantics=("parallel", "arbitrary")),             # batch || , seq serial
    )(pre, whp)

    hidden = hseq_p[:S, :B, :H]
    return hidden, hlast_p[:B, :H], clast_p[:B, :H]


# ------------------------------ stacked wrapper ---------------------------------

def stacked_time_lstm(x_for_h, x_for_x, t_diff, params_list, **layer_kwargs):
    """Mirrors StackedTimeLSTM.forward: returns (layer_output_list, last_state_list)."""
    B, S, _ = x_for_h.shape
    x_seq = jnp.transpose(x_for_h, (1, 0, 2))   # (S, B, F)
    xx_seq = jnp.transpose(x_for_x, (1, 0, 2))  # (S, B, 1)
    td_seq = jnp.transpose(t_diff, (1, 0, 2))   # (S, B, 1)

    cur = x_seq
    hidden = h_last = c_last = None
    for params in params_list:
        hidden, h_last, c_last = timelstm_layer(cur, xx_seq, td_seq, params,
                                                **layer_kwargs)
        cur = hidden                            # next layer consumes this hidden sequence

    H = hidden.shape[-1]
    # PyTorch: layer_output = stack of (B, 1, H) along dim=1 -> (B, S, 1, H)
    layer_output = jnp.transpose(hidden, (1, 0, 2)).reshape(B, S, 1, H)
    h_out = hidden[-1][:, None, :]              # last timestep hidden, (B, 1, H)
    last_state = [h_out, (h_last, c_last)]
    return [layer_output], [last_state]


# ----------------------- parameter construction ---------------------------------

def init_timelstm_params(key, input_dim, hidden_dim):
    """Deterministic synthetic params matching TimeLSTM.__init__ shapes/init scheme."""
    H = hidden_dim
    ks = jax.random.split(key, 5)

    def xavier(k, shape):
        bound = (6.0 / (shape[0] + shape[1])) ** 0.5
        return jax.random.uniform(k, shape, jnp.float32, -bound, bound)

    return {
        "wx": xavier(ks[0], (input_dim, 3 * H)),        # weights_x
        "wxm": xavier(ks[1], (1, 2 * H)),               # weights_x_maintained
        "wh": xavier(ks[2], (H, 3 * H)),                # weights_h
        "wt1": xavier(ks[3], (1, H)),                   # weights_t1
        "wt": xavier(ks[4], (1, 2 * H)),                # weights_t
        "bias": jnp.zeros((5 * H,), jnp.float32),       # 1-D params are zero-init
    }


# ----------------------- pure-JAX reference (for validation) --------------------

def reference_layer(x_seq, xx_seq, td_seq, params):
    H = params["wh"].shape[0]
    wx, wh, wxm = params["wx"], params["wh"], params["wxm"]
    wt1 = jnp.minimum(params["wt1"], 0.0)
    wt, b = params["wt"], params["bias"]
    S, B, _ = x_seq.shape
    h = jnp.zeros((B, H), jnp.float32)
    c = jnp.zeros((B, H), jnp.float32)
    outs = []
    for k in range(S):
        x, xx, td = x_seq[k], xx_seq[k], td_seq[k]
        i_t = jax.nn.sigmoid(x @ wx[:, :H] + h @ wh[:, :H] + b[:H])
        t1 = jax.nn.sigmoid(xx @ wxm[:, :H] + jnp.tanh(td @ wt1) + b[H:2 * H])
        t2 = jax.nn.sigmoid(xx @ wxm[:, H:2 * H] + jnp.tanh(td @ wt[:, :H]) + b[2 * H:3 * H])
        cwa = jnp.tanh(x @ wx[:, H:2 * H] + h @ wh[:, H:2 * H] + b[3 * H:4 * H])
        c_tilde = jax.nn.sigmoid((1 - i_t * t1) * c + i_t * t1 * cwa)
        c = jax.nn.sigmoid((1 - i_t) * c + i_t * t2 * cwa)
        o = jax.nn.sigmoid(x @ wx[:, 2 * H:] + td @ wt[:, H:] + h @ wh[:, 2 * H:] + b[4 * H:])
        h = o + jnp.tanh(c_tilde)
        outs.append(h)
    return jnp.stack(outs, 0), h, c


# ----------------------------------- main ----------------------------------------

if __name__ == "__main__":
    key = jax.random.PRNGKey(0)
    B, S, F = 2, 8, 4
    hidden_dims = [32, 32]      # StackedTimeLSTM(input_dim=4, hidden_dim=[32,32], num_layers=2)

    k_xh, k_xx, k_t, k_p = jax.random.split(key, 4)
    x_for_h = jax.random.normal(k_xh, (B, S, F), jnp.float32)
    x_for_x = jax.random.normal(k_xx, (B, S, 1), jnp.float32)
    t_diff = jax.random.uniform(k_t, (B, S, 1), jnp.float32)

    params_list = []
    cur_dim = F
    pk = k_p
    for hd in hidden_dims:
        pk, sub = jax.random.split(pk)
        params_list.append(init_timelstm_params(sub, cur_dim, hd))
        cur_dim = hd

    fwd = jax.jit(stacked_time_lstm)
    layer_output_list, last_state_list = fwd(x_for_h, x_for_x, t_diff, params_list)
    jax.block_until_ready(layer_output_list)
    jax.block_until_ready(last_state_list)

    # Validate against a pure-JAX reference of the same recurrence.
    x_seq = jnp.transpose(x_for_h, (1, 0, 2))
    xx_seq = jnp.transpose(x_for_x, (1, 0, 2))
    td_seq = jnp.transpose(t_diff, (1, 0, 2))
    cur = x_seq
    for p in params_list:
        cur, h_ref, c_ref = reference_layer(cur, xx_seq, td_seq, p)
    ref_out = jnp.transpose(cur, (1, 0, 2))                    # (B, S, H)

    np.testing.assert_allclose(np.asarray(layer_output_list[0][:, :, 0, :]),
                               np.asarray(ref_out), rtol=2e-3, atol=2e-3)
    np.testing.assert_allclose(np.asarray(last_state_list[0][1][0]),
                               np.asarray(h_ref), rtol=2e-3, atol=2e-3)
    np.testing.assert_allclose(np.asarray(last_state_list[0][1][1]),
                               np.asarray(c_ref), rtol=2e-3, atol=2e-3)

    print("KERNEL_OK")
</pallas_src>

<mosaic_0001>
module attributes {stable_mosaic.version = 11 : i64} {
  func.func @_timelstm_chunk_kernel(%arg0: i32, %arg1: i32, %arg2: memref<8x8x640xf32, #tpu.memory_space<vmem>>, %arg3: memref<128x384xf32, #tpu.memory_space<vmem>>, %arg4: memref<8x8x128xf32, #tpu.memory_space<vmem>>, %arg5: memref<8x128xf32, #tpu.memory_space<vmem>>, %arg6: memref<8x128xf32, #tpu.memory_space<vmem>>) attributes {dimension_semantics = [#tpu.dimension_semantics<parallel>, #tpu.dimension_semantics<arbitrary>], iteration_bounds = array<i64: 1, 1>, scalar_prefetch = 0 : i64, scratch_operands = 0 : i64, tpu.core_type = #tpu.core_type<tc>, window_params = [{transform_indices = @transform_0, window_bounds = array<i64: 8, 8, 640>}, {pipeline_mode = #tpu.pipeline_mode<synchronous>, transform_indices = @transform_1, window_bounds = array<i64: 128, 384>}, {transform_indices = @transform_2, window_bounds = array<i64: 8, 8, 128>}, {transform_indices = @transform_3, window_bounds = array<i64: 8, 128>}, {transform_indices = @transform_4, window_bounds = array<i64: 8, 128>}]} {
    %c0_i32 = arith.constant 0 : i32
    %0 = arith.cmpi eq, %arg1, %c0_i32 : i32
    %1 = arith.extui %0 : i1 to i32
    %c0_i32_0 = arith.constant 0 : i32
    %2 = arith.cmpi ne, %1, %c0_i32_0 : i32
    scf.if %2 {
      %cst_162 = arith.constant 0.000000e+00 : f32
      %504 = vector.broadcast %cst_162 : f32 to vector<8x128xf32>
      %c0_163 = arith.constant 0 : index
      %c0_164 = arith.constant 0 : index
      %505 = vector.load %arg5[%c0_163, %c0_164] : memref<8x128xf32, #tpu.memory_space<vmem>>, vector<8x128xf32>
      tpu.vector_store %arg5[%c0_163, %c0_164], %504 {strides = array<i32>} : memref<8x128xf32, #tpu.memory_space<vmem>>, vector<8x128xf32>,
      %cst_165 = arith.constant 0.000000e+00 : f32
      %506 = vector.broadcast %cst_165 : f32 to vector<8x128xf32>
      %c0_166 = arith.constant 0 : index
      %c0_167 = arith.constant 0 : index
      %507 = vector.load %arg6[%c0_166, %c0_167] : memref<8x128xf32, #tpu.memory_space<vmem>>, vector<8x128xf32>
      tpu.vector_store %arg6[%c0_166, %c0_167], %506 {strides = array<i32>} : memref<8x128xf32, #tpu.memory_space<vmem>>, vector<8x128xf32>,
    } else {
    }
    %c0 = arith.constant 0 : index
    %c0_1 = arith.constant 0 : index
    %3 = vector.load %arg3[%c0, %c0_1] : memref<128x384xf32, #tpu.memory_space<vmem>>, vector<128x384xf32>
    %c0_2 = arith.constant 0 : index
    %c0_3 = arith.constant 0 : index
    %4 = vector.load %arg5[%c0_2, %c0_3] : memref<8x128xf32, #tpu.memory_space<vmem>>, vector<8x128xf32>
    %c0_4 = arith.constant 0 : index
    %c0_5 = arith.constant 0 : index
    %5 = vector.load %arg6[%c0_4, %c0_5] : memref<8x128xf32, #tpu.memory_space<vmem>>, vector<8x128xf32>
    %c0_i32_6 = arith.constant 0 : i32
    %cst = arith.constant dense<0.000000e+00> : vector<8x384xf32>
    %6 = tpu.matmul %4, %3, %cst {dimension_numbers = #tpu.dot_dimension_numbers<[1], [0], [0], [1], [0, 0, 1, 1], [], []>} : vector<8x128xf32>, vector<128x384xf32>, vector<8x384xf32> -> vector<8x384xf32>
    %7 = arith.index_cast %c0_i32_6 : i32 to index
    %c0_7 = arith.constant 0 : index
    %c0_8 = arith.constant 0 : index
    %8 = vector.load %arg2[%7, %c0_7, %c0_8] : memref<8x8x640xf32, #tpu.memory_space<vmem>>, vector<1x8x640xf32>
    %9 = vector.shape_cast %8 : vector<1x8x640xf32> to vector<8x640xf32>
    %10 = vector.extract_strided_slice %9 {offsets = [0, 0], sizes = [8, 128], strides = [1, 1]} : vector<8x640xf32> to vector<8x128xf32>
    %11 = vector.extract_strided_slice %6 {offsets = [0, 0], sizes = [8, 128], strides = [1, 1]} : vector<8x384xf32> to vector<8x128xf32>
    %12 = arith.addf %10, %11 : vector<8x128xf32>
    %cst_9 = arith.constant 5.000000e-01 : f32
    %13 = vector.broadcast %cst_9 : f32 to vector<8x128xf32>
    %14 = arith.mulf %13, %12 : vector<8x128xf32>
    %15 = math.tanh %14 : vector<8x128xf32>
    %cst_10 = arith.constant 1.000000e+00 : f32
    %16 = vector.broadcast %cst_10 : f32 to vector<8x128xf32>
    %17 = arith.addf %15, %16 : vector<8x128xf32>
    %cst_11 = arith.constant 5.000000e-01 : f32
    %18 = vector.broadcast %cst_11 : f32 to vector<8x128xf32>
    %19 = arith.mulf %18, %17 : vector<8x128xf32>
    %20 = vector.extract_strided_slice %9 {offsets = [0, 128], sizes = [8, 128], strides = [1, 1]} : vector<8x640xf32> to vector<8x128xf32>
    %21 = vector.extract_strided_slice %6 {offsets = [0, 128], sizes = [8, 128], strides = [1, 1]} : vector<8x384xf32> to vector<8x128xf32>
    %22 = arith.addf %20, %21 : vector<8x128xf32>
    %23 = math.tanh %22 : vector<8x128xf32>
    %24 = vector.extract_strided_slice %9 {offsets = [0, 256], sizes = [8, 128], strides = [1, 1]} : vector<8x640xf32> to vector<8x128xf32>
    %25 = vector.extract_strided_slice %6 {offsets = [0, 256], sizes = [8, 128], strides = [1, 1]} : vector<8x384xf32> to vector<8x128xf32>
    %26 = arith.addf %24, %25 : vector<8x128xf32>
    %cst_12 = arith.constant 5.000000e-01 : f32
    %27 = vector.broadcast %cst_12 : f32 to vector<8x128xf32>
    %28 = arith.mulf %27, %26 : vector<8x128xf32>
    %29 = math.tanh %28 : vector<8x128xf32>
    %cst_13 = arith.constant 1.000000e+00 : f32
    %30 = vector.broadcast %cst_13 : f32 to vector<8x128xf32>
    %31 = arith.addf %29, %30 : vector<8x128xf32>
    %cst_14 = arith.constant 5.000000e-01 : f32
    %32 = vector.broadcast %cst_14 : f32 to vector<8x128xf32>
    %33 = arith.mulf %32, %31 : vector<8x128xf32>
    %34 = vector.extract_strided_slice %9 {offsets = [0, 384], sizes = [8, 128], strides = [1, 1]} : vector<8x640xf32> to vector<8x128xf32>
    %35 = vector.extract_strided_slice %9 {offsets = [0, 512], sizes = [8, 128], strides = [1, 1]} : vector<8x640xf32> to vector<8x128xf32>
    %36 = arith.mulf %19, %34 : vector<8x128xf32>
    %cst_15 = arith.constant 1.000000e+00 : f32
    %37 = vector.broadcast %cst_15 : f32 to vector<8x128xf32>
    %38 = arith.subf %37, %36 : vector<8x128xf32>
    %39 = arith.mulf %38, %5 : vector<8x128xf32>
    %40 = arith.mulf %36, %23 : vector<8x128xf32>
    %41 = arith.addf %39, %40 : vector<8x128xf32>
    %cst_16 = arith.constant 5.000000e-01 : f32
    %42 = vector.broadcast %cst_16 : f32 to vector<8x128xf32>
    %43 = arith.mulf %42, %41 : vector<8x128xf32>
    %44 = math.tanh %43 : vector<8x128xf32>
    %cst_17 = arith.constant 1.000000e+00 : f32
    %45 = vector.broadcast %cst_17 : f32 to vector<8x128xf32>
    %46 = arith.addf %44, %45 : vector<8x128xf32>
    %cst_18 = arith.constant 5.000000e-01 : f32
    %47 = vector.broadcast %cst_18 : f32 to vector<8x128xf32>
    %48 = arith.mulf %47, %46 : vector<8x128xf32>
    %cst_19 = arith.constant 1.000000e+00 : f32
    %49 = vector.broadcast %cst_19 : f32 to vector<8x128xf32>
    %50 = arith.subf %49, %19 : vector<8x128xf32>
    %51 = arith.mulf %50, %5 : vector<8x128xf32>
    %52 = arith.mulf %19, %35 : vector<8x128xf32>
    %53 = arith.mulf %52, %23 : vector<8x128xf32>
    %54 = arith.addf %51, %53 : vector<8x128xf32>
    %cst_20 = arith.constant 5.000000e-01 : f32
    %55 = vector.broadcast %cst_20 : f32 to vector<8x128xf32>
    %56 = arith.mulf %55, %54 : vector<8x128xf32>
    %57 = math.tanh %56 : vector<8x128xf32>
    %cst_21 = arith.constant 1.000000e+00 : f32
    %58 = vector.broadcast %cst_21 : f32 to vector<8x128xf32>
    %59 = arith.addf %57, %58 : vector<8x128xf32>
    %cst_22 = arith.constant 5.000000e-01 : f32
    %60 = vector.broadcast %cst_22 : f32 to vector<8x128xf32>
    %61 = arith.mulf %60, %59 : vector<8x128xf32>
    %62 = math.tanh %48 : vector<8x128xf32>
    %63 = arith.addf %33, %62 : vector<8x128xf32>
    %64 = arith.index_cast %c0_i32_6 : i32 to index
    %c0_23 = arith.constant 0 : index
    %c0_24 = arith.constant 0 : index
    %65 = vector.load %arg4[%64, %c0_23, %c0_24] : memref<8x8x128xf32, #tpu.memory_space<vmem>>, vector<1x8x128xf32>
    %66 = vector.shape_cast %65 : vector<1x8x128xf32> to vector<8x128xf32>
    %67 = vector.shape_cast %63 : vector<8x128xf32> to vector<1x8x128xf32>
    tpu.vector_store %arg4[%64, %c0_23, %c0_24], %67 {strides = array<i32>} : memref<8x8x128xf32, #tpu.memory_space<vmem>>, vector<1x8x128xf32>,
    %c1_i32 = arith.constant 1 : i32
    %cst_25 = arith.constant dense<0.000000e+00> : vector<8x384xf32>
    %68 = tpu.matmul %63, %3, %cst_25 {dimension_numbers = #tpu.dot_dimension_numbers<[1], [0], [0], [1], [0, 0, 1, 1], [], []>} : vector<8x128xf32>, vector<128x384xf32>, vector<8x384xf32> -> vector<8x384xf32>
    %69 = arith.index_cast %c1_i32 : i32 to index
    %c0_26 = arith.constant 0 : index
    %c0_27 = arith.constant 0 : index
    %70 = vector.load %arg2[%69, %c0_26, %c0_27] : memref<8x8x640xf32, #tpu.memory_space<vmem>>, vector<1x8x640xf32>
    %71 = vector.shape_cast %70 : vector<1x8x640xf32> to vector<8x640xf32>
    %72 = vector.extract_strided_slice %71 {offsets = [0, 0], sizes = [8, 128], strides = [1, 1]} : vector<8x640xf32> to vector<8x128xf32>
    %73 = vector.extract_strided_slice %68 {offsets = [0, 0], sizes = [8, 128], strides = [1, 1]} : vector<8x384xf32> to vector<8x128xf32>
    %74 = arith.addf %72, %73 : vector<8x128xf32>
    %cst_28 = arith.constant 5.000000e-01 : f32
    %75 = vector.broadcast %cst_28 : f32 to vector<8x128xf32>
    %76 = arith.mulf %75, %74 : vector<8x128xf32>
    %77 = math.tanh %76 : vector<8x128xf32>
    %cst_29 = arith.constant 1.000000e+00 : f32
    %78 = vector.broadcast %cst_29 : f32 to vector<8x128xf32>
    %79 = arith.addf %77, %78 : vector<8x128xf32>
    %cst_30 = arith.constant 5.000000e-01 : f32
    %80 = vector.broadcast %cst_30 : f32 to vector<8x128xf32>
    %81 = arith.mulf %80, %79 : vector<8x128xf32>
    %82 = vector.extract_strided_slice %71 {offsets = [0, 128], sizes = [8, 128], strides = [1, 1]} : vector<8x640xf32> to vector<8x128xf32>
    %83 = vector.extract_strided_slice %68 {offsets = [0, 128], sizes = [8, 128], strides = [1, 1]} : vector<8x384xf32> to vector<8x128xf32>
    %84 = arith.addf %82, %83 : vector<8x128xf32>
    %85 = math.tanh %84 : vector<8x128xf32>
    %86 = vector.extract_strided_slice %71 {offsets = [0, 256], sizes = [8, 128], strides = [1, 1]} : vector<8x640xf32> to vector<8x128xf32>
    %87 = vector.extract_strided_slice %68 {offsets = [0, 256], sizes = [8, 128], strides = [1, 1]} : vector<8x384xf32> to vector<8x128xf32>
    %88 = arith.addf %86, %87 : vector<8x128xf32>
    %cst_31 = arith.constant 5.000000e-01 : f32
    %89 = vector.broadcast %cst_31 : f32 to vector<8x128xf32>
    %90 = arith.mulf %89, %88 : vector<8x128xf32>
    %91 = math.tanh %90 : vector<8x128xf32>
    %cst_32 = arith.constant 1.000000e+00 : f32
    %92 = vector.broadcast %cst_32 : f32 to vector<8x128xf32>
    %93 = arith.addf %91, %92 : vector<8x128xf32>
    %cst_33 = arith.constant 5.000000e-01 : f32
    %94 = vector.broadcast %cst_33 : f32 to vector<8x128xf32>
    %95 = arith.mulf %94, %93 : vector<8x128xf32>
    %96 = vector.extract_strided_slice %71 {offsets = [0, 384], sizes = [8, 128], strides = [1, 1]} : vector<8x640xf32> to vector<8x128xf32>
    %97 = vector.extract_strided_slice %71 {offsets = [0, 512], sizes = [8, 128], strides = [1, 1]} : vector<8x640xf32> to vector<8x128xf32>
    %98 = arith.mulf %81, %96 : vector<8x128xf32>
    %cst_34 = arith.constant 1.000000e+00 : f32
    %99 = vector.broadcast %cst_34 : f32 to vector<8x128xf32>
    %100 = arith.subf %99, %98 : vector<8x128xf32>
    %101 = arith.mulf %100, %61 : vector<8x128xf32>
    %102 = arith.mulf %98, %85 : vector<8x128xf32>
    %103 = arith.addf %101, %102 : vector<8x128xf32>
    %cst_35 = arith.constant 5.000000e-01 : f32
    %104 = vector.broadcast %cst_35 : f32 to vector<8x128xf32>
    %105 = arith.mulf %104, %103 : vector<8x128xf32>
    %106 = math.tanh %105 : vector<8x128xf32>
    %cst_36 = arith.constant 1.000000e+00 : f32
    %107 = vector.broadcast %cst_36 : f32 to vector<8x128xf32>
    %108 = arith.addf %106, %107 : vector<8x128xf32>
    %cst_37 = arith.constant 5.000000e-01 : f32
    %109 = vector.broadcast %cst_37 : f32 to vector<8x128xf32>
    %110 = arith.mulf %109, %108 : vector<8x128xf32>
    %cst_38 = arith.constant 1.000000e+00 : f32
    %111 = vector.broadcast %cst_38 : f32 to vector<8x128xf32>
    %112 = arith.subf %111, %81 : vector<8x128xf32>
    %113 = arith.mulf %112, %61 : vector<8x128xf32>
    %114 = arith.mulf %81, %97 : vector<8x128xf32>
    %115 = arith.mulf %114, %85 : vector<8x128xf32>
    %116 = arith.addf %113, %115 : vector<8x128xf32>
    %cst_39 = arith.constant 5.000000e-01 : f32
    %117 = vector.broadcast %cst_39 : f32 to vector<8x128xf32>
    %118 = arith.mulf %117, %116 : vector<8x128xf32>
    %119 = math.tanh %118 : vector<8x128xf32>
    %cst_40 = arith.constant 1.000000e+00 : f32
    %120 = vector.broadcast %cst_40 : f32 to vector<8x128xf32>
    %121 = arith.addf %119, %120 : vector<8x128xf32>
    %cst_41 = arith.constant 5.000000e-01 : f32
    %122 = vector.broadcast %cst_41 : f32 to vector<8x128xf32>
    %123 = arith.mulf %122, %121 : vector<8x128xf32>
    %124 = math.tanh %110 : vector<8x128xf32>
    %125 = arith.addf %95, %124 : vector<8x128xf32>
    %126 = arith.index_cast %c1_i32 : i32 to index
    %c0_42 = arith.constant 0 : index
    %c0_43 = arith.constant 0 : index
    %127 = vector.load %arg4[%126, %c0_42, %c0_43] : memref<8x8x128xf32, #tpu.memory_space<vmem>>, vector<1x8x128xf32>
    %128 = vector.shape_cast %127 : vector<1x8x128xf32> to vector<8x128xf32>
    %129 = vector.shape_cast %125 : vector<8x128xf32> to vector<1x8x128xf32>
    tpu.vector_store %arg4[%126, %c0_42, %c0_43], %129 {strides = array<i32>} : memref<8x8x128xf32, #tpu.memory_space<vmem>>, vector<1x8x128xf32>,
    %c2_i32 = arith.constant 2 : i32
    %cst_44 = arith.constant dense<0.000000e+00> : vector<8x384xf32>
    %130 = tpu.matmul %125, %3, %cst_44 {dimension_numbers = #tpu.dot_dimension_numbers<[1], [0], [0], [1], [0, 0, 1, 1], [], []>} : vector<8x128xf32>, vector<128x384xf32>, vector<8x384xf32> -> vector<8x384xf32>
    %131 = arith.index_cast %c2_i32 : i32 to index
    %c0_45 = arith.constant 0 : index
    %c0_46 = arith.constant 0 : index
    %132 = vector.load %arg2[%131, %c0_45, %c0_46] : memref<8x8x640xf32, #tpu.memory_space<vmem>>, vector<1x8x640xf32>
    %133 = vector.shape_cast %132 : vector<1x8x640xf32> to vector<8x640xf32>
    %134 = vector.extract_strided_slice %133 {offsets = [0, 0], sizes = [8, 128], strides = [1, 1]} : vector<8x640xf32> to vector<8x128xf32>
    %135 = vector.extract_strided_slice %130 {offsets = [0, 0], sizes = [8, 128], strides = [1, 1]} : vector<8x384xf32> to vector<8x128xf32>
    %136 = arith.addf %134, %135 : vector<8x128xf32>
    %cst_47 = arith.constant 5.000000e-01 : f32
    %137 = vector.broadcast %cst_47 : f32 to vector<8x128xf32>
    %138 = arith.mulf %137, %136 : vector<8x128xf32>
    %139 = math.tanh %138 : vector<8x128xf32>
    %cst_48 = arith.constant 1.000000e+00 : f32
    %140 = vector.broadcast %cst_48 : f32 to vector<8x128xf32>
    %141 = arith.addf %139, %140 : vector<8x128xf32>
    %cst_49 = arith.constant 5.000000e-01 : f32
    %142 = vector.broadcast %cst_49 : f32 to vector<8x128xf32>
    %143 = arith.mulf %142, %141 : vector<8x128xf32>
    %144 = vector.extract_strided_slice %133 {offsets = [0, 128], sizes = [8, 128], strides = [1, 1]} : vector<8x640xf32> to vector<8x128xf32>
    %145 = vector.extract_strided_slice %130 {offsets = [0, 128], sizes = [8, 128], strides = [1, 1]} : vector<8x384xf32> to vector<8x128xf32>
    %146 = arith.addf %144, %145 : vector<8x128xf32>
    %147 = math.tanh %146 : vector<8x128xf32>
    %148 = vector.extract_strided_slice %133 {offsets = [0, 256], sizes = [8, 128], strides = [1, 1]} : vector<8x640xf32> to vector<8x128xf32>
    %149 = vector.extract_strided_slice %130 {offsets = [0, 256], sizes = [8, 128], strides = [1, 1]} : vector<8x384xf32> to vector<8x128xf32>
    %150 = arith.addf %148, %149 : vector<8x128xf32>
    %cst_50 = arith.constant 5.000000e-01 : f32
    %151 = vector.broadcast %cst_50 : f32 to vector<8x128xf32>
    %152 = arith.mulf %151, %150 : vector<8x128xf32>
    %153 = math.tanh %152 : vector<8x128xf32>
    %cst_51 = arith.constant 1.000000e+00 : f32
    %154 = vector.broadcast %cst_51 : f32 to vector<8x128xf32>
    %155 = arith.addf %153, %154 : vector<8x128xf32>
    %cst_52 = arith.constant 5.000000e-01 : f32
    %156 = vector.broadcast %cst_52 : f32 to vector<8x128xf32>
    %157 = arith.mulf %156, %155 : vector<8x128xf32>
    %158 = vector.extract_strided_slice %133 {offsets = [0, 384], sizes = [8, 128], strides = [1, 1]} : vector<8x640xf32> to vector<8x128xf32>
    %159 = vector.extract_strided_slice %133 {offsets = [0, 512], sizes = [8, 128], strides = [1, 1]} : vector<8x640xf32> to vector<8x128xf32>
    %160 = arith.mulf %143, %158 : vector<8x128xf32>
    %cst_53 = arith.constant 1.000000e+00 : f32
    %161 = vector.broadcast %cst_53 : f32 to vector<8x128xf32>
    %162 = arith.subf %161, %160 : vector<8x128xf32>
    %163 = arith.mulf %162, %123 : vector<8x128xf32>
    %164 = arith.mulf %160, %147 : vector<8x128xf32>
    %165 = arith.addf %163, %164 : vector<8x128xf32>
    %cst_54 = arith.constant 5.000000e-01 : f32
    %166 = vector.broadcast %cst_54 : f32 to vector<8x128xf32>
    %167 = arith.mulf %166, %165 : vector<8x128xf32>
    %168 = math.tanh %167 : vector<8x128xf32>
    %cst_55 = arith.constant 1.000000e+00 : f32
    %169 = vector.broadcast %cst_55 : f32 to vector<8x128xf32>
    %170 = arith.addf %168, %169 : vector<8x128xf32>
    %cst_56 = arith.constant 5.000000e-01 : f32
    %171 = vector.broadcast %cst_56 : f32 to vector<8x128xf32>
    %172 = arith.mulf %171, %170 : vector<8x128xf32>
    %cst_57 = arith.constant 1.000000e+00 : f32
    %173 = vector.broadcast %cst_57 : f32 to vector<8x128xf32>
    %174 = arith.subf %173, %143 : vector<8x128xf32>
    %175 = arith.mulf %174, %123 : vector<8x128xf32>
    %176 = arith.mulf %143, %159 : vector<8x128xf32>
    %177 = arith.mulf %176, %147 : vector<8x128xf32>
    %178 = arith.addf %175, %177 : vector<8x128xf32>
    %cst_58 = arith.constant 5.000000e-01 : f32
    %179 = vector.broadcast %cst_58 : f32 to vector<8x128xf32>
    %180 = arith.mulf %179, %178 : vector<8x128xf32>
    %181 = math.tanh %180 : vector<8x128xf32>
    %cst_59 = arith.constant 1.000000e+00 : f32
    %182 = vector.broadcast %cst_59 : f32 to vector<8x128xf32>
    %183 = arith.addf %181, %182 : vector<8x128xf32>
    %cst_60 = arith.constant 5.000000e-01 : f32
    %184 = vector.broadcast %cst_60 : f32 to vector<8x128xf32>
    %185 = arith.mulf %184, %183 : vector<8x128xf32>
    %186 = math.tanh %172 : vector<8x128xf32>
    %187 = arith.addf %157, %186 : vector<8x128xf32>
    %188 = arith.index_cast %c2_i32 : i32 to index
    %c0_61 = arith.constant 0 : index
    %c0_62 = arith.constant 0 : index
    %189 = vector.load %arg4[%188, %c0_61, %c0_62] : memref<8x8x128xf32, #tpu.memory_space<vmem>>, vector<1x8x128xf32>
    %190 = vector.shape_cast %189 : vector<1x8x128xf32> to vector<8x128xf32>
    %191 = vector.shape_cast %187 : vector<8x128xf32> to vector<1x8x128xf32>
    tpu.vector_store %arg4[%188, %c0_61, %c0_62], %191 {strides = array<i32>} : memref<8x8x128xf32, #tpu.memory_space<vmem>>, vector<1x8x128xf32>,
    %c3_i32 = arith.constant 3 : i32
    %cst_63 = arith.constant dense<0.000000e+00> : vector<8x384xf32>
    %192 = tpu.matmul %187, %3, %cst_63 {dimension_numbers = #tpu.dot_dimension_numbers<[1], [0], [0], [1], [0, 0, 1, 1], [], []>} : vector<8x128xf32>, vector<128x384xf32>, vector<8x384xf32> -> vector<8x384xf32>
    %193 = arith.index_cast %c3_i32 : i32 to index
    %c0_64 = arith.constant 0 : index
    %c0_65 = arith.constant 0 : index
    %194 = vector.load %arg2[%193, %c0_64, %c0_65] : memref<8x8x640xf32, #tpu.memory_space<vmem>>, vector<1x8x640xf32>
    %195 = vector.shape_cast %194 : vector<1x8x640xf32> to vector<8x640xf32>
    %196 = vector.extract_strided_slice %195 {offsets = [0, 0], sizes = [8, 128], strides = [1, 1]} : vector<8x640xf32> to vector<8x128xf32>
    %197 = vector.extract_strided_slice %192 {offsets = [0, 0], sizes = [8, 128], strides = [1, 1]} : vector<8x384xf32> to vector<8x128xf32>
    %198 = arith.addf %196, %197 : vector<8x128xf32>
    %cst_66 = arith.constant 5.000000e-01 : f32
    %199 = vector.broadcast %cst_66 : f32 to vector<8x128xf32>
    %200 = arith.mulf %199, %198 : vector<8x128xf32>
    %201 = math.tanh %200 : vector<8x128xf32>
    %cst_67 = arith.constant 1.000000e+00 : f32
    %202 = vector.broadcast %cst_67 : f32 to vector<8x128xf32>
    %203 = arith.addf %201, %202 : vector<8x128xf32>
    %cst_68 = arith.constant 5.000000e-01 : f32
    %204 = vector.broadcast %cst_68 : f32 to vector<8x128xf32>
    %205 = arith.mulf %204, %203 : vector<8x128xf32>
    %206 = vector.extract_strided_slice %195 {offsets = [0, 128], sizes = [8, 128], strides = [1, 1]} : vector<8x640xf32> to vector<8x128xf32>
    %207 = vector.extract_strided_slice %192 {offsets = [0, 128], sizes = [8, 128], strides = [1, 1]} : vector<8x384xf32> to vector<8x128xf32>
    %208 = arith.addf %206, %207 : vector<8x128xf32>
    %209 = math.tanh %208 : vector<8x128xf32>
    %210 = vector.extract_strided_slice %195 {offsets = [0, 256], sizes = [8, 128], strides = [1, 1]} : vector<8x640xf32> to vector<8x128xf32>
    %211 = vector.extract_strided_slice %192 {offsets = [0, 256], sizes = [8, 128], strides = [1, 1]} : vector<8x384xf32> to vector<8x128xf32>
    %212 = arith.addf %210, %211 : vector<8x128xf32>
    %cst_69 = arith.constant 5.000000e-01 : f32
    %213 = vector.broadcast %cst_69 : f32 to vector<8x128xf32>
    %214 = arith.mulf %213, %212 : vector<8x128xf32>
    %215 = math.tanh %214 : vector<8x128xf32>
    %cst_70 = arith.constant 1.000000e+00 : f32
    %216 = vector.broadcast %cst_70 : f32 to vector<8x128xf32>
    %217 = arith.addf %215, %216 : vector<8x128xf32>
    %cst_71 = arith.constant 5.000000e-01 : f32
    %218 = vector.broadcast %cst_71 : f32 to vector<8x128xf32>
    %219 = arith.mulf %218, %217 : vector<8x128xf32>
    %220 = vector.extract_strided_slice %195 {offsets = [0, 384], sizes = [8, 128], strides = [1, 1]} : vector<8x640xf32> to vector<8x128xf32>
    %221 = vector.extract_strided_slice %195 {offsets = [0, 512], sizes = [8, 128], strides = [1, 1]} : vector<8x640xf32> to vector<8x128xf32>
    %222 = arith.mulf %205, %220 : vector<8x128xf32>
    %cst_72 = arith.constant 1.000000e+00 : f32
    %223 = vector.broadcast %cst_72 : f32 to vector<8x128xf32>
    %224 = arith.subf %223, %222 : vector<8x128xf32>
    %225 = arith.mulf %224, %185 : vector<8x128xf32>
    %226 = arith.mulf %222, %209 : vector<8x128xf32>
    %227 = arith.addf %225, %226 : vector<8x128xf32>
    %cst_73 = arith.constant 5.000000e-01 : f32
    %228 = vector.broadcast %cst_73 : f32 to vector<8x128xf32>
    %229 = arith.mulf %228, %227 : vector<8x128xf32>
    %230 = math.tanh %229 : vector<8x128xf32>
    %cst_74 = arith.constant 1.000000e+00 : f32
    %231 = vector.broadcast %cst_74 : f32 to vector<8x128xf32>
    %232 = arith.addf %230, %231 : vector<8x128xf32>
    %cst_75 = arith.constant 5.000000e-01 : f32
    %233 = vector.broadcast %cst_75 : f32 to vector<8x128xf32>
    %234 = arith.mulf %233, %232 : vector<8x128xf32>
    %cst_76 = arith.constant 1.000000e+00 : f32
    %235 = vector.broadcast %cst_76 : f32 to vector<8x128xf32>
    %236 = arith.subf %235, %205 : vector<8x128xf32>
    %237 = arith.mulf %236, %185 : vector<8x128xf32>
    %238 = arith.mulf %205, %221 : vector<8x128xf32>
    %239 = arith.mulf %238, %209 : vector<8x128xf32>
    %240 = arith.addf %237, %239 : vector<8x128xf32>
    %cst_77 = arith.constant 5.000000e-01 : f32
    %241 = vector.broadcast %cst_77 : f32 to vector<8x128xf32>
    %242 = arith.mulf %241, %240 : vector<8x128xf32>
    %243 = math.tanh %242 : vector<8x128xf32>
    %cst_78 = arith.constant 1.000000e+00 : f32
    %244 = vector.broadcast %cst_78 : f32 to vector<8x128xf32>
    %245 = arith.addf %243, %244 : vector<8x128xf32>
    %cst_79 = arith.constant 5.000000e-01 : f32
    %246 = vector.broadcast %cst_79 : f32 to vector<8x128xf32>
    %247 = arith.mulf %246, %245 : vector<8x128xf32>
    %248 = math.tanh %234 : vector<8x128xf32>
    %249 = arith.addf %219, %248 : vector<8x128xf32>
    %250 = arith.index_cast %c3_i32 : i32 to index
    %c0_80 = arith.constant 0 : index
    %c0_81 = arith.constant 0 : index
    %251 = vector.load %arg4[%250, %c0_80, %c0_81] : memref<8x8x128xf32, #tpu.memory_space<vmem>>, vector<1x8x128xf32>
    %252 = vector.shape_cast %251 : vector<1x8x128xf32> to vector<8x128xf32>
    %253 = vector.shape_cast %249 : vector<8x128xf32> to vector<1x8x128xf32>
    tpu.vector_store %arg4[%250, %c0_80, %c0_81], %253 {strides = array<i32>} : memref<8x8x128xf32, #tpu.memory_space<vmem>>, vector<1x8x128xf32>,
    %c4_i32 = arith.constant 4 : i32
    %cst_82 = arith.constant dense<0.000000e+00> : vector<8x384xf32>
    %254 = tpu.matmul %249, %3, %cst_82 {dimension_numbers = #tpu.dot_dimension_numbers<[1], [0], [0], [1], [0, 0, 1, 1], [], []>} : vector<8x128xf32>, vector<128x384xf32>, vector<8x384xf32> -> vector<8x384xf32>
    %255 = arith.index_cast %c4_i32 : i32 to index
    %c0_83 = arith.constant 0 : index
    %c0_84 = arith.constant 0 : index
    %256 = vector.load %arg2[%255, %c0_83, %c0_84] : memref<8x8x640xf32, #tpu.memory_space<vmem>>, vector<1x8x640xf32>
    %257 = vector.shape_cast %256 : vector<1x8x640xf32> to vector<8x640xf32>
    %258 = vector.extract_strided_slice %257 {offsets = [0, 0], sizes = [8, 128], strides = [1, 1]} : vector<8x640xf32> to vector<8x128xf32>
    %259 = vector.extract_strided_slice %254 {offsets = [0, 0], sizes = [8, 128], strides = [1, 1]} : vector<8x384xf32> to vector<8x128xf32>
    %260 = arith.addf %258, %259 : vector<8x128xf32>
    %cst_85 = arith.constant 5.000000e-01 : f32
    %261 = vector.broadcast %cst_85 : f32 to vector<8x128xf32>
    %262 = arith.mulf %261, %260 : vector<8x128xf32>
    %263 = math.tanh %262 : vector<8x128xf32>
    %cst_86 = arith.constant 1.000000e+00 : f32
    %264 = vector.broadcast %cst_86 : f32 to vector<8x128xf32>
    %265 = arith.addf %263, %264 : vector<8x128xf32>
    %cst_87 = arith.constant 5.000000e-01 : f32
    %266 = vector.broadcast %cst_87 : f32 to vector<8x128xf32>
    %267 = arith.mulf %266, %265 : vector<8x128xf32>
    %268 = vector.extract_strided_slice %257 {offsets = [0, 128], sizes = [8, 128], strides = [1, 1]} : vector<8x640xf32> to vector<8x128xf32>
    %269 = vector.extract_strided_slice %254 {offsets = [0, 128], sizes = [8, 128], strides = [1, 1]} : vector<8x384xf32> to vector<8x128xf32>
    %270 = arith.addf %268, %269 : vector<8x128xf32>
    %271 = math.tanh %270 : vector<8x128xf32>
    %272 = vector.extract_strided_slice %257 {offsets = [0, 256], sizes = [8, 128], strides = [1, 1]} : vector<8x640xf32> to vector<8x128xf32>
    %273 = vector.extract_strided_slice %254 {offsets = [0, 256], sizes = [8, 128], strides = [1, 1]} : vector<8x384xf32> to vector<8x128xf32>
    %274 = arith.addf %272, %273 : vector<8x128xf32>
    %cst_88 = arith.constant 5.000000e-01 : f32
    %275 = vector.broadcast %cst_88 : f32 to vector<8x128xf32>
    %276 = arith.mulf %275, %274 : vector<8x128xf32>
    %277 = math.tanh %276 : vector<8x128xf32>
    %cst_89 = arith.constant 1.000000e+00 : f32
    %278 = vector.broadcast %cst_89 : f32 to vector<8x128xf32>
    %279 = arith.addf %277, %278 : vector<8x128xf32>
    %cst_90 = arith.constant 5.000000e-01 : f32
    %280 = vector.broadcast %cst_90 : f32 to vector<8x128xf32>
    %281 = arith.mulf %280, %279 : vector<8x128xf32>
    %282 = vector.extract_strided_slice %257 {offsets = [0, 384], sizes = [8, 128], strides = [1, 1]} : vector<8x640xf32> to vector<8x128xf32>
    %283 = vector.extract_strided_slice %257 {offsets = [0, 512], sizes = [8, 128], strides = [1, 1]} : vector<8x640xf32> to vector<8x128xf32>
    %284 = arith.mulf %267, %282 : vector<8x128xf32>
    %cst_91 = arith.constant 1.000000e+00 : f32
    %285 = vector.broadcast %cst_91 : f32 to vector<8x128xf32>
    %286 = arith.subf %285, %284 : vector<8x128xf32>
    %287 = arith.mulf %286, %247 : vector<8x128xf32>
    %288 = arith.mulf %284, %271 : vector<8x128xf32>
    %289 = arith.addf %287, %288 : vector<8x128xf32>
    %cst_92 = arith.constant 5.000000e-01 : f32
    %290 = vector.broadcast %cst_92 : f32 to vector<8x128xf32>
    %291 = arith.mulf %290, %289 : vector<8x128xf32>
    %292 = math.tanh %291 : vector<8x128xf32>
    %cst_93 = arith.constant 1.000000e+00 : f32
    %293 = vector.broadcast %cst_93 : f32 to vector<8x128xf32>
    %294 = arith.addf %292, %293 : vector<8x128xf32>
    %cst_94 = arith.constant 5.000000e-01 : f32
    %295 = vector.broadcast %cst_94 : f32 to vector<8x128xf32>
    %296 = arith.mulf %295, %294 : vector<8x128xf32>
    %cst_95 = arith.constant 1.000000e+00 : f32
    %297 = vector.broadcast %cst_95 : f32 to vector<8x128xf32>
    %298 = arith.subf %297, %267 : vector<8x128xf32>
    %299 = arith.mulf %298, %247 : vector<8x128xf32>
    %300 = arith.mulf %267, %283 : vector<8x128xf32>
    %301 = arith.mulf %300, %271 : vector<8x128xf32>
    %302 = arith.addf %299, %301 : vector<8x128xf32>
    %cst_96 = arith.constant 5.000000e-01 : f32
    %303 = vector.broadcast %cst_96 : f32 to vector<8x128xf32>
    %304 = arith.mulf %303, %302 : vector<8x128xf32>
    %305 = math.tanh %304 : vector<8x128xf32>
    %cst_97 = arith.constant 1.000000e+00 : f32
    %306 = vector.broadcast %cst_97 : f32 to vector<8x128xf32>
    %307 = arith.addf %305, %306 : vector<8x128xf32>
    %cst_98 = arith.constant 5.000000e-01 : f32
    %308 = vector.broadcast %cst_98 : f32 to vector<8x128xf32>
    %309 = arith.mulf %308, %307 : vector<8x128xf32>
    %310 = math.tanh %296 : vector<8x128xf32>
    %311 = arith.addf %281, %310 : vector<8x128xf32>
    %312 = arith.index_cast %c4_i32 : i32 to index
    %c0_99 = arith.constant 0 : index
    %c0_100 = arith.constant 0 : index
    %313 = vector.load %arg4[%312, %c0_99, %c0_100] : memref<8x8x128xf32, #tpu.memory_space<vmem>>, vector<1x8x128xf32>
    %314 = vector.shape_cast %313 : vector<1x8x128xf32> to vector<8x128xf32>
    %315 = vector.shape_cast %311 : vector<8x128xf32> to vector<1x8x128xf32>
    tpu.vector_store %arg4[%312, %c0_99, %c0_100], %315 {strides = array<i32>} : memref<8x8x128xf32, #tpu.memory_space<vmem>>, vector<1x8x128xf32>,
    %c5_i32 = arith.constant 5 : i32
    %cst_101 = arith.constant dense<0.000000e+00> : vector<8x384xf32>
    %316 = tpu.matmul %311, %3, %cst_101 {dimension_numbers = #tpu.dot_dimension_numbers<[1], [0], [0], [1], [0, 0, 1, 1], [], []>} : vector<8x128xf32>, vector<128x384xf32>, vector<8x384xf32> -> vector<8x384xf32>
    %317 = arith.index_cast %c5_i32 : i32 to index
    %c0_102 = arith.constant 0 : index
    %c0_103 = arith.constant 0 : index
    %318 = vector.load %arg2[%317, %c0_102, %c0_103] : memref<8x8x640xf32, #tpu.memory_space<vmem>>, vector<1x8x640xf32>
    %319 = vector.shape_cast %318 : vector<1x8x640xf32> to vector<8x640xf32>
    %320 = vector.extract_strided_slice %319 {offsets = [0, 0], sizes = [8, 128], strides = [1, 1]} : vector<8x640xf32> to vector<8x128xf32>
    %321 = vector.extract_strided_slice %316 {offsets = [0, 0], sizes = [8, 128], strides = [1, 1]} : vector<8x384xf32> to vector<8x128xf32>
    %322 = arith.addf %320, %321 : vector<8x128xf32>
    %cst_104 = arith.constant 5.000000e-01 : f32
    %323 = vector.broadcast %cst_104 : f32 to vector<8x128xf32>
    %324 = arith.mulf %323, %322 : vector<8x128xf32>
    %325 = math.tanh %324 : vector<8x128xf32>
    %cst_105 = arith.constant 1.000000e+00 : f32
    %326 = vector.broadcast %cst_105 : f32 to vector<8x128xf32>
    %327 = arith.addf %325, %326 : vector<8x128xf32>
    %cst_106 = arith.constant 5.000000e-01 : f32
    %328 = vector.broadcast %cst_106 : f32 to vector<8x128xf32>
    %329 = arith.mulf %328, %327 : vector<8x128xf32>
    %330 = vector.extract_strided_slice %319 {offsets = [0, 128], sizes = [8, 128], strides = [1, 1]} : vector<8x640xf32> to vector<8x128xf32>
    %331 = vector.extract_strided_slice %316 {offsets = [0, 128], sizes = [8, 128], strides = [1, 1]} : vector<8x384xf32> to vector<8x128xf32>
    %332 = arith.addf %330, %331 : vector<8x128xf32>
    %333 = math.tanh %332 : vector<8x128xf32>
    %334 = vector.extract_strided_slice %319 {offsets = [0, 256], sizes = [8, 128], strides = [1, 1]} : vector<8x640xf32> to vector<8x128xf32>
    %335 = vector.extract_strided_slice %316 {offsets = [0, 256], sizes = [8, 128], strides = [1, 1]} : vector<8x384xf32> to vector<8x128xf32>
    %336 = arith.addf %334, %335 : vector<8x128xf32>
    %cst_107 = arith.constant 5.000000e-01 : f32
    %337 = vector.broadcast %cst_107 : f32 to vector<8x128xf32>
    %338 = arith.mulf %337, %336 : vector<8x128xf32>
    %339 = math.tanh %338 : vector<8x128xf32>
    %cst_108 = arith.constant 1.000000e+00 : f32
    %340 = vector.broadcast %cst_108 : f32 to vector<8x128xf32>
    %341 = arith.addf %339, %340 : vector<8x128xf32>
    %cst_109 = arith.constant 5.000000e-01 : f32
    %342 = vector.broadcast %cst_109 : f32 to vector<8x128xf32>
    %343 = arith.mulf %342, %341 : vector<8x128xf32>
    %344 = vector.extract_strided_slice %319 {offsets = [0, 384], sizes = [8, 128], strides = [1, 1]} : vector<8x640xf32> to vector<8x128xf32>
    %345 = vector.extract_strided_slice %319 {offsets = [0, 512], sizes = [8, 128], strides = [1, 1]} : vector<8x640xf32> to vector<8x128xf32>
    %346 = arith.mulf %329, %344 : vector<8x128xf32>
    %cst_110 = arith.constant 1.000000e+00 : f32
    %347 = vector.broadcast %cst_110 : f32 to vector<8x128xf32>
    %348 = arith.subf %347, %346 : vector<8x128xf32>
    %349 = arith.mulf %348, %309 : vector<8x128xf32>
    %350 = arith.mulf %346, %333 : vector<8x128xf32>
    %351 = arith.addf %349, %350 : vector<8x128xf32>
    %cst_111 = arith.constant 5.000000e-01 : f32
    %352 = vector.broadcast %cst_111 : f32 to vector<8x128xf32>
    %353 = arith.mulf %352, %351 : vector<8x128xf32>
    %354 = math.tanh %353 : vector<8x128xf32>
    %cst_112 = arith.constant 1.000000e+00 : f32
    %355 = vector.broadcast %cst_112 : f32 to vector<8x128xf32>
    %356 = arith.addf %354, %355 : vector<8x128xf32>
    %cst_113 = arith.constant 5.000000e-01 : f32
    %357 = vector.broadcast %cst_113 : f32 to vector<8x128xf32>
    %358 = arith.mulf %357, %356 : vector<8x128xf32>
    %cst_114 = arith.constant 1.000000e+00 : f32
    %359 = vector.broadcast %cst_114 : f32 to vector<8x128xf32>
    %360 = arith.subf %359, %329 : vector<8x128xf32>
    %361 = arith.mulf %360, %309 : vector<8x128xf32>
    %362 = arith.mulf %329, %345 : vector<8x128xf32>
    %363 = arith.mulf %362, %333 : vector<8x128xf32>
    %364 = arith.addf %361, %363 : vector<8x128xf32>
    %cst_115 = arith.constant 5.000000e-01 : f32
    %365 = vector.broadcast %cst_115 : f32 to vector<8x128xf32>
    %366 = arith.mulf %365, %364 : vector<8x128xf32>
    %367 = math.tanh %366 : vector<8x128xf32>
    %cst_116 = arith.constant 1.000000e+00 : f32
    %368 = vector.broadcast %cst_116 : f32 to vector<8x128xf32>
    %369 = arith.addf %367, %368 : vector<8x128xf32>
    %cst_117 = arith.constant 5.000000e-01 : f32
    %370 = vector.broadcast %cst_117 : f32 to vector<8x128xf32>
    %371 = arith.mulf %370, %369 : vector<8x128xf32>
    %372 = math.tanh %358 : vector<8x128xf32>
    %373 = arith.addf %343, %372 : vector<8x128xf32>
    %374 = arith.index_cast %c5_i32 : i32 to index
    %c0_118 = arith.constant 0 : index
    %c0_119 = arith.constant 0 : index
    %375 = vector.load %arg4[%374, %c0_118, %c0_119] : memref<8x8x128xf32, #tpu.memory_space<vmem>>, vector<1x8x128xf32>
    %376 = vector.shape_cast %375 : vector<1x8x128xf32> to vector<8x128xf32>
    %377 = vector.shape_cast %373 : vector<8x128xf32> to vector<1x8x128xf32>
    tpu.vector_store %arg4[%374, %c0_118, %c0_119], %377 {strides = array<i32>} : memref<8x8x128xf32, #tpu.memory_space<vmem>>, vector<1x8x128xf32>,
    %c6_i32 = arith.constant 6 : i32
    %cst_120 = arith.constant dense<0.000000e+00> : vector<8x384xf32>
    %378 = tpu.matmul %373, %3, %cst_120 {dimension_numbers = #tpu.dot_dimension_numbers<[1], [0], [0], [1], [0, 0, 1, 1], [], []>} : vector<8x128xf32>, vector<128x384xf32>, vector<8x384xf32> -> vector<8x384xf32>
    %379 = arith.index_cast %c6_i32 : i32 to index
    %c0_121 = arith.constant 0 : index
    %c0_122 = arith.constant 0 : index
    %380 = vector.load %arg2[%379, %c0_121, %c0_122] : memref<8x8x640xf32, #tpu.memory_space<vmem>>, vector<1x8x640xf32>
    %381 = vector.shape_cast %380 : vector<1x8x640xf32> to vector<8x640xf32>
    %382 = vector.extract_strided_slice %381 {offsets = [0, 0], sizes = [8, 128], strides = [1, 1]} : vector<8x640xf32> to vector<8x128xf32>
    %383 = vector.extract_strided_slice %378 {offsets = [0, 0], sizes = [8, 128], strides = [1, 1]} : vector<8x384xf32> to vector<8x128xf32>
    %384 = arith.addf %382, %383 : vector<8x128xf32>
    %cst_123 = arith.constant 5.000000e-01 : f32
    %385 = vector.broadcast %cst_123 : f32 to vector<8x128xf32>
    %386 = arith.mulf %385, %384 : vector<8x128xf32>
    %387 = math.tanh %386 : vector<8x128xf32>
    %cst_124 = arith.constant 1.000000e+00 : f32
    %388 = vector.broadcast %cst_124 : f32 to vector<8x128xf32>
    %389 = arith.addf %387, %388 : vector<8x128xf32>
    %cst_125 = arith.constant 5.000000e-01 : f32
    %390 = vector.broadcast %cst_125 : f32 to vector<8x128xf32>
    %391 = arith.mulf %390, %389 : vector<8x128xf32>
    %392 = vector.extract_strided_slice %381 {offsets = [0, 128], sizes = [8, 128], strides = [1, 1]} : vector<8x640xf32> to vector<8x128xf32>
    %393 = vector.extract_strided_slice %378 {offsets = [0, 128], sizes = [8, 128], strides = [1, 1]} : vector<8x384xf32> to vector<8x128xf32>
    %394 = arith.addf %392, %393 : vector<8x128xf32>
    %395 = math.tanh %394 : vector<8x128xf32>
    %396 = vector.extract_strided_slice %381 {offsets = [0, 256], sizes = [8, 128], strides = [1, 1]} : vector<8x640xf32> to vector<8x128xf32>
    %397 = vector.extract_strided_slice %378 {offsets = [0, 256], sizes = [8, 128], strides = [1, 1]} : vector<8x384xf32> to vector<8x128xf32>
    %398 = arith.addf %396, %397 : vector<8x128xf32>
    %cst_126 = arith.constant 5.000000e-01 : f32
    %399 = vector.broadcast %cst_126 : f32 to vector<8x128xf32>
    %400 = arith.mulf %399, %398 : vector<8x128xf32>
    %401 = math.tanh %400 : vector<8x128xf32>
    %cst_127 = arith.constant 1.000000e+00 : f32
    %402 = vector.broadcast %cst_127 : f32 to vector<8x128xf32>
    %403 = arith.addf %401, %402 : vector<8x128xf32>
    %cst_128 = arith.constant 5.000000e-01 : f32
    %404 = vector.broadcast %cst_128 : f32 to vector<8x128xf32>
    %405 = arith.mulf %404, %403 : vector<8x128xf32>
    %406 = vector.extract_strided_slice %381 {offsets = [0, 384], sizes = [8, 128], strides = [1, 1]} : vector<8x640xf32> to vector<8x128xf32>
    %407 = vector.extract_strided_slice %381 {offsets = [0, 512], sizes = [8, 128], strides = [1, 1]} : vector<8x640xf32> to vector<8x128xf32>
    %408 = arith.mulf %391, %406 : vector<8x128xf32>
    %cst_129 = arith.constant 1.000000e+00 : f32
    %409 = vector.broadcast %cst_129 : f32 to vector<8x128xf32>
    %410 = arith.subf %409, %408 : vector<8x128xf32>
    %411 = arith.mulf %410, %371 : vector<8x128xf32>
    %412 = arith.mulf %408, %395 : vector<8x128xf32>
    %413 = arith.addf %411, %412 : vector<8x128xf32>
    %cst_130 = arith.constant 5.000000e-01 : f32
    %414 = vector.broadcast %cst_130 : f32 to vector<8x128xf32>
    %415 = arith.mulf %414, %413 : vector<8x128xf32>
    %416 = math.tanh %415 : vector<8x128xf32>
    %cst_131 = arith.constant 1.000000e+00 : f32
    %417 = vector.broadcast %cst_131 : f32 to vector<8x128xf32>
    %418 = arith.addf %416, %417 : vector<8x128xf32>
    %cst_132 = arith.constant 5.000000e-01 : f32
    %419 = vector.broadcast %cst_132 : f32 to vector<8x128xf32>
    %420 = arith.mulf %419, %418 : vector<8x128xf32>
    %cst_133 = arith.constant 1.000000e+00 : f32
    %421 = vector.broadcast %cst_133 : f32 to vector<8x128xf32>
    %422 = arith.subf %421, %391 : vector<8x128xf32>
    %423 = arith.mulf %422, %371 : vector<8x128xf32>
    %424 = arith.mulf %391, %407 : vector<8x128xf32>
    %425 = arith.mulf %424, %395 : vector<8x128xf32>
    %426 = arith.addf %423, %425 : vector<8x128xf32>
    %cst_134 = arith.constant 5.000000e-01 : f32
    %427 = vector.broadcast %cst_134 : f32 to vector<8x128xf32>
    %428 = arith.mulf %427, %426 : vector<8x128xf32>
    %429 = math.tanh %428 : vector<8x128xf32>
    %cst_135 = arith.constant 1.000000e+00 : f32
    %430 = vector.broadcast %cst_135 : f32 to vector<8x128xf32>
    %431 = arith.addf %429, %430 : vector<8x128xf32>
    %cst_136 = arith.constant 5.000000e-01 : f32
    %432 = vector.broadcast %cst_136 : f32 to vector<8x128xf32>
    %433 = arith.mulf %432, %431 : vector<8x128xf32>
    %434 = math.tanh %420 : vector<8x128xf32>
    %435 = arith.addf %405, %434 : vector<8x128xf32>
    %436 = arith.index_cast %c6_i32 : i32 to index
    %c0_137 = arith.constant 0 : index
    %c0_138 = arith.constant 0 : index
    %437 = vector.load %arg4[%436, %c0_137, %c0_138] : memref<8x8x128xf32, #tpu.memory_space<vmem>>, vector<1x8x128xf32>
    %438 = vector.shape_cast %437 : vector<1x8x128xf32> to vector<8x128xf32>
    %439 = vector.shape_cast %435 : vector<8x128xf32> to vector<1x8x128xf32>
    tpu.vector_store %arg4[%436, %c0_137, %c0_138], %439 {strides = array<i32>} : memref<8x8x128xf32, #tpu.memory_space<vmem>>, vector<1x8x128xf32>,
    %c7_i32 = arith.constant 7 : i32
    %cst_139 = arith.constant dense<0.000000e+00> : vector<8x384xf32>
    %440 = tpu.matmul %435, %3, %cst_139 {dimension_numbers = #tpu.dot_dimension_numbers<[1], [0], [0], [1], [0, 0, 1, 1], [], []>} : vector<8x128xf32>, vector<128x384xf32>, vector<8x384xf32> -> vector<8x384xf32>
    %441 = arith.index_cast %c7_i32 : i32 to index
    %c0_140 = arith.constant 0 : index
    %c0_141 = arith.constant 0 : index
    %442 = vector.load %arg2[%441, %c0_140, %c0_141] : memref<8x8x640xf32, #tpu.memory_space<vmem>>, vector<1x8x640xf32>
    %443 = vector.shape_cast %442 : vector<1x8x640xf32> to vector<8x640xf32>
    %444 = vector.extract_strided_slice %443 {offsets = [0, 0], sizes = [8, 128], strides = [1, 1]} : vector<8x640xf32> to vector<8x128xf32>
    %445 = vector.extract_strided_slice %440 {offsets = [0, 0], sizes = [8, 128], strides = [1, 1]} : vector<8x384xf32> to vector<8x128xf32>
    %446 = arith.addf %444, %445 : vector<8x128xf32>
    %cst_142 = arith.constant 5.000000e-01 : f32
    %447 = vector.broadcast %cst_142 : f32 to vector<8x128xf32>
    %448 = arith.mulf %447, %446 : vector<8x128xf32>
    %449 = math.tanh %448 : vector<8x128xf32>
    %cst_143 = arith.constant 1.000000e+00 : f32
    %450 = vector.broadcast %cst_143 : f32 to vector<8x128xf32>
    %451 = arith.addf %449, %450 : vector<8x128xf32>
    %cst_144 = arith.constant 5.000000e-01 : f32
    %452 = vector.broadcast %cst_144 : f32 to vector<8x128xf32>
    %453 = arith.mulf %452, %451 : vector<8x128xf32>
    %454 = vector.extract_strided_slice %443 {offsets = [0, 128], sizes = [8, 128], strides = [1, 1]} : vector<8x640xf32> to vector<8x128xf32>
    %455 = vector.extract_strided_slice %440 {offsets = [0, 128], sizes = [8, 128], strides = [1, 1]} : vector<8x384xf32> to vector<8x128xf32>
    %456 = arith.addf %454, %455 : vector<8x128xf32>
    %457 = math.tanh %456 : vector<8x128xf32>
    %458 = vector.extract_strided_slice %443 {offsets = [0, 256], sizes = [8, 128], strides = [1, 1]} : vector<8x640xf32> to vector<8x128xf32>
    %459 = vector.extract_strided_slice %440 {offsets = [0, 256], sizes = [8, 128], strides = [1, 1]} : vector<8x384xf32> to vector<8x128xf32>
    %460 = arith.addf %458, %459 : vector<8x128xf32>
    %cst_145 = arith.constant 5.000000e-01 : f32
    %461 = vector.broadcast %cst_145 : f32 to vector<8x128xf32>
    %462 = arith.mulf %461, %460 : vector<8x128xf32>
    %463 = math.tanh %462 : vector<8x128xf32>
    %cst_146 = arith.constant 1.000000e+00 : f32
    %464 = vector.broadcast %cst_146 : f32 to vector<8x128xf32>
    %465 = arith.addf %463, %464 : vector<8x128xf32>
    %cst_147 = arith.constant 5.000000e-01 : f32
    %466 = vector.broadcast %cst_147 : f32 to vector<8x128xf32>
    %467 = arith.mulf %466, %465 : vector<8x128xf32>
    %468 = vector.extract_strided_slice %443 {offsets = [0, 384], sizes = [8, 128], strides = [1, 1]} : vector<8x640xf32> to vector<8x128xf32>
    %469 = vector.extract_strided_slice %443 {offsets = [0, 512], sizes = [8, 128], strides = [1, 1]} : vector<8x640xf32> to vector<8x128xf32>
    %470 = arith.mulf %453, %468 : vector<8x128xf32>
    %cst_148 = arith.constant 1.000000e+00 : f32
    %471 = vector.broadcast %cst_148 : f32 to vector<8x128xf32>
    %472 = arith.subf %471, %470 : vector<8x128xf32>
    %473 = arith.mulf %472, %433 : vector<8x128xf32>
    %474 = arith.mulf %470, %457 : vector<8x128xf32>
    %475 = arith.addf %473, %474 : vector<8x128xf32>
    %cst_149 = arith.constant 5.000000e-01 : f32
    %476 = vector.broadcast %cst_149 : f32 to vector<8x128xf32>
    %477 = arith.mulf %476, %475 : vector<8x128xf32>
    %478 = math.tanh %477 : vector<8x128xf32>
    %cst_150 = arith.constant 1.000000e+00 : f32
    %479 = vector.broadcast %cst_150 : f32 to vector<8x128xf32>
    %480 = arith.addf %478, %479 : vector<8x128xf32>
    %cst_151 = arith.constant 5.000000e-01 : f32
    %481 = vector.broadcast %cst_151 : f32 to vector<8x128xf32>
    %482 = arith.mulf %481, %480 : vector<8x128xf32>
    %cst_152 = arith.constant 1.000000e+00 : f32
    %483 = vector.broadcast %cst_152 : f32 to vector<8x128xf32>
    %484 = arith.subf %483, %453 : vector<8x128xf32>
    %485 = arith.mulf %484, %433 : vector<8x128xf32>
    %486 = arith.mulf %453, %469 : vector<8x128xf32>
    %487 = arith.mulf %486, %457 : vector<8x128xf32>
    %488 = arith.addf %485, %487 : vector<8x128xf32>
    %cst_153 = arith.constant 5.000000e-01 : f32
    %489 = vector.broadcast %cst_153 : f32 to vector<8x128xf32>
    %490 = arith.mulf %489, %488 : vector<8x128xf32>
    %491 = math.tanh %490 : vector<8x128xf32>
    %cst_154 = arith.constant 1.000000e+00 : f32
    %492 = vector.broadcast %cst_154 : f32 to vector<8x128xf32>
    %493 = arith.addf %491, %492 : vector<8x128xf32>
    %cst_155 = arith.constant 5.000000e-01 : f32
    %494 = vector.broadcast %cst_155 : f32 to vector<8x128xf32>
    %495 = arith.mulf %494, %493 : vector<8x128xf32>
    %496 = math.tanh %482 : vector<8x128xf32>
    %497 = arith.addf %467, %496 : vector<8x128xf32>
    %498 = arith.index_cast %c7_i32 : i32 to index
    %c0_156 = arith.constant 0 : index
    %c0_157 = arith.constant 0 : index
    %499 = vector.load %arg4[%498, %c0_156, %c0_157] : memref<8x8x128xf32, #tpu.memory_space<vmem>>, vector<1x8x128xf32>
    %500 = vector.shape_cast %499 : vector<1x8x128xf32> to vector<8x128xf32>
    %501 = vector.shape_cast %497 : vector<8x128xf32> to vector<1x8x128xf32>
    tpu.vector_store %arg4[%498, %c0_156, %c0_157], %501 {strides = array<i32>} : memref<8x8x128xf32, #tpu.memory_space<vmem>>, vector<1x8x128xf32>,
    %c8_i32 = arith.constant 8 : i32
    %c0_158 = arith.constant 0 : index
    %c0_159 = arith.constant 0 : index
    %502 = vector.load %arg5[%c0_158, %c0_159] : memref<8x128xf32, #tpu.memory_space<vmem>>, vector<8x128xf32>
    tpu.vector_store %arg5[%c0_158, %c0_159], %497 {strides = array<i32>} : memref<8x128xf32, #tpu.memory_space<vmem>>, vector<8x128xf32>,
    %c0_160 = arith.constant 0 : index
    %c0_161 = arith.constant 0 : index
    %503 = vector.load %arg6[%c0_160, %c0_161] : memref<8x128xf32, #tpu.memory_space<vmem>>, vector<8x128xf32>
    tpu.vector_store %arg6[%c0_160, %c0_161], %495 {strides = array<i32>} : memref<8x128xf32, #tpu.memory_space<vmem>>, vector<8x128xf32>,
    return
  }
  func.func @transform_0(%arg0: i32, %arg1: i32) -> (i32, i32, i32) {
    %c0_i32 = arith.constant 0 : i32
    %c0_i32_0 = arith.constant 0 : i32
    return %arg1, %arg0, %c0_i32 : i32, i32, i32
  }
  func.func @transform_1(%arg0: i32, %arg1: i32) -> (i32, i32) {
    %c0_i32 = arith.constant 0 : i32
    %c0_i32_0 = arith.constant 0 : i32
    %c0_i32_1 = arith.constant 0 : i32
    return %c0_i32, %c0_i32_0 : i32, i32
  }
  func.func @transform_2(%arg0: i32, %arg1: i32) -> (i32, i32, i32) {
    %c0_i32 = arith.constant 0 : i32
    %c0_i32_0 = arith.constant 0 : i32
    return %arg1, %arg0, %c0_i32 : i32, i32, i32
  }
  func.func @transform_3(%arg0: i32, %arg1: i32) -> (i32, i32) {
    %c0_i32 = arith.constant 0 : i32
    %c0_i32_0 = arith.constant 0 : i32
    return %arg0, %c0_i32 : i32, i32
  }
  func.func @transform_4(%arg0: i32, %arg1: i32) -> (i32, i32) {
    %c0_i32 = arith.constant 0 : i32
    %c0_i32_0 = arith.constant 0 : i32
    return %arg0, %c0_i32 : i32, i32
  }
}

module attributes {stable_mosaic.version = 11 : i64} {
  func.func @_timelstm_chunk_kernel(%arg0: i32, %arg1: i32, %arg2: memref<8x8x640xf32, #tpu.memory_space<vmem>>, %arg3: memref<128x384xf32, #tpu.memory_space<vmem>>, %arg4: memref<8x8x128xf32, #tpu.memory_space<vmem>>, %arg5: memref<8x128xf32, #tpu.memory_space<vmem>>, %arg6: memref<8x128xf32, #tpu.memory_space<vmem>>) attributes {dimension_semantics = [#tpu.dimension_semantics<parallel>, #tpu.dimension_semantics<arbitrary>], iteration_bounds = array<i64: 1, 1>, scalar_prefetch = 0 : i64, scratch_operands = 0 : i64, tpu.core_type = #tpu.core_type<tc>, window_params = [{transform_indices = @transform_0, window_bounds = array<i64: 8, 8, 640>}, {pipeline_mode = #tpu.pipeline_mode<synchronous>, transform_indices = @transform_1, window_bounds = array<i64: 128, 384>}, {transform_indices = @transform_2, window_bounds = array<i64: 8, 8, 128>}, {transform_indices = @transform_3, window_bounds = array<i64: 8, 128>}, {transform_indices = @transform_4, window_bounds = array<i64: 8, 128>}]} {
    %c0_i32 = arith.constant 0 : i32
    %0 = arith.cmpi eq, %arg1, %c0_i32 : i32
    %1 = arith.extui %0 : i1 to i32
    %c0_i32_0 = arith.constant 0 : i32
    %2 = arith.cmpi ne, %1, %c0_i32_0 : i32
    scf.if %2 {
      %cst_162 = arith.constant 0.000000e+00 : f32
      %504 = vector.broadcast %cst_162 : f32 to vector<8x128xf32>
      %c0_163 = arith.constant 0 : index
      %c0_164 = arith.constant 0 : index
      %505 = vector.load %arg5[%c0_163, %c0_164] : memref<8x128xf32, #tpu.memory_space<vmem>>, vector<8x128xf32>
      tpu.vector_store %arg5[%c0_163, %c0_164], %504 {strides = array<i32>} : memref<8x128xf32, #tpu.memory_space<vmem>>, vector<8x128xf32>,
      %cst_165 = arith.constant 0.000000e+00 : f32
      %506 = vector.broadcast %cst_165 : f32 to vector<8x128xf32>
      %c0_166 = arith.constant 0 : index
      %c0_167 = arith.constant 0 : index
      %507 = vector.load %arg6[%c0_166, %c0_167] : memref<8x128xf32, #tpu.memory_space<vmem>>, vector<8x128xf32>
      tpu.vector_store %arg6[%c0_166, %c0_167], %506 {strides = array<i32>} : memref<8x128xf32, #tpu.memory_space<vmem>>, vector<8x128xf32>,
    } else {
    }
    %c0 = arith.constant 0 : index
    %c0_1 = arith.constant 0 : index
    %3 = vector.load %arg3[%c0, %c0_1] : memref<128x384xf32, #tpu.memory_space<vmem>>, vector<128x384xf32>
    %c0_2 = arith.constant 0 : index
    %c0_3 = arith.constant 0 : index
    %4 = vector.load %arg5[%c0_2, %c0_3] : memref<8x128xf32, #tpu.memory_space<vmem>>, vector<8x128xf32>
    %c0_4 = arith.constant 0 : index
    %c0_5 = arith.constant 0 : index
    %5 = vector.load %arg6[%c0_4, %c0_5] : memref<8x128xf32, #tpu.memory_space<vmem>>, vector<8x128xf32>
    %c0_i32_6 = arith.constant 0 : i32
    %cst = arith.constant dense<0.000000e+00> : vector<8x384xf32>
    %6 = tpu.matmul %4, %3, %cst {dimension_numbers = #tpu.dot_dimension_numbers<[1], [0], [0], [1], [0, 0, 1, 1], [], []>} : vector<8x128xf32>, vector<128x384xf32>, vector<8x384xf32> -> vector<8x384xf32>
    %7 = arith.index_cast %c0_i32_6 : i32 to index
    %c0_7 = arith.constant 0 : index
    %c0_8 = arith.constant 0 : index
    %8 = vector.load %arg2[%7, %c0_7, %c0_8] : memref<8x8x640xf32, #tpu.memory_space<vmem>>, vector<1x8x640xf32>
    %9 = vector.shape_cast %8 : vector<1x8x640xf32> to vector<8x640xf32>
    %10 = vector.extract_strided_slice %9 {offsets = [0, 0], sizes = [8, 128], strides = [1, 1]} : vector<8x640xf32> to vector<8x128xf32>
    %11 = vector.extract_strided_slice %6 {offsets = [0, 0], sizes = [8, 128], strides = [1, 1]} : vector<8x384xf32> to vector<8x128xf32>
    %12 = arith.addf %10, %11 : vector<8x128xf32>
    %cst_9 = arith.constant 5.000000e-01 : f32
    %13 = vector.broadcast %cst_9 : f32 to vector<8x128xf32>
    %14 = arith.mulf %13, %12 : vector<8x128xf32>
    %15 = math.tanh %14 : vector<8x128xf32>
    %cst_10 = arith.constant 1.000000e+00 : f32
    %16 = vector.broadcast %cst_10 : f32 to vector<8x128xf32>
    %17 = arith.addf %15, %16 : vector<8x128xf32>
    %cst_11 = arith.constant 5.000000e-01 : f32
    %18 = vector.broadcast %cst_11 : f32 to vector<8x128xf32>
    %19 = arith.mulf %18, %17 : vector<8x128xf32>
    %20 = vector.extract_strided_slice %9 {offsets = [0, 128], sizes = [8, 128], strides = [1, 1]} : vector<8x640xf32> to vector<8x128xf32>
    %21 = vector.extract_strided_slice %6 {offsets = [0, 128], sizes = [8, 128], strides = [1, 1]} : vector<8x384xf32> to vector<8x128xf32>
    %22 = arith.addf %20, %21 : vector<8x128xf32>
    %23 = math.tanh %22 : vector<8x128xf32>
    %24 = vector.extract_strided_slice %9 {offsets = [0, 256], sizes = [8, 128], strides = [1, 1]} : vector<8x640xf32> to vector<8x128xf32>
    %25 = vector.extract_strided_slice %6 {offsets = [0, 256], sizes = [8, 128], strides = [1, 1]} : vector<8x384xf32> to vector<8x128xf32>
    %26 = arith.addf %24, %25 : vector<8x128xf32>
    %cst_12 = arith.constant 5.000000e-01 : f32
    %27 = vector.broadcast %cst_12 : f32 to vector<8x128xf32>
    %28 = arith.mulf %27, %26 : vector<8x128xf32>
    %29 = math.tanh %28 : vector<8x128xf32>
    %cst_13 = arith.constant 1.000000e+00 : f32
    %30 = vector.broadcast %cst_13 : f32 to vector<8x128xf32>
    %31 = arith.addf %29, %30 : vector<8x128xf32>
    %cst_14 = arith.constant 5.000000e-01 : f32
    %32 = vector.broadcast %cst_14 : f32 to vector<8x128xf32>
    %33 = arith.mulf %32, %31 : vector<8x128xf32>
    %34 = vector.extract_strided_slice %9 {offsets = [0, 384], sizes = [8, 128], strides = [1, 1]} : vector<8x640xf32> to vector<8x128xf32>
    %35 = vector.extract_strided_slice %9 {offsets = [0, 512], sizes = [8, 128], strides = [1, 1]} : vector<8x640xf32> to vector<8x128xf32>
    %36 = arith.mulf %19, %34 : vector<8x128xf32>
    %cst_15 = arith.constant 1.000000e+00 : f32
    %37 = vector.broadcast %cst_15 : f32 to vector<8x128xf32>
    %38 = arith.subf %37, %36 : vector<8x128xf32>
    %39 = arith.mulf %38, %5 : vector<8x128xf32>
    %40 = arith.mulf %36, %23 : vector<8x128xf32>
    %41 = arith.addf %39, %40 : vector<8x128xf32>
    %cst_16 = arith.constant 5.000000e-01 : f32
    %42 = vector.broadcast %cst_16 : f32 to vector<8x128xf32>
    %43 = arith.mulf %42, %41 : vector<8x128xf32>
    %44 = math.tanh %43 : vector<8x128xf32>
    %cst_17 = arith.constant 1.000000e+00 : f32
    %45 = vector.broadcast %cst_17 : f32 to vector<8x128xf32>
    %46 = arith.addf %44, %45 : vector<8x128xf32>
    %cst_18 = arith.constant 5.000000e-01 : f32
    %47 = vector.broadcast %cst_18 : f32 to vector<8x128xf32>
    %48 = arith.mulf %47, %46 : vector<8x128xf32>
    %cst_19 = arith.constant 1.000000e+00 : f32
    %49 = vector.broadcast %cst_19 : f32 to vector<8x128xf32>
    %50 = arith.subf %49, %19 : vector<8x128xf32>
    %51 = arith.mulf %50, %5 : vector<8x128xf32>
    %52 = arith.mulf %19, %35 : vector<8x128xf32>
    %53 = arith.mulf %52, %23 : vector<8x128xf32>
    %54 = arith.addf %51, %53 : vector<8x128xf32>
    %cst_20 = arith.constant 5.000000e-01 : f32
    %55 = vector.broadcast %cst_20 : f32 to vector<8x128xf32>
    %56 = arith.mulf %55, %54 : vector<8x128xf32>
    %57 = math.tanh %56 : vector<8x128xf32>
    %cst_21 = arith.constant 1.000000e+00 : f32
    %58 = vector.broadcast %cst_21 : f32 to vector<8x128xf32>
    %59 = arith.addf %57, %58 : vector<8x128xf32>
    %cst_22 = arith.constant 5.000000e-01 : f32
    %60 = vector.broadcast %cst_22 : f32 to vector<8x128xf32>
    %61 = arith.mulf %60, %59 : vector<8x128xf32>
    %62 = math.tanh %48 : vector<8x128xf32>
    %63 = arith.addf %33, %62 : vector<8x128xf32>
    %64 = arith.index_cast %c0_i32_6 : i32 to index
    %c0_23 = arith.constant 0 : index
    %c0_24 = arith.constant 0 : index
    %65 = vector.load %arg4[%64, %c0_23, %c0_24] : memref<8x8x128xf32, #tpu.memory_space<vmem>>, vector<1x8x128xf32>
    %66 = vector.shape_cast %65 : vector<1x8x128xf32> to vector<8x128xf32>
    %67 = vector.shape_cast %63 : vector<8x128xf32> to vector<1x8x128xf32>
    tpu.vector_store %arg4[%64, %c0_23, %c0_24], %67 {strides = array<i32>} : memref<8x8x128xf32, #tpu.memory_space<vmem>>, vector<1x8x128xf32>,
    %c1_i32 = arith.constant 1 : i32
    %cst_25 = arith.constant dense<0.000000e+00> : vector<8x384xf32>
    %68 = tpu.matmul %63, %3, %cst_25 {dimension_numbers = #tpu.dot_dimension_numbers<[1], [0], [0], [1], [0, 0, 1, 1], [], []>} : vector<8x128xf32>, vector<128x384xf32>, vector<8x384xf32> -> vector<8x384xf32>
    %69 = arith.index_cast %c1_i32 : i32 to index
    %c0_26 = arith.constant 0 : index
    %c0_27 = arith.constant 0 : index
    %70 = vector.load %arg2[%69, %c0_26, %c0_27] : memref<8x8x640xf32, #tpu.memory_space<vmem>>, vector<1x8x640xf32>
    %71 = vector.shape_cast %70 : vector<1x8x640xf32> to vector<8x640xf32>
    %72 = vector.extract_strided_slice %71 {offsets = [0, 0], sizes = [8, 128], strides = [1, 1]} : vector<8x640xf32> to vector<8x128xf32>
    %73 = vector.extract_strided_slice %68 {offsets = [0, 0], sizes = [8, 128], strides = [1, 1]} : vector<8x384xf32> to vector<8x128xf32>
    %74 = arith.addf %72, %73 : vector<8x128xf32>
    %cst_28 = arith.constant 5.000000e-01 : f32
    %75 = vector.broadcast %cst_28 : f32 to vector<8x128xf32>
    %76 = arith.mulf %75, %74 : vector<8x128xf32>
    %77 = math.tanh %76 : vector<8x128xf32>
    %cst_29 = arith.constant 1.000000e+00 : f32
    %78 = vector.broadcast %cst_29 : f32 to vector<8x128xf32>
    %79 = arith.addf %77, %78 : vector<8x128xf32>
    %cst_30 = arith.constant 5.000000e-01 : f32
    %80 = vector.broadcast %cst_30 : f32 to vector<8x128xf32>
    %81 = arith.mulf %80, %79 : vector<8x128xf32>
    %82 = vector.extract_strided_slice %71 {offsets = [0, 128], sizes = [8, 128], strides = [1, 1]} : vector<8x640xf32> to vector<8x128xf32>
    %83 = vector.extract_strided_slice %68 {offsets = [0, 128], sizes = [8, 128], strides = [1, 1]} : vector<8x384xf32> to vector<8x128xf32>
    %84 = arith.addf %82, %83 : vector<8x128xf32>
    %85 = math.tanh %84 : vector<8x128xf32>
    %86 = vector.extract_strided_slice %71 {offsets = [0, 256], sizes = [8, 128], strides = [1, 1]} : vector<8x640xf32> to vector<8x128xf32>
    %87 = vector.extract_strided_slice %68 {offsets = [0, 256], sizes = [8, 128], strides = [1, 1]} : vector<8x384xf32> to vector<8x128xf32>
    %88 = arith.addf %86, %87 : vector<8x128xf32>
    %cst_31 = arith.constant 5.000000e-01 : f32
    %89 = vector.broadcast %cst_31 : f32 to vector<8x128xf32>
    %90 = arith.mulf %89, %88 : vector<8x128xf32>
    %91 = math.tanh %90 : vector<8x128xf32>
    %cst_32 = arith.constant 1.000000e+00 : f32
    %92 = vector.broadcast %cst_32 : f32 to vector<8x128xf32>
    %93 = arith.addf %91, %92 : vector<8x128xf32>
    %cst_33 = arith.constant 5.000000e-01 : f32
    %94 = vector.broadcast %cst_33 : f32 to vector<8x128xf32>
    %95 = arith.mulf %94, %93 : vector<8x128xf32>
    %96 = vector.extract_strided_slice %71 {offsets = [0, 384], sizes = [8, 128], strides = [1, 1]} : vector<8x640xf32> to vector<8x128xf32>
    %97 = vector.extract_strided_slice %71 {offsets = [0, 512], sizes = [8, 128], strides = [1, 1]} : vector<8x640xf32> to vector<8x128xf32>
    %98 = arith.mulf %81, %96 : vector<8x128xf32>
    %cst_34 = arith.constant 1.000000e+00 : f32
    %99 = vector.broadcast %cst_34 : f32 to vector<8x128xf32>
    %100 = arith.subf %99, %98 : vector<8x128xf32>
    %101 = arith.mulf %100, %61 : vector<8x128xf32>
    %102 = arith.mulf %98, %85 : vector<8x128xf32>
    %103 = arith.addf %101, %102 : vector<8x128xf32>
    %cst_35 = arith.constant 5.000000e-01 : f32
    %104 = vector.broadcast %cst_35 : f32 to vector<8x128xf32>
    %105 = arith.mulf %104, %103 : vector<8x128xf32>
    %106 = math.tanh %105 : vector<8x128xf32>
    %cst_36 = arith.constant 1.000000e+00 : f32
    %107 = vector.broadcast %cst_36 : f32 to vector<8x128xf32>
    %108 = arith.addf %106, %107 : vector<8x128xf32>
    %cst_37 = arith.constant 5.000000e-01 : f32
    %109 = vector.broadcast %cst_37 : f32 to vector<8x128xf32>
    %110 = arith.mulf %109, %108 : vector<8x128xf32>
    %cst_38 = arith.constant 1.000000e+00 : f32
    %111 = vector.broadcast %cst_38 : f32 to vector<8x128xf32>
    %112 = arith.subf %111, %81 : vector<8x128xf32>
    %113 = arith.mulf %112, %61 : vector<8x128xf32>
    %114 = arith.mulf %81, %97 : vector<8x128xf32>
    %115 = arith.mulf %114, %85 : vector<8x128xf32>
    %116 = arith.addf %113, %115 : vector<8x128xf32>
    %cst_39 = arith.constant 5.000000e-01 : f32
    %117 = vector.broadcast %cst_39 : f32 to vector<8x128xf32>
    %118 = arith.mulf %117, %116 : vector<8x128xf32>
    %119 = math.tanh %118 : vector<8x128xf32>
    %cst_40 = arith.constant 1.000000e+00 : f32
    %120 = vector.broadcast %cst_40 : f32 to vector<8x128xf32>
    %121 = arith.addf %119, %120 : vector<8x128xf32>
    %cst_41 = arith.constant 5.000000e-01 : f32
    %122 = vector.broadcast %cst_41 : f32 to vector<8x128xf32>
    %123 = arith.mulf %122, %121 : vector<8x128xf32>
    %124 = math.tanh %110 : vector<8x128xf32>
    %125 = arith.addf %95, %124 : vector<8x128xf32>
    %126 = arith.index_cast %c1_i32 : i32 to index
    %c0_42 = arith.constant 0 : index
    %c0_43 = arith.constant 0 : index
    %127 = vector.load %arg4[%126, %c0_42, %c0_43] : memref<8x8x128xf32, #tpu.memory_space<vmem>>, vector<1x8x128xf32>
    %128 = vector.shape_cast %127 : vector<1x8x128xf32> to vector<8x128xf32>
    %129 = vector.shape_cast %125 : vector<8x128xf32> to vector<1x8x128xf32>
    tpu.vector_store %arg4[%126, %c0_42, %c0_43], %129 {strides = array<i32>} : memref<8x8x128xf32, #tpu.memory_space<vmem>>, vector<1x8x128xf32>,
    %c2_i32 = arith.constant 2 : i32
    %cst_44 = arith.constant dense<0.000000e+00> : vector<8x384xf32>
    %130 = tpu.matmul %125, %3, %cst_44 {dimension_numbers = #tpu.dot_dimension_numbers<[1], [0], [0], [1], [0, 0, 1, 1], [], []>} : vector<8x128xf32>, vector<128x384xf32>, vector<8x384xf32> -> vector<8x384xf32>
    %131 = arith.index_cast %c2_i32 : i32 to index
    %c0_45 = arith.constant 0 : index
    %c0_46 = arith.constant 0 : index
    %132 = vector.load %arg2[%131, %c0_45, %c0_46] : memref<8x8x640xf32, #tpu.memory_space<vmem>>, vector<1x8x640xf32>
    %133 = vector.shape_cast %132 : vector<1x8x640xf32> to vector<8x640xf32>
    %134 = vector.extract_strided_slice %133 {offsets = [0, 0], sizes = [8, 128], strides = [1, 1]} : vector<8x640xf32> to vector<8x128xf32>
    %135 = vector.extract_strided_slice %130 {offsets = [0, 0], sizes = [8, 128], strides = [1, 1]} : vector<8x384xf32> to vector<8x128xf32>
    %136 = arith.addf %134, %135 : vector<8x128xf32>
    %cst_47 = arith.constant 5.000000e-01 : f32
    %137 = vector.broadcast %cst_47 : f32 to vector<8x128xf32>
    %138 = arith.mulf %137, %136 : vector<8x128xf32>
    %139 = math.tanh %138 : vector<8x128xf32>
    %cst_48 = arith.constant 1.000000e+00 : f32
    %140 = vector.broadcast %cst_48 : f32 to vector<8x128xf32>
    %141 = arith.addf %139, %140 : vector<8x128xf32>
    %cst_49 = arith.constant 5.000000e-01 : f32
    %142 = vector.broadcast %cst_49 : f32 to vector<8x128xf32>
    %143 = arith.mulf %142, %141 : vector<8x128xf32>
    %144 = vector.extract_strided_slice %133 {offsets = [0, 128], sizes = [8, 128], strides = [1, 1]} : vector<8x640xf32> to vector<8x128xf32>
    %145 = vector.extract_strided_slice %130 {offsets = [0, 128], sizes = [8, 128], strides = [1, 1]} : vector<8x384xf32> to vector<8x128xf32>
    %146 = arith.addf %144, %145 : vector<8x128xf32>
    %147 = math.tanh %146 : vector<8x128xf32>
    %148 = vector.extract_strided_slice %133 {offsets = [0, 256], sizes = [8, 128], strides = [1, 1]} : vector<8x640xf32> to vector<8x128xf32>
    %149 = vector.extract_strided_slice %130 {offsets = [0, 256], sizes = [8, 128], strides = [1, 1]} : vector<8x384xf32> to vector<8x128xf32>
    %150 = arith.addf %148, %149 : vector<8x128xf32>
    %cst_50 = arith.constant 5.000000e-01 : f32
    %151 = vector.broadcast %cst_50 : f32 to vector<8x128xf32>
    %152 = arith.mulf %151, %150 : vector<8x128xf32>
    %153 = math.tanh %152 : vector<8x128xf32>
    %cst_51 = arith.constant 1.000000e+00 : f32
    %154 = vector.broadcast %cst_51 : f32 to vector<8x128xf32>
    %155 = arith.addf %153, %154 : vector<8x128xf32>
    %cst_52 = arith.constant 5.000000e-01 : f32
    %156 = vector.broadcast %cst_52 : f32 to vector<8x128xf32>
    %157 = arith.mulf %156, %155 : vector<8x128xf32>
    %158 = vector.extract_strided_slice %133 {offsets = [0, 384], sizes = [8, 128], strides = [1, 1]} : vector<8x640xf32> to vector<8x128xf32>
    %159 = vector.extract_strided_slice %133 {offsets = [0, 512], sizes = [8, 128], strides = [1, 1]} : vector<8x640xf32> to vector<8x128xf32>
    %160 = arith.mulf %143, %158 : vector<8x128xf32>
    %cst_53 = arith.constant 1.000000e+00 : f32
    %161 = vector.broadcast %cst_53 : f32 to vector<8x128xf32>
    %162 = arith.subf %161, %160 : vector<8x128xf32>
    %163 = arith.mulf %162, %123 : vector<8x128xf32>
    %164 = arith.mulf %160, %147 : vector<8x128xf32>
    %165 = arith.addf %163, %164 : vector<8x128xf32>
    %cst_54 = arith.constant 5.000000e-01 : f32
    %166 = vector.broadcast %cst_54 : f32 to vector<8x128xf32>
    %167 = arith.mulf %166, %165 : vector<8x128xf32>
    %168 = math.tanh %167 : vector<8x128xf32>
    %cst_55 = arith.constant 1.000000e+00 : f32
    %169 = vector.broadcast %cst_55 : f32 to vector<8x128xf32>
    %170 = arith.addf %168, %169 : vector<8x128xf32>
    %cst_56 = arith.constant 5.000000e-01 : f32
    %171 = vector.broadcast %cst_56 : f32 to vector<8x128xf32>
    %172 = arith.mulf %171, %170 : vector<8x128xf32>
    %cst_57 = arith.constant 1.000000e+00 : f32
    %173 = vector.broadcast %cst_57 : f32 to vector<8x128xf32>
    %174 = arith.subf %173, %143 : vector<8x128xf32>
    %175 = arith.mulf %174, %123 : vector<8x128xf32>
    %176 = arith.mulf %143, %159 : vector<8x128xf32>
    %177 = arith.mulf %176, %147 : vector<8x128xf32>
    %178 = arith.addf %175, %177 : vector<8x128xf32>
    %cst_58 = arith.constant 5.000000e-01 : f32
    %179 = vector.broadcast %cst_58 : f32 to vector<8x128xf32>
    %180 = arith.mulf %179, %178 : vector<8x128xf32>
    %181 = math.tanh %180 : vector<8x128xf32>
    %cst_59 = arith.constant 1.000000e+00 : f32
    %182 = vector.broadcast %cst_59 : f32 to vector<8x128xf32>
    %183 = arith.addf %181, %182 : vector<8x128xf32>
    %cst_60 = arith.constant 5.000000e-01 : f32
    %184 = vector.broadcast %cst_60 : f32 to vector<8x128xf32>
    %185 = arith.mulf %184, %183 : vector<8x128xf32>
    %186 = math.tanh %172 : vector<8x128xf32>
    %187 = arith.addf %157, %186 : vector<8x128xf32>
    %188 = arith.index_cast %c2_i32 : i32 to index
    %c0_61 = arith.constant 0 : index
    %c0_62 = arith.constant 0 : index
    %189 = vector.load %arg4[%188, %c0_61, %c0_62] : memref<8x8x128xf32, #tpu.memory_space<vmem>>, vector<1x8x128xf32>
    %190 = vector.shape_cast %189 : vector<1x8x128xf32> to vector<8x128xf32>
    %191 = vector.shape_cast %187 : vector<8x128xf32> to vector<1x8x128xf32>
    tpu.vector_store %arg4[%188, %c0_61, %c0_62], %191 {strides = array<i32>} : memref<8x8x128xf32, #tpu.memory_space<vmem>>, vector<1x8x128xf32>,
    %c3_i32 = arith.constant 3 : i32
    %cst_63 = arith.constant dense<0.000000e+00> : vector<8x384xf32>
    %192 = tpu.matmul %187, %3, %cst_63 {dimension_numbers = #tpu.dot_dimension_numbers<[1], [0], [0], [1], [0, 0, 1, 1], [], []>} : vector<8x128xf32>, vector<128x384xf32>, vector<8x384xf32> -> vector<8x384xf32>
    %193 = arith.index_cast %c3_i32 : i32 to index
    %c0_64 = arith.constant 0 : index
    %c0_65 = arith.constant 0 : index
    %194 = vector.load %arg2[%193, %c0_64, %c0_65] : memref<8x8x640xf32, #tpu.memory_space<vmem>>, vector<1x8x640xf32>
    %195 = vector.shape_cast %194 : vector<1x8x640xf32> to vector<8x640xf32>
    %196 = vector.extract_strided_slice %195 {offsets = [0, 0], sizes = [8, 128], strides = [1, 1]} : vector<8x640xf32> to vector<8x128xf32>
    %197 = vector.extract_strided_slice %192 {offsets = [0, 0], sizes = [8, 128], strides = [1, 1]} : vector<8x384xf32> to vector<8x128xf32>
    %198 = arith.addf %196, %197 : vector<8x128xf32>
    %cst_66 = arith.constant 5.000000e-01 : f32
    %199 = vector.broadcast %cst_66 : f32 to vector<8x128xf32>
    %200 = arith.mulf %199, %198 : vector<8x128xf32>
    %201 = math.tanh %200 : vector<8x128xf32>
    %cst_67 = arith.constant 1.000000e+00 : f32
    %202 = vector.broadcast %cst_67 : f32 to vector<8x128xf32>
    %203 = arith.addf %201, %202 : vector<8x128xf32>
    %cst_68 = arith.constant 5.000000e-01 : f32
    %204 = vector.broadcast %cst_68 : f32 to vector<8x128xf32>
    %205 = arith.mulf %204, %203 : vector<8x128xf32>
    %206 = vector.extract_strided_slice %195 {offsets = [0, 128], sizes = [8, 128], strides = [1, 1]} : vector<8x640xf32> to vector<8x128xf32>
    %207 = vector.extract_strided_slice %192 {offsets = [0, 128], sizes = [8, 128], strides = [1, 1]} : vector<8x384xf32> to vector<8x128xf32>
    %208 = arith.addf %206, %207 : vector<8x128xf32>
    %209 = math.tanh %208 : vector<8x128xf32>
    %210 = vector.extract_strided_slice %195 {offsets = [0, 256], sizes = [8, 128], strides = [1, 1]} : vector<8x640xf32> to vector<8x128xf32>
    %211 = vector.extract_strided_slice %192 {offsets = [0, 256], sizes = [8, 128], strides = [1, 1]} : vector<8x384xf32> to vector<8x128xf32>
    %212 = arith.addf %210, %211 : vector<8x128xf32>
    %cst_69 = arith.constant 5.000000e-01 : f32
    %213 = vector.broadcast %cst_69 : f32 to vector<8x128xf32>
    %214 = arith.mulf %213, %212 : vector<8x128xf32>
    %215 = math.tanh %214 : vector<8x128xf32>
    %cst_70 = arith.constant 1.000000e+00 : f32
    %216 = vector.broadcast %cst_70 : f32 to vector<8x128xf32>
    %217 = arith.addf %215, %216 : vector<8x128xf32>
    %cst_71 = arith.constant 5.000000e-01 : f32
    %218 = vector.broadcast %cst_71 : f32 to vector<8x128xf32>
    %219 = arith.mulf %218, %217 : vector<8x128xf32>
    %220 = vector.extract_strided_slice %195 {offsets = [0, 384], sizes = [8, 128], strides = [1, 1]} : vector<8x640xf32> to vector<8x128xf32>
    %221 = vector.extract_strided_slice %195 {offsets = [0, 512], sizes = [8, 128], strides = [1, 1]} : vector<8x640xf32> to vector<8x128xf32>
    %222 = arith.mulf %205, %220 : vector<8x128xf32>
    %cst_72 = arith.constant 1.000000e+00 : f32
    %223 = vector.broadcast %cst_72 : f32 to vector<8x128xf32>
    %224 = arith.subf %223, %222 : vector<8x128xf32>
    %225 = arith.mulf %224, %185 : vector<8x128xf32>
    %226 = arith.mulf %222, %209 : vector<8x128xf32>
    %227 = arith.addf %225, %226 : vector<8x128xf32>
    %cst_73 = arith.constant 5.000000e-01 : f32
    %228 = vector.broadcast %cst_73 : f32 to vector<8x128xf32>
    %229 = arith.mulf %228, %227 : vector<8x128xf32>
    %230 = math.tanh %229 : vector<8x128xf32>
    %cst_74 = arith.constant 1.000000e+00 : f32
    %231 = vector.broadcast %cst_74 : f32 to vector<8x128xf32>
    %232 = arith.addf %230, %231 : vector<8x128xf32>
    %cst_75 = arith.constant 5.000000e-01 : f32
    %233 = vector.broadcast %cst_75 : f32 to vector<8x128xf32>
    %234 = arith.mulf %233, %232 : vector<8x128xf32>
    %cst_76 = arith.constant 1.000000e+00 : f32
    %235 = vector.broadcast %cst_76 : f32 to vector<8x128xf32>
    %236 = arith.subf %235, %205 : vector<8x128xf32>
    %237 = arith.mulf %236, %185 : vector<8x128xf32>
    %238 = arith.mulf %205, %221 : vector<8x128xf32>
    %239 = arith.mulf %238, %209 : vector<8x128xf32>
    %240 = arith.addf %237, %239 : vector<8x128xf32>
    %cst_77 = arith.constant 5.000000e-01 : f32
    %241 = vector.broadcast %cst_77 : f32 to vector<8x128xf32>
    %242 = arith.mulf %241, %240 : vector<8x128xf32>
    %243 = math.tanh %242 : vector<8x128xf32>
    %cst_78 = arith.constant 1.000000e+00 : f32
    %244 = vector.broadcast %cst_78 : f32 to vector<8x128xf32>
    %245 = arith.addf %243, %244 : vector<8x128xf32>
    %cst_79 = arith.constant 5.000000e-01 : f32
    %246 = vector.broadcast %cst_79 : f32 to vector<8x128xf32>
    %247 = arith.mulf %246, %245 : vector<8x128xf32>
    %248 = math.tanh %234 : vector<8x128xf32>
    %249 = arith.addf %219, %248 : vector<8x128xf32>
    %250 = arith.index_cast %c3_i32 : i32 to index
    %c0_80 = arith.constant 0 : index
    %c0_81 = arith.constant 0 : index
    %251 = vector.load %arg4[%250, %c0_80, %c0_81] : memref<8x8x128xf32, #tpu.memory_space<vmem>>, vector<1x8x128xf32>
    %252 = vector.shape_cast %251 : vector<1x8x128xf32> to vector<8x128xf32>
    %253 = vector.shape_cast %249 : vector<8x128xf32> to vector<1x8x128xf32>
    tpu.vector_store %arg4[%250, %c0_80, %c0_81], %253 {strides = array<i32>} : memref<8x8x128xf32, #tpu.memory_space<vmem>>, vector<1x8x128xf32>,
    %c4_i32 = arith.constant 4 : i32
    %cst_82 = arith.constant dense<0.000000e+00> : vector<8x384xf32>
    %254 = tpu.matmul %249, %3, %cst_82 {dimension_numbers = #tpu.dot_dimension_numbers<[1], [0], [0], [1], [0, 0, 1, 1], [], []>} : vector<8x128xf32>, vector<128x384xf32>, vector<8x384xf32> -> vector<8x384xf32>
    %255 = arith.index_cast %c4_i32 : i32 to index
    %c0_83 = arith.constant 0 : index
    %c0_84 = arith.constant 0 : index
    %256 = vector.load %arg2[%255, %c0_83, %c0_84] : memref<8x8x640xf32, #tpu.memory_space<vmem>>, vector<1x8x640xf32>
    %257 = vector.shape_cast %256 : vector<1x8x640xf32> to vector<8x640xf32>
    %258 = vector.extract_strided_slice %257 {offsets = [0, 0], sizes = [8, 128], strides = [1, 1]} : vector<8x640xf32> to vector<8x128xf32>
    %259 = vector.extract_strided_slice %254 {offsets = [0, 0], sizes = [8, 128], strides = [1, 1]} : vector<8x384xf32> to vector<8x128xf32>
    %260 = arith.addf %258, %259 : vector<8x128xf32>
    %cst_85 = arith.constant 5.000000e-01 : f32
    %261 = vector.broadcast %cst_85 : f32 to vector<8x128xf32>
    %262 = arith.mulf %261, %260 : vector<8x128xf32>
    %263 = math.tanh %262 : vector<8x128xf32>
    %cst_86 = arith.constant 1.000000e+00 : f32
    %264 = vector.broadcast %cst_86 : f32 to vector<8x128xf32>
    %265 = arith.addf %263, %264 : vector<8x128xf32>
    %cst_87 = arith.constant 5.000000e-01 : f32
    %266 = vector.broadcast %cst_87 : f32 to vector<8x128xf32>
    %267 = arith.mulf %266, %265 : vector<8x128xf32>
    %268 = vector.extract_strided_slice %257 {offsets = [0, 128], sizes = [8, 128], strides = [1, 1]} : vector<8x640xf32> to vector<8x128xf32>
    %269 = vector.extract_strided_slice %254 {offsets = [0, 128], sizes = [8, 128], strides = [1, 1]} : vector<8x384xf32> to vector<8x128xf32>
    %270 = arith.addf %268, %269 : vector<8x128xf32>
    %271 = math.tanh %270 : vector<8x128xf32>
    %272 = vector.extract_strided_slice %257 {offsets = [0, 256], sizes = [8, 128], strides = [1, 1]} : vector<8x640xf32> to vector<8x128xf32>
    %273 = vector.extract_strided_slice %254 {offsets = [0, 256], sizes = [8, 128], strides = [1, 1]} : vector<8x384xf32> to vector<8x128xf32>
    %274 = arith.addf %272, %273 : vector<8x128xf32>
    %cst_88 = arith.constant 5.000000e-01 : f32
    %275 = vector.broadcast %cst_88 : f32 to vector<8x128xf32>
    %276 = arith.mulf %275, %274 : vector<8x128xf32>
    %277 = math.tanh %276 : vector<8x128xf32>
    %cst_89 = arith.constant 1.000000e+00 : f32
    %278 = vector.broadcast %cst_89 : f32 to vector<8x128xf32>
    %279 = arith.addf %277, %278 : vector<8x128xf32>
    %cst_90 = arith.constant 5.000000e-01 : f32
    %280 = vector.broadcast %cst_90 : f32 to vector<8x128xf32>
    %281 = arith.mulf %280, %279 : vector<8x128xf32>
    %282 = vector.extract_strided_slice %257 {offsets = [0, 384], sizes = [8, 128], strides = [1, 1]} : vector<8x640xf32> to vector<8x128xf32>
    %283 = vector.extract_strided_slice %257 {offsets = [0, 512], sizes = [8, 128], strides = [1, 1]} : vector<8x640xf32> to vector<8x128xf32>
    %284 = arith.mulf %267, %282 : vector<8x128xf32>
    %cst_91 = arith.constant 1.000000e+00 : f32
    %285 = vector.broadcast %cst_91 : f32 to vector<8x128xf32>
    %286 = arith.subf %285, %284 : vector<8x128xf32>
    %287 = arith.mulf %286, %247 : vector<8x128xf32>
    %288 = arith.mulf %284, %271 : vector<8x128xf32>
    %289 = arith.addf %287, %288 : vector<8x128xf32>
    %cst_92 = arith.constant 5.000000e-01 : f32
    %290 = vector.broadcast %cst_92 : f32 to vector<8x128xf32>
    %291 = arith.mulf %290, %289 : vector<8x128xf32>
    %292 = math.tanh %291 : vector<8x128xf32>
    %cst_93 = arith.constant 1.000000e+00 : f32
    %293 = vector.broadcast %cst_93 : f32 to vector<8x128xf32>
    %294 = arith.addf %292, %293 : vector<8x128xf32>
    %cst_94 = arith.constant 5.000000e-01 : f32
    %295 = vector.broadcast %cst_94 : f32 to vector<8x128xf32>
    %296 = arith.mulf %295, %294 : vector<8x128xf32>
    %cst_95 = arith.constant 1.000000e+00 : f32
    %297 = vector.broadcast %cst_95 : f32 to vector<8x128xf32>
    %298 = arith.subf %297, %267 : vector<8x128xf32>
    %299 = arith.mulf %298, %247 : vector<8x128xf32>
    %300 = arith.mulf %267, %283 : vector<8x128xf32>
    %301 = arith.mulf %300, %271 : vector<8x128xf32>
    %302 = arith.addf %299, %301 : vector<8x128xf32>
    %cst_96 = arith.constant 5.000000e-01 : f32
    %303 = vector.broadcast %cst_96 : f32 to vector<8x128xf32>
    %304 = arith.mulf %303, %302 : vector<8x128xf32>
    %305 = math.tanh %304 : vector<8x128xf32>
    %cst_97 = arith.constant 1.000000e+00 : f32
    %306 = vector.broadcast %cst_97 : f32 to vector<8x128xf32>
    %307 = arith.addf %305, %306 : vector<8x128xf32>
    %cst_98 = arith.constant 5.000000e-01 : f32
    %308 = vector.broadcast %cst_98 : f32 to vector<8x128xf32>
    %309 = arith.mulf %308, %307 : vector<8x128xf32>
    %310 = math.tanh %296 : vector<8x128xf32>
    %311 = arith.addf %281, %310 : vector<8x128xf32>
    %312 = arith.index_cast %c4_i32 : i32 to index
    %c0_99 = arith.constant 0 : index
    %c0_100 = arith.constant 0 : index
    %313 = vector.load %arg4[%312, %c0_99, %c0_100] : memref<8x8x128xf32, #tpu.memory_space<vmem>>, vector<1x8x128xf32>
    %314 = vector.shape_cast %313 : vector<1x8x128xf32> to vector<8x128xf32>
    %315 = vector.shape_cast %311 : vector<8x128xf32> to vector<1x8x128xf32>
    tpu.vector_store %arg4[%312, %c0_99, %c0_100], %315 {strides = array<i32>} : memref<8x8x128xf32, #tpu.memory_space<vmem>>, vector<1x8x128xf32>,
    %c5_i32 = arith.constant 5 : i32
    %cst_101 = arith.constant dense<0.000000e+00> : vector<8x384xf32>
    %316 = tpu.matmul %311, %3, %cst_101 {dimension_numbers = #tpu.dot_dimension_numbers<[1], [0], [0], [1], [0, 0, 1, 1], [], []>} : vector<8x128xf32>, vector<128x384xf32>, vector<8x384xf32> -> vector<8x384xf32>
    %317 = arith.index_cast %c5_i32 : i32 to index
    %c0_102 = arith.constant 0 : index
    %c0_103 = arith.constant 0 : index
    %318 = vector.load %arg2[%317, %c0_102, %c0_103] : memref<8x8x640xf32, #tpu.memory_space<vmem>>, vector<1x8x640xf32>
    %319 = vector.shape_cast %318 : vector<1x8x640xf32> to vector<8x640xf32>
    %320 = vector.extract_strided_slice %319 {offsets = [0, 0], sizes = [8, 128], strides = [1, 1]} : vector<8x640xf32> to vector<8x128xf32>
    %321 = vector.extract_strided_slice %316 {offsets = [0, 0], sizes = [8, 128], strides = [1, 1]} : vector<8x384xf32> to vector<8x128xf32>
    %322 = arith.addf %320, %321 : vector<8x128xf32>
    %cst_104 = arith.constant 5.000000e-01 : f32
    %323 = vector.broadcast %cst_104 : f32 to vector<8x128xf32>
    %324 = arith.mulf %323, %322 : vector<8x128xf32>
    %325 = math.tanh %324 : vector<8x128xf32>
    %cst_105 = arith.constant 1.000000e+00 : f32
    %326 = vector.broadcast %cst_105 : f32 to vector<8x128xf32>
    %327 = arith.addf %325, %326 : vector<8x128xf32>
    %cst_106 = arith.constant 5.000000e-01 : f32
    %328 = vector.broadcast %cst_106 : f32 to vector<8x128xf32>
    %329 = arith.mulf %328, %327 : vector<8x128xf32>
    %330 = vector.extract_strided_slice %319 {offsets = [0, 128], sizes = [8, 128], strides = [1, 1]} : vector<8x640xf32> to vector<8x128xf32>
    %331 = vector.extract_strided_slice %316 {offsets = [0, 128], sizes = [8, 128], strides = [1, 1]} : vector<8x384xf32> to vector<8x128xf32>
    %332 = arith.addf %330, %331 : vector<8x128xf32>
    %333 = math.tanh %332 : vector<8x128xf32>
    %334 = vector.extract_strided_slice %319 {offsets = [0, 256], sizes = [8, 128], strides = [1, 1]} : vector<8x640xf32> to vector<8x128xf32>
    %335 = vector.extract_strided_slice %316 {offsets = [0, 256], sizes = [8, 128], strides = [1, 1]} : vector<8x384xf32> to vector<8x128xf32>
    %336 = arith.addf %334, %335 : vector<8x128xf32>
    %cst_107 = arith.constant 5.000000e-01 : f32
    %337 = vector.broadcast %cst_107 : f32 to vector<8x128xf32>
    %338 = arith.mulf %337, %336 : vector<8x128xf32>
    %339 = math.tanh %338 : vector<8x128xf32>
    %cst_108 = arith.constant 1.000000e+00 : f32
    %340 = vector.broadcast %cst_108 : f32 to vector<8x128xf32>
    %341 = arith.addf %339, %340 : vector<8x128xf32>
    %cst_109 = arith.constant 5.000000e-01 : f32
    %342 = vector.broadcast %cst_109 : f32 to vector<8x128xf32>
    %343 = arith.mulf %342, %341 : vector<8x128xf32>
    %344 = vector.extract_strided_slice %319 {offsets = [0, 384], sizes = [8, 128], strides = [1, 1]} : vector<8x640xf32> to vector<8x128xf32>
    %345 = vector.extract_strided_slice %319 {offsets = [0, 512], sizes = [8, 128], strides = [1, 1]} : vector<8x640xf32> to vector<8x128xf32>
    %346 = arith.mulf %329, %344 : vector<8x128xf32>
    %cst_110 = arith.constant 1.000000e+00 : f32
    %347 = vector.broadcast %cst_110 : f32 to vector<8x128xf32>
    %348 = arith.subf %347, %346 : vector<8x128xf32>
    %349 = arith.mulf %348, %309 : vector<8x128xf32>
    %350 = arith.mulf %346, %333 : vector<8x128xf32>
    %351 = arith.addf %349, %350 : vector<8x128xf32>
    %cst_111 = arith.constant 5.000000e-01 : f32
    %352 = vector.broadcast %cst_111 : f32 to vector<8x128xf32>
    %353 = arith.mulf %352, %351 : vector<8x128xf32>
    %354 = math.tanh %353 : vector<8x128xf32>
    %cst_112 = arith.constant 1.000000e+00 : f32
    %355 = vector.broadcast %cst_112 : f32 to vector<8x128xf32>
    %356 = arith.addf %354, %355 : vector<8x128xf32>
    %cst_113 = arith.constant 5.000000e-01 : f32
    %357 = vector.broadcast %cst_113 : f32 to vector<8x128xf32>
    %358 = arith.mulf %357, %356 : vector<8x128xf32>
    %cst_114 = arith.constant 1.000000e+00 : f32
    %359 = vector.broadcast %cst_114 : f32 to vector<8x128xf32>
    %360 = arith.subf %359, %329 : vector<8x128xf32>
    %361 = arith.mulf %360, %309 : vector<8x128xf32>
    %362 = arith.mulf %329, %345 : vector<8x128xf32>
    %363 = arith.mulf %362, %333 : vector<8x128xf32>
    %364 = arith.addf %361, %363 : vector<8x128xf32>
    %cst_115 = arith.constant 5.000000e-01 : f32
    %365 = vector.broadcast %cst_115 : f32 to vector<8x128xf32>
    %366 = arith.mulf %365, %364 : vector<8x128xf32>
    %367 = math.tanh %366 : vector<8x128xf32>
    %cst_116 = arith.constant 1.000000e+00 : f32
    %368 = vector.broadcast %cst_116 : f32 to vector<8x128xf32>
    %369 = arith.addf %367, %368 : vector<8x128xf32>
    %cst_117 = arith.constant 5.000000e-01 : f32
    %370 = vector.broadcast %cst_117 : f32 to vector<8x128xf32>
    %371 = arith.mulf %370, %369 : vector<8x128xf32>
    %372 = math.tanh %358 : vector<8x128xf32>
    %373 = arith.addf %343, %372 : vector<8x128xf32>
    %374 = arith.index_cast %c5_i32 : i32 to index
    %c0_118 = arith.constant 0 : index
    %c0_119 = arith.constant 0 : index
    %375 = vector.load %arg4[%374, %c0_118, %c0_119] : memref<8x8x128xf32, #tpu.memory_space<vmem>>, vector<1x8x128xf32>
    %376 = vector.shape_cast %375 : vector<1x8x128xf32> to vector<8x128xf32>
    %377 = vector.shape_cast %373 : vector<8x128xf32> to vector<1x8x128xf32>
    tpu.vector_store %arg4[%374, %c0_118, %c0_119], %377 {strides = array<i32>} : memref<8x8x128xf32, #tpu.memory_space<vmem>>, vector<1x8x128xf32>,
    %c6_i32 = arith.constant 6 : i32
    %cst_120 = arith.constant dense<0.000000e+00> : vector<8x384xf32>
    %378 = tpu.matmul %373, %3, %cst_120 {dimension_numbers = #tpu.dot_dimension_numbers<[1], [0], [0], [1], [0, 0, 1, 1], [], []>} : vector<8x128xf32>, vector<128x384xf32>, vector<8x384xf32> -> vector<8x384xf32>
    %379 = arith.index_cast %c6_i32 : i32 to index
    %c0_121 = arith.constant 0 : index
    %c0_122 = arith.constant 0 : index
    %380 = vector.load %arg2[%379, %c0_121, %c0_122] : memref<8x8x640xf32, #tpu.memory_space<vmem>>, vector<1x8x640xf32>
    %381 = vector.shape_cast %380 : vector<1x8x640xf32> to vector<8x640xf32>
    %382 = vector.extract_strided_slice %381 {offsets = [0, 0], sizes = [8, 128], strides = [1, 1]} : vector<8x640xf32> to vector<8x128xf32>
    %383 = vector.extract_strided_slice %378 {offsets = [0, 0], sizes = [8, 128], strides = [1, 1]} : vector<8x384xf32> to vector<8x128xf32>
    %384 = arith.addf %382, %383 : vector<8x128xf32>
    %cst_123 = arith.constant 5.000000e-01 : f32
    %385 = vector.broadcast %cst_123 : f32 to vector<8x128xf32>
    %386 = arith.mulf %385, %384 : vector<8x128xf32>
    %387 = math.tanh %386 : vector<8x128xf32>
    %cst_124 = arith.constant 1.000000e+00 : f32
    %388 = vector.broadcast %cst_124 : f32 to vector<8x128xf32>
    %389 = arith.addf %387, %388 : vector<8x128xf32>
    %cst_125 = arith.constant 5.000000e-01 : f32
    %390 = vector.broadcast %cst_125 : f32 to vector<8x128xf32>
    %391 = arith.mulf %390, %389 : vector<8x128xf32>
    %392 = vector.extract_strided_slice %381 {offsets = [0, 128], sizes = [8, 128], strides = [1, 1]} : vector<8x640xf32> to vector<8x128xf32>
    %393 = vector.extract_strided_slice %378 {offsets = [0, 128], sizes = [8, 128], strides = [1, 1]} : vector<8x384xf32> to vector<8x128xf32>
    %394 = arith.addf %392, %393 : vector<8x128xf32>
    %395 = math.tanh %394 : vector<8x128xf32>
    %396 = vector.extract_strided_slice %381 {offsets = [0, 256], sizes = [8, 128], strides = [1, 1]} : vector<8x640xf32> to vector<8x128xf32>
    %397 = vector.extract_strided_slice %378 {offsets = [0, 256], sizes = [8, 128], strides = [1, 1]} : vector<8x384xf32> to vector<8x128xf32>
    %398 = arith.addf %396, %397 : vector<8x128xf32>
    %cst_126 = arith.constant 5.000000e-01 : f32
    %399 = vector.broadcast %cst_126 : f32 to vector<8x128xf32>
    %400 = arith.mulf %399, %398 : vector<8x128xf32>
    %401 = math.tanh %400 : vector<8x128xf32>
    %cst_127 = arith.constant 1.000000e+00 : f32
    %402 = vector.broadcast %cst_127 : f32 to vector<8x128xf32>
    %403 = arith.addf %401, %402 : vector<8x128xf32>
    %cst_128 = arith.constant 5.000000e-01 : f32
    %404 = vector.broadcast %cst_128 : f32 to vector<8x128xf32>
    %405 = arith.mulf %404, %403 : vector<8x128xf32>
    %406 = vector.extract_strided_slice %381 {offsets = [0, 384], sizes = [8, 128], strides = [1, 1]} : vector<8x640xf32> to vector<8x128xf32>
    %407 = vector.extract_strided_slice %381 {offsets = [0, 512], sizes = [8, 128], strides = [1, 1]} : vector<8x640xf32> to vector<8x128xf32>
    %408 = arith.mulf %391, %406 : vector<8x128xf32>
    %cst_129 = arith.constant 1.000000e+00 : f32
    %409 = vector.broadcast %cst_129 : f32 to vector<8x128xf32>
    %410 = arith.subf %409, %408 : vector<8x128xf32>
    %411 = arith.mulf %410, %371 : vector<8x128xf32>
    %412 = arith.mulf %408, %395 : vector<8x128xf32>
    %413 = arith.addf %411, %412 : vector<8x128xf32>
    %cst_130 = arith.constant 5.000000e-01 : f32
    %414 = vector.broadcast %cst_130 : f32 to vector<8x128xf32>
    %415 = arith.mulf %414, %413 : vector<8x128xf32>
    %416 = math.tanh %415 : vector<8x128xf32>
    %cst_131 = arith.constant 1.000000e+00 : f32
    %417 = vector.broadcast %cst_131 : f32 to vector<8x128xf32>
    %418 = arith.addf %416, %417 : vector<8x128xf32>
    %cst_132 = arith.constant 5.000000e-01 : f32
    %419 = vector.broadcast %cst_132 : f32 to vector<8x128xf32>
    %420 = arith.mulf %419, %418 : vector<8x128xf32>
    %cst_133 = arith.constant 1.000000e+00 : f32
    %421 = vector.broadcast %cst_133 : f32 to vector<8x128xf32>
    %422 = arith.subf %421, %391 : vector<8x128xf32>
    %423 = arith.mulf %422, %371 : vector<8x128xf32>
    %424 = arith.mulf %391, %407 : vector<8x128xf32>
    %425 = arith.mulf %424, %395 : vector<8x128xf32>
    %426 = arith.addf %423, %425 : vector<8x128xf32>
    %cst_134 = arith.constant 5.000000e-01 : f32
    %427 = vector.broadcast %cst_134 : f32 to vector<8x128xf32>
    %428 = arith.mulf %427, %426 : vector<8x128xf32>
    %429 = math.tanh %428 : vector<8x128xf32>
    %cst_135 = arith.constant 1.000000e+00 : f32
    %430 = vector.broadcast %cst_135 : f32 to vector<8x128xf32>
    %431 = arith.addf %429, %430 : vector<8x128xf32>
    %cst_136 = arith.constant 5.000000e-01 : f32
    %432 = vector.broadcast %cst_136 : f32 to vector<8x128xf32>
    %433 = arith.mulf %432, %431 : vector<8x128xf32>
    %434 = math.tanh %420 : vector<8x128xf32>
    %435 = arith.addf %405, %434 : vector<8x128xf32>
    %436 = arith.index_cast %c6_i32 : i32 to index
    %c0_137 = arith.constant 0 : index
    %c0_138 = arith.constant 0 : index
    %437 = vector.load %arg4[%436, %c0_137, %c0_138] : memref<8x8x128xf32, #tpu.memory_space<vmem>>, vector<1x8x128xf32>
    %438 = vector.shape_cast %437 : vector<1x8x128xf32> to vector<8x128xf32>
    %439 = vector.shape_cast %435 : vector<8x128xf32> to vector<1x8x128xf32>
    tpu.vector_store %arg4[%436, %c0_137, %c0_138], %439 {strides = array<i32>} : memref<8x8x128xf32, #tpu.memory_space<vmem>>, vector<1x8x128xf32>,
    %c7_i32 = arith.constant 7 : i32
    %cst_139 = arith.constant dense<0.000000e+00> : vector<8x384xf32>
    %440 = tpu.matmul %435, %3, %cst_139 {dimension_numbers = #tpu.dot_dimension_numbers<[1], [0], [0], [1], [0, 0, 1, 1], [], []>} : vector<8x128xf32>, vector<128x384xf32>, vector<8x384xf32> -> vector<8x384xf32>
    %441 = arith.index_cast %c7_i32 : i32 to index
    %c0_140 = arith.constant 0 : index
    %c0_141 = arith.constant 0 : index
    %442 = vector.load %arg2[%441, %c0_140, %c0_141] : memref<8x8x640xf32, #tpu.memory_space<vmem>>, vector<1x8x640xf32>
    %443 = vector.shape_cast %442 : vector<1x8x640xf32> to vector<8x640xf32>
    %444 = vector.extract_strided_slice %443 {offsets = [0, 0], sizes = [8, 128], strides = [1, 1]} : vector<8x640xf32> to vector<8x128xf32>
    %445 = vector.extract_strided_slice %440 {offsets = [0, 0], sizes = [8, 128], strides = [1, 1]} : vector<8x384xf32> to vector<8x128xf32>
    %446 = arith.addf %444, %445 : vector<8x128xf32>
    %cst_142 = arith.constant 5.000000e-01 : f32
    %447 = vector.broadcast %cst_142 : f32 to vector<8x128xf32>
    %448 = arith.mulf %447, %446 : vector<8x128xf32>
    %449 = math.tanh %448 : vector<8x128xf32>
    %cst_143 = arith.constant 1.000000e+00 : f32
    %450 = vector.broadcast %cst_143 : f32 to vector<8x128xf32>
    %451 = arith.addf %449, %450 : vector<8x128xf32>
    %cst_144 = arith.constant 5.000000e-01 : f32
    %452 = vector.broadcast %cst_144 : f32 to vector<8x128xf32>
    %453 = arith.mulf %452, %451 : vector<8x128xf32>
    %454 = vector.extract_strided_slice %443 {offsets = [0, 128], sizes = [8, 128], strides = [1, 1]} : vector<8x640xf32> to vector<8x128xf32>
    %455 = vector.extract_strided_slice %440 {offsets = [0, 128], sizes = [8, 128], strides = [1, 1]} : vector<8x384xf32> to vector<8x128xf32>
    %456 = arith.addf %454, %455 : vector<8x128xf32>
    %457 = math.tanh %456 : vector<8x128xf32>
    %458 = vector.extract_strided_slice %443 {offsets = [0, 256], sizes = [8, 128], strides = [1, 1]} : vector<8x640xf32> to vector<8x128xf32>
    %459 = vector.extract_strided_slice %440 {offsets = [0, 256], sizes = [8, 128], strides = [1, 1]} : vector<8x384xf32> to vector<8x128xf32>
    %460 = arith.addf %458, %459 : vector<8x128xf32>
    %cst_145 = arith.constant 5.000000e-01 : f32
    %461 = vector.broadcast %cst_145 : f32 to vector<8x128xf32>
    %462 = arith.mulf %461, %460 : vector<8x128xf32>
    %463 = math.tanh %462 : vector<8x128xf32>
    %cst_146 = arith.constant 1.000000e+00 : f32
    %464 = vector.broadcast %cst_146 : f32 to vector<8x128xf32>
    %465 = arith.addf %463, %464 : vector<8x128xf32>
    %cst_147 = arith.constant 5.000000e-01 : f32
    %466 = vector.broadcast %cst_147 : f32 to vector<8x128xf32>
    %467 = arith.mulf %466, %465 : vector<8x128xf32>
    %468 = vector.extract_strided_slice %443 {offsets = [0, 384], sizes = [8, 128], strides = [1, 1]} : vector<8x640xf32> to vector<8x128xf32>
    %469 = vector.extract_strided_slice %443 {offsets = [0, 512], sizes = [8, 128], strides = [1, 1]} : vector<8x640xf32> to vector<8x128xf32>
    %470 = arith.mulf %453, %468 : vector<8x128xf32>
    %cst_148 = arith.constant 1.000000e+00 : f32
    %471 = vector.broadcast %cst_148 : f32 to vector<8x128xf32>
    %472 = arith.subf %471, %470 : vector<8x128xf32>
    %473 = arith.mulf %472, %433 : vector<8x128xf32>
    %474 = arith.mulf %470, %457 : vector<8x128xf32>
    %475 = arith.addf %473, %474 : vector<8x128xf32>
    %cst_149 = arith.constant 5.000000e-01 : f32
    %476 = vector.broadcast %cst_149 : f32 to vector<8x128xf32>
    %477 = arith.mulf %476, %475 : vector<8x128xf32>
    %478 = math.tanh %477 : vector<8x128xf32>
    %cst_150 = arith.constant 1.000000e+00 : f32
    %479 = vector.broadcast %cst_150 : f32 to vector<8x128xf32>
    %480 = arith.addf %478, %479 : vector<8x128xf32>
    %cst_151 = arith.constant 5.000000e-01 : f32
    %481 = vector.broadcast %cst_151 : f32 to vector<8x128xf32>
    %482 = arith.mulf %481, %480 : vector<8x128xf32>
    %cst_152 = arith.constant 1.000000e+00 : f32
    %483 = vector.broadcast %cst_152 : f32 to vector<8x128xf32>
    %484 = arith.subf %483, %453 : vector<8x128xf32>
    %485 = arith.mulf %484, %433 : vector<8x128xf32>
    %486 = arith.mulf %453, %469 : vector<8x128xf32>
    %487 = arith.mulf %486, %457 : vector<8x128xf32>
    %488 = arith.addf %485, %487 : vector<8x128xf32>
    %cst_153 = arith.constant 5.000000e-01 : f32
    %489 = vector.broadcast %cst_153 : f32 to vector<8x128xf32>
    %490 = arith.mulf %489, %488 : vector<8x128xf32>
    %491 = math.tanh %490 : vector<8x128xf32>
    %cst_154 = arith.constant 1.000000e+00 : f32
    %492 = vector.broadcast %cst_154 : f32 to vector<8x128xf32>
    %493 = arith.addf %491, %492 : vector<8x128xf32>
    %cst_155 = arith.constant 5.000000e-01 : f32
    %494 = vector.broadcast %cst_155 : f32 to vector<8x128xf32>
    %495 = arith.mulf %494, %493 : vector<8x128xf32>
    %496 = math.tanh %482 : vector<8x128xf32>
    %497 = arith.addf %467, %496 : vector<8x128xf32>
    %498 = arith.index_cast %c7_i32 : i32 to index
    %c0_156 = arith.constant 0 : index
    %c0_157 = arith.constant 0 : index
    %499 = vector.load %arg4[%498, %c0_156, %c0_157] : memref<8x8x128xf32, #tpu.memory_space<vmem>>, vector<1x8x128xf32>
    %500 = vector.shape_cast %499 : vector<1x8x128xf32> to vector<8x128xf32>
    %501 = vector.shape_cast %497 : vector<8x128xf32> to vector<1x8x128xf32>
    tpu.vector_store %arg4[%498, %c0_156, %c0_157], %501 {strides = array<i32>} : memref<8x8x128xf32, #tpu.memory_space<vmem>>, vector<1x8x128xf32>,
    %c8_i32 = arith.constant 8 : i32
    %c0_158 = arith.constant 0 : index
    %c0_159 = arith.constant 0 : index
    %502 = vector.load %arg5[%c0_158, %c0_159] : memref<8x128xf32, #tpu.memory_space<vmem>>, vector<8x128xf32>
    tpu.vector_store %arg5[%c0_158, %c0_159], %497 {strides = array<i32>} : memref<8x128xf32, #tpu.memory_space<vmem>>, vector<8x128xf32>,
    %c0_160 = arith.constant 0 : index
    %c0_161 = arith.constant 0 : index
    %503 = vector.load %arg6[%c0_160, %c0_161] : memref<8x128xf32, #tpu.memory_space<vmem>>, vector<8x128xf32>
    tpu.vector_store %arg6[%c0_160, %c0_161], %495 {strides = array<i32>} : memref<8x128xf32, #tpu.memory_space<vmem>>, vector<8x128xf32>,
    return
  }
  func.func @transform_0(%arg0: i32, %arg1: i32) -> (i32, i32, i32) {
    %c0_i32 = arith.constant 0 : i32
    %c0_i32_0 = arith.constant 0 : i32
    return %arg1, %arg0, %c0_i32 : i32, i32, i32
  }
  func.func @transform_1(%arg0: i32, %arg1: i32) -> (i32, i32) {
    %c0_i32 = arith.constant 0 : i32
    %c0_i32_0 = arith.constant 0 : i32
    %c0_i32_1 = arith.constant 0 : i32
    return %c0_i32, %c0_i32_0 : i32, i32
  }
  func.func @transform_2(%arg0: i32, %arg1: i32) -> (i32, i32, i32) {
    %c0_i32 = arith.constant 0 : i32
    %c0_i32_0 = arith.constant 0 : i32
    return %arg1, %arg0, %c0_i32 : i32, i32, i32
  }
  func.func @transform_3(%arg0: i32, %arg1: i32) -> (i32, i32) {
    %c0_i32 = arith.constant 0 : i32
    %c0_i32_0 = arith.constant 0 : i32
    return %arg0, %c0_i32 : i32, i32
  }
  func.func @transform_4(%arg0: i32, %arg1: i32) -> (i32, i32) {
    %c0_i32 = arith.constant 0 : i32
    %c0_i32_0 = arith.constant 0 : i32
    return %arg0, %c0_i32 : i32, i32
  }
}

</mosaic_0001>

<llo_original>
// kernel: stacked_time_lstm.3
$region0: #{stacked_time_lstm.3}
  #allocation0 [shape = 'u32[]', space=smem, size = 0x4, offset = 0x4, fixed_abs, tag = 'smem constant byte address 0x4 - core index']
  #allocation1 [shape = 'u32[144,128]{1,0:T(1,128)}', space=vmem, size = 0x12000, scoped, tag = 'internal scratch']
  %s0 = inlined_call_operand.vmem [shape: f32[8,8,640], index: 0, kind: input, shape index: {}]
  %s1 = inlined_call_operand.vmem [shape: f32[128,384], index: 1, kind: input, shape index: {}]
  %s2 = inlined_call_operand.vmem [shape: f32[8,8,128], index: 2, kind: output, shape index: {0}]
  %s3 = inlined_call_operand.vmem [shape: f32[8,128], index: 3, kind: output, shape index: {1}]
  %s4 = inlined_call_operand.vmem [shape: f32[8,128], index: 4, kind: output, shape index: {2}]
  %5 = xla_tuple %s2, %s3, %s4
  %s6 = sld [smem:[#allocation0]]
  $region38: #{stacked_time_lstm.3} parent=0
    _
  %s8 = ssub.s32 1, %s6
  %s9 = scalar_select 0, %s8, %s6
  // Predicated region
  $region2: #{stacked_time_lstm.3} parent=0 // pred_check
    _
  $region3: #{stacked_time_lstm.3} parent=0 // pred_check_branch
    %11 = sbr.rel (0) target = $region5
  $region4: #{stacked_time_lstm.3} parent=0 // pred_region
    _
  $region5: #{stacked_time_lstm.3} parent=0 // pred_fallthru
    _
  // Predicated region
  $region6: #{stacked_time_lstm.3} parent=0 // pred_check
    _
  $region7: #{stacked_time_lstm.3} parent=0 // pred_check_branch
    %13 = sbr.rel (0) target = $region9
  $region8: #{stacked_time_lstm.3} parent=0 // pred_region
    _
  $region9: #{stacked_time_lstm.3} parent=0 // pred_fallthru
    _
  %p14 = scmp.eq.s32.totalorder 0, 0
  // Predicated region
  $region10: #{stacked_time_lstm.3} parent=0 // pred_check
    %p15 = pneg %p14
  $region11: #{stacked_time_lstm.3} parent=0 // pred_check_branch
    %17 = sbr.rel (%p15) target = $region13
  $region12: #{stacked_time_lstm.3} parent=0 // pred_region
    %18 = vst [vmem:[%s3] sm:$0xff] 0.0
    %19 = vst [vmem:[%s4] sm:$0xff] 0.0
  $region13: #{stacked_time_lstm.3} parent=0 // pred_fallthru
    _
  %v20 = vld [vmem:[%s1] sm:$0xff]
  %v21 = vld [vmem:[%s1 + $0x8] sm:$0xff]
  %v22 = vld [vmem:[%s1 + $0x10] sm:$0xff]
  %v23 = vld [vmem:[%s1 + $0x18] sm:$0xff]
  %v24 = vld [vmem:[%s1 + $0x20] sm:$0xff]
  %v25 = vld [vmem:[%s1 + $0x28] sm:$0xff]
  %v26 = vld [vmem:[%s1 + $0x30] sm:$0xff]
  %v27 = vld [vmem:[%s1 + $0x38] sm:$0xff]
  %v28 = vld [vmem:[%s1 + $0x40] sm:$0xff]
  %v29 = vld [vmem:[%s1 + $0x48] sm:$0xff]
  %v30 = vld [vmem:[%s1 + $0x50] sm:$0xff]
  %v31 = vld [vmem:[%s1 + $0x58] sm:$0xff]
  %v32 = vld [vmem:[%s1 + $0x60] sm:$0xff]
  %v33 = vld [vmem:[%s1 + $0x68] sm:$0xff]
  %v34 = vld [vmem:[%s1 + $0x70] sm:$0xff]
  %v35 = vld [vmem:[%s1 + $0x78] sm:$0xff]
  %v36 = vld [vmem:[%s1 + $0x80] sm:$0xff]
  %v37 = vld [vmem:[%s1 + $0x88] sm:$0xff]
  %v38 = vld [vmem:[%s1 + $0x90] sm:$0xff]
  %v39 = vld [vmem:[%s1 + $0x98] sm:$0xff]
  %v40 = vld [vmem:[%s1 + $0xa0] sm:$0xff]
  %v41 = vld [vmem:[%s1 + $0xa8] sm:$0xff]
  %v42 = vld [vmem:[%s1 + $0xb0] sm:$0xff]
  %v43 = vld [vmem:[%s1 + $0xb8] sm:$0xff]
  %v44 = vld [vmem:[%s1 + $0xc0] sm:$0xff]
  %v45 = vld [vmem:[%s1 + $0xc8] sm:$0xff]
  %v46 = vld [vmem:[%s1 + $0xd0] sm:$0xff]
  %v47 = vld [vmem:[%s1 + $0xd8] sm:$0xff]
  %v48 = vld [vmem:[%s1 + $0xe0] sm:$0xff]
  %v49 = vld [vmem:[%s1 + $0xe8] sm:$0xff]
  %v50 = vld [vmem:[%s1 + $0xf0] sm:$0xff]
  %v51 = vld [vmem:[%s1 + $0xf8] sm:$0xff]
  %v52 = vld [vmem:[%s1 + $0x100] sm:$0xff]
  %v53 = vld [vmem:[%s1 + $0x108] sm:$0xff]
  %v54 = vld [vmem:[%s1 + $0x110] sm:$0xff]
  %v55 = vld [vmem:[%s1 + $0x118] sm:$0xff]
  %v56 = vld [vmem:[%s1 + $0x120] sm:$0xff]
  %v57 = vld [vmem:[%s1 + $0x128] sm:$0xff]
  %v58 = vld [vmem:[%s1 + $0x130] sm:$0xff]
  %v59 = vld [vmem:[%s1 + $0x138] sm:$0xff]
  %v60 = vld [vmem:[%s1 + $0x140] sm:$0xff]
  %v61 = vld [vmem:[%s1 + $0x148] sm:$0xff]
  %v62 = vld [vmem:[%s1 + $0x150] sm:$0xff]
  %v63 = vld [vmem:[%s1 + $0x158] sm:$0xff]
  %v64 = vld [vmem:[%s1 + $0x160] sm:$0xff]
  %v65 = vld [vmem:[%s1 + $0x168] sm:$0xff]
  %v66 = vld [vmem:[%s1 + $0x170] sm:$0xff]
  %v67 = vld [vmem:[%s1 + $0x178] sm:$0xff]
  %v68 = vld [vmem:[%s3] sm:$0xff]
  %v69 = vld [vmem:[%s4] sm:$0xff]
  %70 = vmatprep.subr.mxu0 %v21
  %71 = vmatpush1.msra.mxu0 %v20
  %72 = vmatprep.subr.mxu0 %v24
  %73 = vmatpush1.msra.mxu0 %v23
  %74 = vmatprep.subr.mxu0 %v27
  %75 = vmatpush1.msra.mxu0 %v26
  %76 = vmatprep.subr.mxu0 %v30
  %77 = vmatpush1.msra.mxu0 %v29
  %78 = vmatprep.subr.mxu0 %v33
  %79 = vmatpush1.msra.mxu0 %v32
  %80 = vmatprep.subr.mxu0 %v36
  %81 = vmatpush1.msra.mxu0 %v35
  %82 = vmatprep.subr.mxu0 %v39
  %83 = vmatpush1.msra.mxu0 %v38
  %84 = vmatprep.subr.mxu0 %v42
  %85 = vmatpush1.msra.mxu0 %v41
  %86 = vmatprep.subr.mxu0 %v45
  %87 = vmatpush1.msra.mxu0 %v44
  %88 = vmatprep.subr.mxu0 %v48
  %89 = vmatpush1.msra.mxu0 %v47
  %90 = vmatprep.subr.mxu0 %v51
  %91 = vmatpush1.msra.mxu0 %v50
  %92 = vmatprep.subr.mxu0 %v54
  %93 = vmatpush1.msra.mxu0 %v53
  %94 = vmatprep.subr.mxu0 %v57
  %95 = vmatpush1.msra.mxu0 %v56
  %96 = vmatprep.subr.mxu0 %v60
  %97 = vmatpush1.msra.mxu0 %v59
  %98 = vmatprep.subr.mxu0 %v63
  %99 = vmatpush1.msra.mxu0 %v62
  %100 = vmatprep.subr.mxu0 %v66
  %101 = vmatpush1.msra.mxu0 %v65
  %102 = vmatprep.subr.mxu0 0.0
  %103 = vmatpush1.msra.mxu0 0.0
  %104 = vmatprep.subr.mxu0 0.0
  %105 = vmatpush1.msra.mxu0 0.0
  %106 = vmatprep.subr.mxu0 0.0
  %107 = vmatpush1.msra.mxu0 0.0
  %108 = vmatprep.subr.mxu0 0.0
  %109 = vmatpush1.msra.mxu0 0.0
  %110 = vmatprep.subr.mxu0 0.0
  %111 = vmatpush1.msra.mxu0 0.0
  %112 = vmatprep.subr.mxu0 0.0
  %113 = vmatpush1.msra.mxu0 0.0
  %114 = vmatprep.subr.mxu0 0.0
  %115 = vmatpush1.msra.mxu0 0.0
  %116 = vmatprep.subr.mxu0 0.0
  %117 = vmatpush1.msra.mxu0 0.0
  %118 = vmatprep.subr.mxu0 0.0
  %119 = vmatpush1.msra.mxu0 0.0
  %120 = vmatprep.subr.mxu0 0.0
  %121 = vmatpush1.msra.mxu0 0.0
  %122 = vmatprep.subr.mxu0 0.0
  %123 = vmatpush1.msra.mxu0 0.0
  %124 = vmatprep.subr.mxu0 0.0
  %125 = vmatpush1.msra.mxu0 0.0
  %126 = vmatprep.subr.mxu0 0.0
  %127 = vmatpush1.msra.mxu0 0.0
  %128 = vmatprep.subr.mxu0 0.0
  %129 = vmatpush1.msra.mxu0 0.0
  %130 = vmatprep.subr.mxu0 0.0
  %131 = vmatpush1.msra.mxu0 0.0
  %132 = vmatprep.subr.mxu0 0.0
  %133 = vmatpush1.msra.mxu0 0.0
  %134 = vmatprep.mubr.f32.mxu0 0.0
  %135 = vmatmul.mubr.f32.gmra.mrb[0].mxu0 %v68
  %v136 = vpop.f32.mrb[0].mxu0
  %v137 = vadd.f32 0.0, %v136
  %v138 = vpop.f32.mrb[0].mxu0
  %v139 = vadd.f32 0.0, %v138
  %140 = vdwg.mxu0
  %141 = vmatprep.subr.mxu0 0.0
  %142 = vmatpush1.msra.mxu0 %v22
  %143 = vmatprep.subr.mxu0 0.0
  %144 = vmatpush1.msra.mxu0 %v25
  %145 = vmatprep.subr.mxu0 0.0
  %146 = vmatpush1.msra.mxu0 %v28
  %147 = vmatprep.subr.mxu0 0.0
  %148 = vmatpush1.msra.mxu0 %v31
  %149 = vmatprep.subr.mxu0 0.0
  %150 = vmatpush1.msra.mxu0 %v34
  %151 = vmatprep.subr.mxu0 0.0
  %152 = vmatpush1.msra.mxu0 %v37
  %153 = vmatprep.subr.mxu0 0.0
  %154 = vmatpush1.msra.mxu0 %v40
  %155 = vmatprep.subr.mxu0 0.0
  %156 = vmatpush1.msra.mxu0 %v43
  %157 = vmatprep.subr.mxu0 0.0
  %158 = vmatpush1.msra.mxu0 %v46
  %159 = vmatprep.subr.mxu0 0.0
  %160 = vmatpush1.msra.mxu0 %v49
  %161 = vmatprep.subr.mxu0 0.0
  %162 = vmatpush1.msra.mxu0 %v52
  %163 = vmatprep.subr.mxu0 0.0
  %164 = vmatpush1.msra.mxu0 %v55
  %165 = vmatprep.subr.mxu0 0.0
  %166 = vmatpush1.msra.mxu0 %v58
  %167 = vmatprep.subr.mxu0 0.0
  %168 = vmatpush1.msra.mxu0 %v61
  %169 = vmatprep.subr.mxu0 0.0
  %170 = vmatpush1.msra.mxu0 %v64
  %171 = vmatprep.subr.mxu0 0.0
  %172 = vmatpush1.msra.mxu0 %v67
  %173 = vmatprep.subr.mxu0 0.0
  %174 = vmatpush1.msra.mxu0 0.0
  %175 = vmatprep.subr.mxu0 0.0
  %176 = vmatpush1.msra.mxu0 0.0
  %177 = vmatprep.subr.mxu0 0.0
  %178 = vmatpush1.msra.mxu0 0.0
  %179 = vmatprep.subr.mxu0 0.0
  %180 = vmatpush1.msra.mxu0 0.0
  %181 = vmatprep.subr.mxu0 0.0
  %182 = vmatpush1.msra.mxu0 0.0
  %183 = vmatprep.subr.mxu0 0.0
  %184 = vmatpush1.msra.mxu0 0.0
  %185 = vmatprep.subr.mxu0 0.0
  %186 = vmatpush1.msra.mxu0 0.0
  %187 = vmatprep.subr.mxu0 0.0
  %188 = vmatpush1.msra.mxu0 0.0
  %189 = vmatprep.subr.mxu0 0.0
  %190 = vmatpush1.msra.mxu0 0.0
  %191 = vmatprep.subr.mxu0 0.0
  %192 = vmatpush1.msra.mxu0 0.0
  %193 = vmatprep.subr.mxu0 0.0
  %194 = vmatpush1.msra.mxu0 0.0
  %195 = vmatprep.subr.mxu0 0.0
  %196 = vmatpush1.msra.mxu0 0.0
  %197 = vmatprep.subr.mxu0 0.0
  %198 = vmatpush1.msra.mxu0 0.0
  %199 = vmatprep.subr.mxu0 0.0
  %200 = vmatpush1.msra.mxu0 0.0
  %201 = vmatprep.subr.mxu0 0.0
  %202 = vmatpush1.msra.mxu0 0.0
  %203 = vmatprep.subr.mxu0 0.0
  %204 = vmatpush1.msra.mxu0 0.0
  %205 = vmatprep.mubr.f32.mxu0 0.0
  %206 = vmatmul.mubr.f32.gmra.mrb[0].mxu0 %v68
  %v207 = vpop.f32.mrb[0].mxu0
  %v208 = vadd.f32 0.0, %v207
  %v209 = vpop.f32.mrb[0].mxu0
  %210 = vdwg.mxu0
  %v211 = vld [vmem:[%s0] sm:$0xff]
  %v212 = vld [vmem:[%s0 + $0x8] sm:$0xff]
  %v213 = vld [vmem:[%s0 + $0x10] sm:$0xff]
  %v214 = vld [vmem:[%s0 + $0x18] sm:$0xff]
  %v215 = vld [vmem:[%s0 + $0x20] sm:$0xff]
  %v216 = vadd.f32 %v211, %v137
  %v217 = vmul.f32 %v216, 0.5
  %v218 = vtanh.pop %v217
  %v219 = vadd.f32 %v218, 1.0
  %v220 = vmul.f32 %v219, 0.5
  %v221 = vadd.f32 %v212, %v139
  %v222 = vtanh.pop %v221
  %v223 = vadd.f32 %v213, %v208
  %v224 = vmul.f32 %v223, 0.5
  %v225 = vtanh.pop %v224
  %v226 = vadd.f32 %v225, 1.0
  %v227 = vmul.f32 %v226, 0.5
  %v228 = vmul.f32 %v220, %v214
  %v229 = vsub.f32 1.0, %v228
  %v230 = vmul.f32 %v229, %v69
  %v231 = vmul.f32 %v228, %v222
  %v232 = vadd.f32 %v230, %v231
  %v233 = vmul.f32 %v232, 0.5
  %v234 = vtanh.pop %v233
  %v235 = vadd.f32 %v234, 1.0
  %v236 = vmul.f32 %v235, 0.5
  %v237 = vsub.f32 1.0, %v220
  %v238 = vmul.f32 %v237, %v69
  %v239 = vmul.f32 %v220, %v215
  %v240 = vmul.f32 %v239, %v222
  %v241 = vadd.f32 %v238, %v240
  %v242 = vmul.f32 %v241, 0.5
  %v243 = vtanh.pop %v242
  %v244 = vadd.f32 %v243, 1.0
  %v245 = vmul.f32 %v244, 0.5
  %v246 = vtanh.pop %v236
  %v247 = vadd.f32 %v227, %v246
  %248 = vst [vmem:[%s2] sm:$0xff] %v247
  %249 = vmatprep.subr.mxu0 %v21
  %250 = vmatpush1.msra.mxu0 %v20
  %251 = vmatprep.subr.mxu0 %v24
  %252 = vmatpush1.msra.mxu0 %v23
  %253 = vmatprep.subr.mxu0 %v27
  %254 = vmatpush1.msra.mxu0 %v26
  %255 = vmatprep.subr.mxu0 %v30
  %256 = vmatpush1.msra.mxu0 %v29
  %257 = vmatprep.subr.mxu0 %v33
  %258 = vmatpush1.msra.mxu0 %v32
  %259 = vmatprep.subr.mxu0 %v36
  %260 = vmatpush1.msra.mxu0 %v35
  %261 = vmatprep.subr.mxu0 %v39
  %262 = vmatpush1.msra.mxu0 %v38
  %263 = vmatprep.subr.mxu0 %v42
  %264 = vmatpush1.msra.mxu0 %v41
  %265 = vmatprep.subr.mxu0 %v45
  %266 = vmatpush1.msra.mxu0 %v44
  %267 = vmatprep.subr.mxu0 %v48
  %268 = vmatpush1.msra.mxu0 %v47
  %269 = vmatprep.subr.mxu0 %v51
  %270 = vmatpush1.msra.mxu0 %v50
  %271 = vmatprep.subr.mxu0 %v54
  %272 = vmatpush1.msra.mxu0 %v53
  %273 = vmatprep.subr.mxu0 %v57
  %274 = vmatpush1.msra.mxu0 %v56
  %275 = vmatprep.subr.mxu0 %v60
  %276 = vmatpush1.msra.mxu0 %v59
  %277 = vmatprep.subr.mxu0 %v63
  %278 = vmatpush1.msra.mxu0 %v62
  %279 = vmatprep.subr.mxu0 %v66
  %280 = vmatpush1.msra.mxu0 %v65
  %281 = vmatprep.subr.mxu0 0.0
  %282 = vmatpush1.msra.mxu0 0.0
  %283 = vmatprep.subr.mxu0 0.0
  %284 = vmatpush1.msra.mxu0 0.0
  %285 = vmatprep.subr.mxu0 0.0
  %286 = vmatpush1.msra.mxu0 0.0
  %287 = vmatprep.subr.mxu0 0.0
  %288 = vmatpush1.msra.mxu0 0.0
  %289 = vmatprep.subr.mxu0 0.0
  %290 = vmatpush1.msra.mxu0 0.0
  %291 = vmatprep.subr.mxu0 0.0
  %292 = vmatpush1.msra.mxu0 0.0
  %293 = vmatprep.subr.mxu0 0.0
  %294 = vmatpush1.msra.mxu0 0.0
  %295 = vmatprep.subr.mxu0 0.0
  %296 = vmatpush1.msra.mxu0 0.0
  %297 = vmatprep.subr.mxu0 0.0
  %298 = vmatpush1.msra.mxu0 0.0
  %299 = vmatprep.subr.mxu0 0.0
  %300 = vmatpush1.msra.mxu0 0.0
  %301 = vmatprep.subr.mxu0 0.0
  %302 = vmatpush1.msra.mxu0 0.0
  %303 = vmatprep.subr.mxu0 0.0
  %304 = vmatpush1.msra.mxu0 0.0
  %305 = vmatprep.subr.mxu0 0.0
  %306 = vmatpush1.msra.mxu0 0.0
  %307 = vmatprep.subr.mxu0 0.0
  %308 = vmatpush1.msra.mxu0 0.0
  %309 = vmatprep.subr.mxu0 0.0
  %310 = vmatpush1.msra.mxu0 0.0
  %311 = vmatprep.subr.mxu0 0.0
  %312 = vmatpush1.msra.mxu0 0.0
  %313 = vmatprep.mubr.f32.mxu0 0.0
  %314 = vmatmul.mubr.f32.gmra.mrb[0].mxu0 %v247
  %v315 = vpop.f32.mrb[0].mxu0
  %v316 = vadd.f32 0.0, %v315
  %v317 = vpop.f32.mrb[0].mxu0
  %v318 = vadd.f32 0.0, %v317
  %319 = vdwg.mxu0
  %320 = vmatprep.subr.mxu0 0.0
  %321 = vmatpush1.msra.mxu0 %v22
  %322 = vmatprep.subr.mxu0 0.0
  %323 = vmatpush1.msra.mxu0 %v25
  %324 = vmatprep.subr.mxu0 0.0
  %325 = vmatpush1.msra.mxu0 %v28
  %326 = vmatprep.subr.mxu0 0.0
  %327 = vmatpush1.msra.mxu0 %v31
  %328 = vmatprep.subr.mxu0 0.0
  %329 = vmatpush1.msra.mxu0 %v34
  %330 = vmatprep.subr.mxu0 0.0
  %331 = vmatpush1.msra.mxu0 %v37
  %332 = vmatprep.subr.mxu0 0.0
  %333 = vmatpush1.msra.mxu0 %v40
  %334 = vmatprep.subr.mxu0 0.0
  %335 = vmatpush1.msra.mxu0 %v43
  %336 = vmatprep.subr.mxu0 0.0
  %337 = vmatpush1.msra.mxu0 %v46
  %338 = vmatprep.subr.mxu0 0.0
  %339 = vmatpush1.msra.mxu0 %v49
  %340 = vmatprep.subr.mxu0 0.0
  %341 = vmatpush1.msra.mxu0 %v52
  %342 = vmatprep.subr.mxu0 0.0
  %343 = vmatpush1.msra.mxu0 %v55
  %344 = vmatprep.subr.mxu0 0.0
  %345 = vmatpush1.msra.mxu0 %v58
  %346 = vmatprep.subr.mxu0 0.0
  %347 = vmatpush1.msra.mxu0 %v61
  %348 = vmatprep.subr.mxu0 0.0
  %349 = vmatpush1.msra.mxu0 %v64
  %350 = vmatprep.subr.mxu0 0.0
  %351 = vmatpush1.msra.mxu0 %v67
  %352 = vmatprep.subr.mxu0 0.0
  %353 = vmatpush1.msra.mxu0 0.0
  %354 = vmatprep.subr.mxu0 0.0
  %355 = vmatpush1.msra.mxu0 0.0
  %356 = vmatprep.subr.mxu0 0.0
  %357 = vmatpush1.msra.mxu0 0.0
  %358 = vmatprep.subr.mxu0 0.0
  %359 = vmatpush1.msra.mxu0 0.0
  %360 = vmatprep.subr.mxu0 0.0
  %361 = vmatpush1.msra.mxu0 0.0
  %362 = vmatprep.subr.mxu0 0.0
  %363 = vmatpush1.msra.mxu0 0.0
  %364 = vmatprep.subr.mxu0 0.0
  %365 = vmatpush1.msra.mxu0 0.0
  %366 = vmatprep.subr.mxu0 0.0
  %367 = vmatpush1.msra.mxu0 0.0
  %368 = vmatprep.subr.mxu0 0.0
  %369 = vmatpush1.msra.mxu0 0.0
  %370 = vmatprep.subr.mxu0 0.0
  %371 = vmatpush1.msra.mxu0 0.0
  %372 = vmatprep.subr.mxu0 0.0
  %373 = vmatpush1.msra.mxu0 0.0
  %374 = vmatprep.subr.mxu0 0.0
  %375 = vmatpush1.msra.mxu0 0.0
  %376 = vmatprep.subr.mxu0 0.0
  %377 = vmatpush1.msra.mxu0 0.0
  %378 = vmatprep.subr.mxu0 0.0
  %379 = vmatpush1.msra.mxu0 0.0
  %380 = vmatprep.subr.mxu0 0.0
  %381 = vmatpush1.msra.mxu0 0.0
  %382 = vmatprep.subr.mxu0 0.0
  %383 = vmatpush1.msra.mxu0 0.0
  %384 = vmatprep.mubr.f32.mxu0 0.0
  %385 = vmatmul.mubr.f32.gmra.mrb[0].mxu0 %v247
  %v386 = vpop.f32.mrb[0].mxu0
  %v387 = vadd.f32 0.0, %v386
  %v388 = vpop.f32.mrb[0].mxu0
  %389 = vdwg.mxu0
  %s390 = scalar_lea.vmem %s0, 40
  %v391 = vld [vmem:[%s390] sm:$0xff]
  %v392 = vld [vmem:[%s390 + $0x8] sm:$0xff]
  %v393 = vld [vmem:[%s390 + $0x10] sm:$0xff]
  %v394 = vld [vmem:[%s390 + $0x18] sm:$0xff]
  %v395 = vld [vmem:[%s390 + $0x20] sm:$0xff]
  %v396 = vadd.f32 %v391, %v316
  %v397 = vmul.f32 %v396, 0.5
  %v398 = vtanh.pop %v397
  %v399 = vadd.f32 %v398, 1.0
  %v400 = vmul.f32 %v399, 0.5
  %v401 = vadd.f32 %v392, %v318
  %v402 = vtanh.pop %v401
  %v403 = vadd.f32 %v393, %v387
  %v404 = vmul.f32 %v403, 0.5
  %v405 = vtanh.pop %v404
  %v406 = vadd.f32 %v405, 1.0
  %v407 = vmul.f32 %v406, 0.5
  %v408 = vmul.f32 %v400, %v394
  %v409 = vsub.f32 1.0, %v408
  %v410 = vmul.f32 %v409, %v245
  %v411 = vmul.f32 %v408, %v402
  %v412 = vadd.f32 %v410, %v411
  %v413 = vmul.f32 %v412, 0.5
  %v414 = vtanh.pop %v413
  %v415 = vadd.f32 %v414, 1.0
  %v416 = vmul.f32 %v415, 0.5
  %v417 = vsub.f32 1.0, %v400
  %v418 = vmul.f32 %v417, %v245
  %v419 = vmul.f32 %v400, %v395
  %v420 = vmul.f32 %v419, %v402
  %v421 = vadd.f32 %v418, %v420
  %v422 = vmul.f32 %v421, 0.5
  %v423 = vtanh.pop %v422
  %v424 = vadd.f32 %v423, 1.0
  %v425 = vmul.f32 %v424, 0.5
  %v426 = vtanh.pop %v416
  %v427 = vadd.f32 %v407, %v426
  %s428 = scalar_lea.vmem %s2, 8
  %429 = vst [vmem:[%s428] sm:$0xff] %v427
  %430 = vmatprep.subr.mxu0 %v21
  %431 = vmatpush1.msra.mxu0 %v20
  %432 = vmatprep.subr.mxu0 %v24
  %433 = vmatpush1.msra.mxu0 %v23
  %434 = vmatprep.subr.mxu0 %v27
  %435 = vmatpush1.msra.mxu0 %v26
  %436 = vmatprep.subr.mxu0 %v30
  %437 = vmatpush1.msra.mxu0 %v29
  %438 = vmatprep.subr.mxu0 %v33
  %439 = vmatpush1.msra.mxu0 %v32
  %440 = vmatprep.subr.mxu0 %v36
  %441 = vmatpush1.msra.mxu0 %v35
  %442 = vmatprep.subr.mxu0 %v39
  %443 = vmatpush1.msra.mxu0 %v38
  %444 = vmatprep.subr.mxu0 %v42
  %445 = vmatpush1.msra.mxu0 %v41
  %446 = vmatprep.subr.mxu0 %v45
  %447 = vmatpush1.msra.mxu0 %v44
  %448 = vmatprep.subr.mxu0 %v48
  %449 = vmatpush1.msra.mxu0 %v47
  %450 = vmatprep.subr.mxu0 %v51
  %451 = vmatpush1.msra.mxu0 %v50
  %452 = vmatprep.subr.mxu0 %v54
  %453 = vmatpush1.msra.mxu0 %v53
  %454 = vmatprep.subr.mxu0 %v57
  %455 = vmatpush1.msra.mxu0 %v56
  %456 = vmatprep.subr.mxu0 %v60
  %457 = vmatpush1.msra.mxu0 %v59
  %458 = vmatprep.subr.mxu0 %v63
  %459 = vmatpush1.msra.mxu0 %v62
  %460 = vmatprep.subr.mxu0 %v66
  %461 = vmatpush1.msra.mxu0 %v65
  %462 = vmatprep.subr.mxu0 0.0
  %463 = vmatpush1.msra.mxu0 0.0
  %464 = vmatprep.subr.mxu0 0.0
  %465 = vmatpush1.msra.mxu0 0.0
  %466 = vmatprep.subr.mxu0 0.0
  %467 = vmatpush1.msra.mxu0 0.0
  %468 = vmatprep.subr.mxu0 0.0
  %469 = vmatpush1.msra.mxu0 0.0
  %470 = vmatprep.subr.mxu0 0.0
  %471 = vmatpush1.msra.mxu0 0.0
  %472 = vmatprep.subr.mxu0 0.0
  %473 = vmatpush1.msra.mxu0 0.0
  %474 = vmatprep.subr.mxu0 0.0
  %475 = vmatpush1.msra.mxu0 0.0
  %476 = vmatprep.subr.mxu0 0.0
  %477 = vmatpush1.msra.mxu0 0.0
  %478 = vmatprep.subr.mxu0 0.0
  %479 = vmatpush1.msra.mxu0 0.0
  %480 = vmatprep.subr.mxu0 0.0
  %481 = vmatpush1.msra.mxu0 0.0
  %482 = vmatprep.subr.mxu0 0.0
  %483 = vmatpush1.msra.mxu0 0.0
  %484 = vmatprep.subr.mxu0 0.0
  %485 = vmatpush1.msra.mxu0 0.0
  %486 = vmatprep.subr.mxu0 0.0
  %487 = vmatpush1.msra.mxu0 0.0
  %488 = vmatprep.subr.mxu0 0.0
  %489 = vmatpush1.msra.mxu0 0.0
  %490 = vmatprep.subr.mxu0 0.0
  %491 = vmatpush1.msra.mxu0 0.0
  %492 = vmatprep.subr.mxu0 0.0
  %493 = vmatpush1.msra.mxu0 0.0
  %494 = vmatprep.mubr.f32.mxu0 0.0
  %495 = vmatmul.mubr.f32.gmra.mrb[0].mxu0 %v427
  %v496 = vpop.f32.mrb[0].mxu0
  %v497 = vadd.f32 0.0, %v496
  %v498 = vpop.f32.mrb[0].mxu0
  %v499 = vadd.f32 0.0, %v498
  %500 = vdwg.mxu0
  %501 = vmatprep.subr.mxu0 0.0
  %502 = vmatpush1.msra.mxu0 %v22
  %503 = vmatprep.subr.mxu0 0.0
  %504 = vmatpush1.msra.mxu0 %v25
  %505 = vmatprep.subr.mxu0 0.0
  %506 = vmatpush1.msra.mxu0 %v28
  %507 = vmatprep.subr.mxu0 0.0
  %508 = vmatpush1.msra.mxu0 %v31
  %509 = vmatprep.subr.mxu0 0.0
  %510 = vmatpush1.msra.mxu0 %v34
  %511 = vmatprep.subr.mxu0 0.0
  %512 = vmatpush1.msra.mxu0 %v37
  %513 = vmatprep.subr.mxu0 0.0
  %514 = vmatpush1.msra.mxu0 %v40
  %515 = vmatprep.subr.mxu0 0.0
  %516 = vmatpush1.msra.mxu0 %v43
  %517 = vmatprep.subr.mxu0 0.0
  %518 = vmatpush1.msra.mxu0 %v46
  %519 = vmatprep.subr.mxu0 0.0
  %520 = vmatpush1.msra.mxu0 %v49
  %521 = vmatprep.subr.mxu0 0.0
  %522 = vmatpush1.msra.mxu0 %v52
  %523 = vmatprep.subr.mxu0 0.0
  %524 = vmatpush1.msra.mxu0 %v55
  %525 = vmatprep.subr.mxu0 0.0
  %526 = vmatpush1.msra.mxu0 %v58
  %527 = vmatprep.subr.mxu0 0.0
  %528 = vmatpush1.msra.mxu0 %v61
  %529 = vmatprep.subr.mxu0 0.0
  %530 = vmatpush1.msra.mxu0 %v64
  %531 = vmatprep.subr.mxu0 0.0
  %532 = vmatpush1.msra.mxu0 %v67
  %533 = vmatprep.subr.mxu0 0.0
  %534 = vmatpush1.msra.mxu0 0.0
  %535 = vmatprep.subr.mxu0 0.0
  %536 = vmatpush1.msra.mxu0 0.0
  %537 = vmatprep.subr.mxu0 0.0
  %538 = vmatpush1.msra.mxu0 0.0
  %539 = vmatprep.subr.mxu0 0.0
  %540 = vmatpush1.msra.mxu0 0.0
  %541 = vmatprep.subr.mxu0 0.0
  %542 = vmatpush1.msra.mxu0 0.0
  %543 = vmatprep.subr.mxu0 0.0
  %544 = vmatpush1.msra.mxu0 0.0
  %545 = vmatprep.subr.mxu0 0.0
  %546 = vmatpush1.msra.mxu0 0.0
  %547 = vmatprep.subr.mxu0 0.0
  %548 = vmatpush1.msra.mxu0 0.0
  %549 = vmatprep.subr.mxu0 0.0
  %550 = vmatpush1.msra.mxu0 0.0
  %551 = vmatprep.subr.mxu0 0.0
  %552 = vmatpush1.msra.mxu0 0.0
  %553 = vmatprep.subr.mxu0 0.0
  %554 = vmatpush1.msra.mxu0 0.0
  %555 = vmatprep.subr.mxu0 0.0
  %556 = vmatpush1.msra.mxu0 0.0
  %557 = vmatprep.subr.mxu0 0.0
  %558 = vmatpush1.msra.mxu0 0.0
  %559 = vmatprep.subr.mxu0 0.0
  %560 = vmatpush1.msra.mxu0 0.0
  %561 = vmatprep.subr.mxu0 0.0
  %562 = vmatpush1.msra.mxu0 0.0
  %563 = vmatprep.subr.mxu0 0.0
  %564 = vmatpush1.msra.mxu0 0.0
  %565 = vmatprep.mubr.f32.mxu0 0.0
  %566 = vmatmul.mubr.f32.gmra.mrb[0].mxu0 %v427
  %v567 = vpop.f32.mrb[0].mxu0
  %v568 = vadd.f32 0.0, %v567
  %v569 = vpop.f32.mrb[0].mxu0
  %570 = vdwg.mxu0
  %s571 = scalar_lea.vmem %s0, 80
  %v572 = vld [vmem:[%s571] sm:$0xff]
  %v573 = vld [vmem:[%s571 + $0x8] sm:$0xff]
  %v574 = vld [vmem:[%s571 + $0x10] sm:$0xff]
  %v575 = vld [vmem:[%s571 + $0x18] sm:$0xff]
  %v576 = vld [vmem:[%s571 + $0x20] sm:$0xff]
  %v577 = vadd.f32 %v572, %v497
  %v578 = vmul.f32 %v577, 0.5
  %v579 = vtanh.pop %v578
  %v580 = vadd.f32 %v579, 1.0
  %v581 = vmul.f32 %v580, 0.5
  %v582 = vadd.f32 %v573, %v499
  %v583 = vtanh.pop %v582
  %v584 = vadd.f32 %v574, %v568
  %v585 = vmul.f32 %v584, 0.5
  %v586 = vtanh.pop %v585
  %v587 = vadd.f32 %v586, 1.0
  %v588 = vmul.f32 %v587, 0.5
  %v589 = vmul.f32 %v581, %v575
  %v590 = vsub.f32 1.0, %v589
  %v591 = vmul.f32 %v590, %v425
  %v592 = vmul.f32 %v589, %v583
  %v593 = vadd.f32 %v591, %v592
  %v594 = vmul.f32 %v593, 0.5
  %v595 = vtanh.pop %v594
  %v596 = vadd.f32 %v595, 1.0
  %v597 = vmul.f32 %v596, 0.5
  %v598 = vsub.f32 1.0, %v581
  %v599 = vmul.f32 %v598, %v425
  %v600 = vmul.f32 %v581, %v576
  %v601 = vmul.f32 %v600, %v583
  %v602 = vadd.f32 %v599, %v601
  %v603 = vmul.f32 %v602, 0.5
  %v604 = vtanh.pop %v603
  %v605 = vadd.f32 %v604, 1.0
  %v606 = vmul.f32 %v605, 0.5
  %v607 = vtanh.pop %v597
  %v608 = vadd.f32 %v588, %v607
  %s609 = scalar_lea.vmem %s2, 16
  %610 = vst [vmem:[%s609] sm:$0xff] %v608
  %611 = vmatprep.subr.mxu0 %v21
  %612 = vmatpush1.msra.mxu0 %v20
  %613 = vmatprep.subr.mxu0 %v24
  %614 = vmatpush1.msra.mxu0 %v23
  %615 = vmatprep.subr.mxu0 %v27
  %616 = vmatpush1.msra.mxu0 %v26
  %617 = vmatprep.subr.mxu0 %v30
  %618 = vmatpush1.msra.mxu0 %v29
  %619 = vmatprep.subr.mxu0 %v33
  %620 = vmatpush1.msra.mxu0 %v32
  %621 = vmatprep.subr.mxu0 %v36
  %622 = vmatpush1.msra.mxu0 %v35
  %623 = vmatprep.subr.mxu0 %v39
  %624 = vmatpush1.msra.mxu0 %v38
  %625 = vmatprep.subr.mxu0 %v42
  %626 = vmatpush1.msra.mxu0 %v41
  %627 = vmatprep.subr.mxu0 %v45
  %628 = vmatpush1.msra.mxu0 %v44
  %629 = vmatprep.subr.mxu0 %v48
  %630 = vmatpush1.msra.mxu0 %v47
  %631 = vmatprep.subr.mxu0 %v51
  %632 = vmatpush1.msra.mxu0 %v50
  %633 = vmatprep.subr.mxu0 %v54
  %634 = vmatpush1.msra.mxu0 %v53
  %635 = vmatprep.subr.mxu0 %v57
  %636 = vmatpush1.msra.mxu0 %v56
  %637 = vmatprep.subr.mxu0 %v60
  %638 = vmatpush1.msra.mxu0 %v59
  %639 = vmatprep.subr.mxu0 %v63
  %640 = vmatpush1.msra.mxu0 %v62
  %641 = vmatprep.subr.mxu0 %v66
  %642 = vmatpush1.msra.mxu0 %v65
  %643 = vmatprep.subr.mxu0 0.0
  %644 = vmatpush1.msra.mxu0 0.0
  %645 = vmatprep.subr.mxu0 0.0
  %646 = vmatpush1.msra.mxu0 0.0
  %647 = vmatprep.subr.mxu0 0.0
  %648 = vmatpush1.msra.mxu0 0.0
  %649 = vmatprep.subr.mxu0 0.0
  %650 = vmatpush1.msra.mxu0 0.0
  %651 = vmatprep.subr.mxu0 0.0
  %652 = vmatpush1.msra.mxu0 0.0
  %653 = vmatprep.subr.mxu0 0.0
  %654 = vmatpush1.msra.mxu0 0.0
  %655 = vmatprep.subr.mxu0 0.0
  %656 = vmatpush1.msra.mxu0 0.0
  %657 = vmatprep.subr.mxu0 0.0
  %658 = vmatpush1.msra.mxu0 0.0
  %659 = vmatprep.subr.mxu0 0.0
  %660 = vmatpush1.msra.mxu0 0.0
  %661 = vmatprep.subr.mxu0 0.0
  %662 = vmatpush1.msra.mxu0 0.0
  %663 = vmatprep.subr.mxu0 0.0
  %664 = vmatpush1.msra.mxu0 0.0
  %665 = vmatprep.subr.mxu0 0.0
  %666 = vmatpush1.msra.mxu0 0.0
  %667 = vmatprep.subr.mxu0 0.0
  %668 = vmatpush1.msra.mxu0 0.0
  %669 = vmatprep.subr.mxu0 0.0
  %670 = vmatpush1.msra.mxu0 0.0
  %671 = vmatprep.subr.mxu0 0.0
  %672 = vmatpush1.msra.mxu0 0.0
  %673 = vmatprep.subr.mxu0 0.0
  %674 = vmatpush1.msra.mxu0 0.0
  %675 = vmatprep.mubr.f32.mxu0 0.0
  %676 = vmatmul.mubr.f32.gmra.mrb[0].mxu0 %v608
  %v677 = vpop.f32.mrb[0].mxu0
  %v678 = vadd.f32 0.0, %v677
  %v679 = vpop.f32.mrb[0].mxu0
  %v680 = vadd.f32 0.0, %v679
  %681 = vdwg.mxu0
  %682 = vmatprep.subr.mxu0 0.0
  %683 = vmatpush1.msra.mxu0 %v22
  %684 = vmatprep.subr.mxu0 0.0
  %685 = vmatpush1.msra.mxu0 %v25
  %686 = vmatprep.subr.mxu0 0.0
  %687 = vmatpush1.msra.mxu0 %v28
  %688 = vmatprep.subr.mxu0 0.0
  %689 = vmatpush1.msra.mxu0 %v31
  %690 = vmatprep.subr.mxu0 0.0
  %691 = vmatpush1.msra.mxu0 %v34
  %692 = vmatprep.subr.mxu0 0.0
  %693 = vmatpush1.msra.mxu0 %v37
  %694 = vmatprep.subr.mxu0 0.0
  %695 = vmatpush1.msra.mxu0 %v40
  %696 = vmatprep.subr.mxu0 0.0
  %697 = vmatpush1.msra.mxu0 %v43
  %698 = vmatprep.subr.mxu0 0.0
  %699 = vmatpush1.msra.mxu0 %v46
  %700 = vmatprep.subr.mxu0 0.0
  %701 = vmatpush1.msra.mxu0 %v49
  %702 = vmatprep.subr.mxu0 0.0
  %703 = vmatpush1.msra.mxu0 %v52
  %704 = vmatprep.subr.mxu0 0.0
  %705 = vmatpush1.msra.mxu0 %v55
  %706 = vmatprep.subr.mxu0 0.0
  %707 = vmatpush1.msra.mxu0 %v58
  %708 = vmatprep.subr.mxu0 0.0
  %709 = vmatpush1.msra.mxu0 %v61
  %710 = vmatprep.subr.mxu0 0.0
  %711 = vmatpush1.msra.mxu0 %v64
  %712 = vmatprep.subr.mxu0 0.0
  %713 = vmatpush1.msra.mxu0 %v67
  %714 = vmatprep.subr.mxu0 0.0
  %715 = vmatpush1.msra.mxu0 0.0
  %716 = vmatprep.subr.mxu0 0.0
  %717 = vmatpush1.msra.mxu0 0.0
  %718 = vmatprep.subr.mxu0 0.0
  %719 = vmatpush1.msra.mxu0 0.0
  %720 = vmatprep.subr.mxu0 0.0
  %721 = vmatpush1.msra.mxu0 0.0
  %722 = vmatprep.subr.mxu0 0.0
  %723 = vmatpush1.msra.mxu0 0.0
  %724 = vmatprep.subr.mxu0 0.0
  %725 = vmatpush1.msra.mxu0 0.0
  %726 = vmatprep.subr.mxu0 0.0
  %727 = vmatpush1.msra.mxu0 0.0
  %728 = vmatprep.subr.mxu0 0.0
  %729 = vmatpush1.msra.mxu0 0.0
  %730 = vmatprep.subr.mxu0 0.0
  %731 = vmatpush1.msra.mxu0 0.0
  %732 = vmatprep.subr.mxu0 0.0
  %733 = vmatpush1.msra.mxu0 0.0
  %734 = vmatprep.subr.mxu0 0.0
  %735 = vmatpush1.msra.mxu0 0.0
  %736 = vmatprep.subr.mxu0 0.0
  %737 = vmatpush1.msra.mxu0 0.0
  %738 = vmatprep.subr.mxu0 0.0
  %739 = vmatpush1.msra.mxu0 0.0
  %740 = vmatprep.subr.mxu0 0.0
  %741 = vmatpush1.msra.mxu0 0.0
  %742 = vmatprep.subr.mxu0 0.0
  %743 = vmatpush1.msra.mxu0 0.0
  %744 = vmatprep.subr.mxu0 0.0
  %745 = vmatpush1.msra.mxu0 0.0
  %746 = vmatprep.mubr.f32.mxu0 0.0
  %747 = vmatmul.mubr.f32.gmra.mrb[0].mxu0 %v608
  %v748 = vpop.f32.mrb[0].mxu0
  %v749 = vadd.f32 0.0, %v748
  %v750 = vpop.f32.mrb[0].mxu0
  %751 = vdwg.mxu0
  %s752 = scalar_lea.vmem %s0, 120
  %v753 = vld [vmem:[%s752] sm:$0xff]
  %v754 = vld [vmem:[%s752 + $0x8] sm:$0xff]
  %v755 = vld [vmem:[%s752 + $0x10] sm:$0xff]
  %v756 = vld [vmem:[%s752 + $0x18] sm:$0xff]
  %v757 = vld [vmem:[%s752 + $0x20] sm:$0xff]
  %v758 = vadd.f32 %v753, %v678
  %v759 = vmul.f32 %v758, 0.5
  %v760 = vtanh.pop %v759
  %v761 = vadd.f32 %v760, 1.0
  %v762 = vmul.f32 %v761, 0.5
  %v763 = vadd.f32 %v754, %v680
  %v764 = vtanh.pop %v763
  %v765 = vadd.f32 %v755, %v749
  %v766 = vmul.f32 %v765, 0.5
  %v767 = vtanh.pop %v766
  %v768 = vadd.f32 %v767, 1.0
  %v769 = vmul.f32 %v768, 0.5
  %v770 = vmul.f32 %v762, %v756
  %v771 = vsub.f32 1.0, %v770
  %v772 = vmul.f32 %v771, %v606
  %v773 = vmul.f32 %v770, %v764
  %v774 = vadd.f32 %v772, %v773
  %v775 = vmul.f32 %v774, 0.5
  %v776 = vtanh.pop %v775
  %v777 = vadd.f32 %v776, 1.0
  %v778 = vmul.f32 %v777, 0.5
  %v779 = vsub.f32 1.0, %v762
  %v780 = vmul.f32 %v779, %v606
  %v781 = vmul.f32 %v762, %v757
  %v782 = vmul.f32 %v781, %v764
  %v783 = vadd.f32 %v780, %v782
  %v784 = vmul.f32 %v783, 0.5
  %v785 = vtanh.pop %v784
  %v786 = vadd.f32 %v785, 1.0
  %v787 = vmul.f32 %v786, 0.5
  %v788 = vtanh.pop %v778
  %v789 = vadd.f32 %v769, %v788
  %s790 = scalar_lea.vmem %s2, 24
  %791 = vst [vmem:[%s790] sm:$0xff] %v789
  %792 = vmatprep.subr.mxu0 %v21
  %793 = vmatpush1.msra.mxu0 %v20
  %794 = vmatprep.subr.mxu0 %v24
  %795 = vmatpush1.msra.mxu0 %v23
  %796 = vmatprep.subr.mxu0 %v27
  %797 = vmatpush1.msra.mxu0 %v26
  %798 = vmatprep.subr.mxu0 %v30
  %799 = vmatpush1.msra.mxu0 %v29
  %800 = vmatprep.subr.mxu0 %v33
  %801 = vmatpush1.msra.mxu0 %v32
  %802 = vmatprep.subr.mxu0 %v36
  %803 = vmatpush1.msra.mxu0 %v35
  %804 = vmatprep.subr.mxu0 %v39
  %805 = vmatpush1.msra.mxu0 %v38
  %806 = vmatprep.subr.mxu0 %v42
  %807 = vmatpush1.msra.mxu0 %v41
  %808 = vmatprep.subr.mxu0 %v45
  %809 = vmatpush1.msra.mxu0 %v44
  %810 = vmatprep.subr.mxu0 %v48
  %811 = vmatpush1.msra.mxu0 %v47
  %812 = vmatprep.subr.mxu0 %v51
  %813 = vmatpush1.msra.mxu0 %v50
  %814 = vmatprep.subr.mxu0 %v54
  %815 = vmatpush1.msra.mxu0 %v53
  %816 = vmatprep.subr.mxu0 %v57
  %817 = vmatpush1.msra.mxu0 %v56
  %818 = vmatprep.subr.mxu0 %v60
  %819 = vmatpush1.msra.mxu0 %v59
  %820 = vmatprep.subr.mxu0 %v63
  %821 = vmatpush1.msra.mxu0 %v62
  %822 = vmatprep.subr.mxu0 %v66
  %823 = vmatpush1.msra.mxu0 %v65
  %824 = vmatprep.subr.mxu0 0.0
  %825 = vmatpush1.msra.mxu0 0.0
  %826 = vmatprep.subr.mxu0 0.0
  %827 = vmatpush1.msra.mxu0 0.0
  %828 = vmatprep.subr.mxu0 0.0
  %829 = vmatpush1.msra.mxu0 0.0
  %830 = vmatprep.subr.mxu0 0.0
  %831 = vmatpush1.msra.mxu0 0.0
  %832 = vmatprep.subr.mxu0 0.0
  %833 = vmatpush1.msra.mxu0 0.0
  %834 = vmatprep.subr.mxu0 0.0
  %835 = vmatpush1.msra.mxu0 0.0
  %836 = vmatprep.subr.mxu0 0.0
  %837 = vmatpush1.msra.mxu0 0.0
  %838 = vmatprep.subr.mxu0 0.0
  %839 = vmatpush1.msra.mxu0 0.0
  %840 = vmatprep.subr.mxu0 0.0
  %841 = vmatpush1.msra.mxu0 0.0
  %842 = vmatprep.subr.mxu0 0.0
  %843 = vmatpush1.msra.mxu0 0.0
  %844 = vmatprep.subr.mxu0 0.0
  %845 = vmatpush1.msra.mxu0 0.0
  %846 = vmatprep.subr.mxu0 0.0
  %847 = vmatpush1.msra.mxu0 0.0
  %848 = vmatprep.subr.mxu0 0.0
  %849 = vmatpush1.msra.mxu0 0.0
  %850 = vmatprep.subr.mxu0 0.0
  %851 = vmatpush1.msra.mxu0 0.0
  %852 = vmatprep.subr.mxu0 0.0
  %853 = vmatpush1.msra.mxu0 0.0
  %854 = vmatprep.subr.mxu0 0.0
  %855 = vmatpush1.msra.mxu0 0.0
  %856 = vmatprep.mubr.f32.mxu0 0.0
  %857 = vmatmul.mubr.f32.gmra.mrb[0].mxu0 %v789
  %v858 = vpop.f32.mrb[0].mxu0
  %v859 = vadd.f32 0.0, %v858
  %v860 = vpop.f32.mrb[0].mxu0
  %v861 = vadd.f32 0.0, %v860
  %862 = vdwg.mxu0
  %863 = vmatprep.subr.mxu0 0.0
  %864 = vmatpush1.msra.mxu0 %v22
  %865 = vmatprep.subr.mxu0 0.0
  %866 = vmatpush1.msra.mxu0 %v25
  %867 = vmatprep.subr.mxu0 0.0
  %868 = vmatpush1.msra.mxu0 %v28
  %869 = vmatprep.subr.mxu0 0.0
  %870 = vmatpush1.msra.mxu0 %v31
  %871 = vmatprep.subr.mxu0 0.0
  %872 = vmatpush1.msra.mxu0 %v34
  %873 = vmatprep.subr.mxu0 0.0
  %874 = vmatpush1.msra.mxu0 %v37
  %875 = vmatprep.subr.mxu0 0.0
  %876 = vmatpush1.msra.mxu0 %v40
  %877 = vmatprep.subr.mxu0 0.0
  %878 = vmatpush1.msra.mxu0 %v43
  %879 = vmatprep.subr.mxu0 0.0
  %880 = vmatpush1.msra.mxu0 %v46
  %881 = vmatprep.subr.mxu0 0.0
  %882 = vmatpush1.msra.mxu0 %v49
  %883 = vmatprep.subr.mxu0 0.0
  %884 = vmatpush1.msra.mxu0 %v52
  %885 = vmatprep.subr.mxu0 0.0
  %886 = vmatpush1.msra.mxu0 %v55
  %887 = vmatprep.subr.mxu0 0.0
  %888 = vmatpush1.msra.mxu0 %v58
  %889 = vmatprep.subr.mxu0 0.0
  %890 = vmatpush1.msra.mxu0 %v61
  %891 = vmatprep.subr.mxu0 0.0
  %892 = vmatpush1.msra.mxu0 %v64
  %893 = vmatprep.subr.mxu0 0.0
  %894 = vmatpush1.msra.mxu0 %v67
  %895 = vmatprep.subr.mxu0 0.0
  %896 = vmatpush1.msra.mxu0 0.0
  %897 = vmatprep.subr.mxu0 0.0
  %898 = vmatpush1.msra.mxu0 0.0
  %899 = vmatprep.subr.mxu0 0.0
  %900 = vmatpush1.msra.mxu0 0.0
  %901 = vmatprep.subr.mxu0 0.0
  %902 = vmatpush1.msra.mxu0 0.0
  %903 = vmatprep.subr.mxu0 0.0
  %904 = vmatpush1.msra.mxu0 0.0
  %905 = vmatprep.subr.mxu0 0.0
  %906 = vmatpush1.msra.mxu0 0.0
  %907 = vmatprep.subr.mxu0 0.0
  %908 = vmatpush1.msra.mxu0 0.0
  %909 = vmatprep.subr.mxu0 0.0
  %910 = vmatpush1.msra.mxu0 0.0
  %911 = vmatprep.subr.mxu0 0.0
  %912 = vmatpush1.msra.mxu0 0.0
  %913 = vmatprep.subr.mxu0 0.0
  %914 = vmatpush1.msra.mxu0 0.0
  %915 = vmatprep.subr.mxu0 0.0
  %916 = vmatpush1.msra.mxu0 0.0
  %917 = vmatprep.subr.mxu0 0.0
  %918 = vmatpush1.msra.mxu0 0.0
  %919 = vmatprep.subr.mxu0 0.0
  %920 = vmatpush1.msra.mxu0 0.0
  %921 = vmatprep.subr.mxu0 0.0
  %922 = vmatpush1.msra.mxu0 0.0
  %923 = vmatprep.subr.mxu0 0.0
  %924 = vmatpush1.msra.mxu0 0.0
  %925 = vmatprep.subr.mxu0 0.0
  %926 = vmatpush1.msra.mxu0 0.0
  %927 = vmatprep.mubr.f32.mxu0 0.0
  %928 = vmatmul.mubr.f32.gmra.mrb[0].mxu0 %v789
  %v929 = vpop.f32.mrb[0].mxu0
  %v930 = vadd.f32 0.0, %v929
  %v931 = vpop.f32.mrb[0].mxu0
  %932 = vdwg.mxu0
  %s933 = scalar_lea.vmem %s0, 160
  %v934 = vld [vmem:[%s933] sm:$0xff]
  %v935 = vld [vmem:[%s933 + $0x8] sm:$0xff]
  %v936 = vld [vmem:[%s933 + $0x10] sm:$0xff]
  %v937 = vld [vmem:[%s933 + $0x18] sm:$0xff]
  %v938 = vld [vmem:[%s933 + $0x20] sm:$0xff]
  %v939 = vadd.f32 %v934, %v859
  %v940 = vmul.f32 %v939, 0.5
  %v941 = vtanh.pop %v940
  %v942 = vadd.f32 %v941, 1.0
  %v943 = vmul.f32 %v942, 0.5
  %v944 = vadd.f32 %v935, %v861
  %v945 = vtanh.pop %v944
  %v946 = vadd.f32 %v936, %v930
  %v947 = vmul.f32 %v946, 0.5
  %v948 = vtanh.pop %v947
  %v949 = vadd.f32 %v948, 1.0
  %v950 = vmul.f32 %v949, 0.5
  %v951 = vmul.f32 %v943, %v937
  %v952 = vsub.f32 1.0, %v951
  %v953 = vmul.f32 %v952, %v787
  %v954 = vmul.f32 %v951, %v945
  %v955 = vadd.f32 %v953, %v954
  %v956 = vmul.f32 %v955, 0.5
  %v957 = vtanh.pop %v956
  %v958 = vadd.f32 %v957, 1.0
  %v959 = vmul.f32 %v958, 0.5
  %v960 = vsub.f32 1.0, %v943
  %v961 = vmul.f32 %v960, %v787
  %v962 = vmul.f32 %v943, %v938
  %v963 = vmul.f32 %v962, %v945
  %v964 = vadd.f32 %v961, %v963
  %v965 = vmul.f32 %v964, 0.5
  %v966 = vtanh.pop %v965
  %v967 = vadd.f32 %v966, 1.0
  %v968 = vmul.f32 %v967, 0.5
  %v969 = vtanh.pop %v959
  %v970 = vadd.f32 %v950, %v969
  %s971 = scalar_lea.vmem %s2, 32
  %972 = vst [vmem:[%s971] sm:$0xff] %v970
  %973 = vmatprep.subr.mxu0 %v21
  %974 = vmatpush1.msra.mxu0 %v20
  %975 = vmatprep.subr.mxu0 %v24
  %976 = vmatpush1.msra.mxu0 %v23
  %977 = vmatprep.subr.mxu0 %v27
  %978 = vmatpush1.msra.mxu0 %v26
  %979 = vmatprep.subr.mxu0 %v30
  %980 = vmatpush1.msra.mxu0 %v29
  %981 = vmatprep.subr.mxu0 %v33
  %982 = vmatpush1.msra.mxu0 %v32
  %983 = vmatprep.subr.mxu0 %v36
  %984 = vmatpush1.msra.mxu0 %v35
  %985 = vmatprep.subr.mxu0 %v39
  %986 = vmatpush1.msra.mxu0 %v38
  %987 = vmatprep.subr.mxu0 %v42
  %988 = vmatpush1.msra.mxu0 %v41
  %989 = vmatprep.subr.mxu0 %v45
  %990 = vmatpush1.msra.mxu0 %v44
  %991 = vmatprep.subr.mxu0 %v48
  %992 = vmatpush1.msra.mxu0 %v47
  %993 = vmatprep.subr.mxu0 %v51
  %994 = vmatpush1.msra.mxu0 %v50
  %995 = vmatprep.subr.mxu0 %v54
  %996 = vmatpush1.msra.mxu0 %v53
  %997 = vmatprep.subr.mxu0 %v57
  %998 = vmatpush1.msra.mxu0 %v56
  %999 = vmatprep.subr.mxu0 %v60
  %1000 = vmatpush1.msra.mxu0 %v59
  %1001 = vmatprep.subr.mxu0 %v63
  %1002 = vmatpush1.msra.mxu0 %v62
  %1003 = vmatprep.subr.mxu0 %v66
  %1004 = vmatpush1.msra.mxu0 %v65
  %1005 = vmatprep.subr.mxu0 0.0
  %1006 = vmatpush1.msra.mxu0 0.0
  %1007 = vmatprep.subr.mxu0 0.0
  %1008 = vmatpush1.msra.mxu0 0.0
  %1009 = vmatprep.subr.mxu0 0.0
  %1010 = vmatpush1.msra.mxu0 0.0
  %1011 = vmatprep.subr.mxu0 0.0
  %1012 = vmatpush1.msra.mxu0 0.0
  %1013 = vmatprep.subr.mxu0 0.0
  %1014 = vmatpush1.msra.mxu0 0.0
  %1015 = vmatprep.subr.mxu0 0.0
  %1016 = vmatpush1.msra.mxu0 0.0
  %1017 = vmatprep.subr.mxu0 0.0
  %1018 = vmatpush1.msra.mxu0 0.0
  %1019 = vmatprep.subr.mxu0 0.0
  %1020 = vmatpush1.msra.mxu0 0.0
  %1021 = vmatprep.subr.mxu0 0.0
  %1022 = vmatpush1.msra.mxu0 0.0
  %1023 = vmatprep.subr.mxu0 0.0
  %1024 = vmatpush1.msra.mxu0 0.0
  %1025 = vmatprep.subr.mxu0 0.0
  %1026 = vmatpush1.msra.mxu0 0.0
  %1027 = vmatprep.subr.mxu0 0.0
  %1028 = vmatpush1.msra.mxu0 0.0
  %1029 = vmatprep.subr.mxu0 0.0
  %1030 = vmatpush1.msra.mxu0 0.0
  %1031 = vmatprep.subr.mxu0 0.0
  %1032 = vmatpush1.msra.mxu0 0.0
  %1033 = vmatprep.subr.mxu0 0.0
  %1034 = vmatpush1.msra.mxu0 0.0
  %1035 = vmatprep.subr.mxu0 0.0
  %1036 = vmatpush1.msra.mxu0 0.0
  %1037 = vmatprep.mubr.f32.mxu0 0.0
  %1038 = vmatmul.mubr.f32.gmra.mrb[0].mxu0 %v970
  %v1039 = vpop.f32.mrb[0].mxu0
  %v1040 = vadd.f32 0.0, %v1039
  %v1041 = vpop.f32.mrb[0].mxu0
  %v1042 = vadd.f32 0.0, %v1041
  %1043 = vdwg.mxu0
  %1044 = vmatprep.subr.mxu0 0.0
  %1045 = vmatpush1.msra.mxu0 %v22
  %1046 = vmatprep.subr.mxu0 0.0
  %1047 = vmatpush1.msra.mxu0 %v25
  %1048 = vmatprep.subr.mxu0 0.0
  %1049 = vmatpush1.msra.mxu0 %v28
  %1050 = vmatprep.subr.mxu0 0.0
  %1051 = vmatpush1.msra.mxu0 %v31
  %1052 = vmatprep.subr.mxu0 0.0
  %1053 = vmatpush1.msra.mxu0 %v34
  %1054 = vmatprep.subr.mxu0 0.0
  %1055 = vmatpush1.msra.mxu0 %v37
  %1056 = vmatprep.subr.mxu0 0.0
  %1057 = vmatpush1.msra.mxu0 %v40
  %1058 = vmatprep.subr.mxu0 0.0
  %1059 = vmatpush1.msra.mxu0 %v43
  %1060 = vmatprep.subr.mxu0 0.0
  %1061 = vmatpush1.msra.mxu0 %v46
  %1062 = vmatprep.subr.mxu0 0.0
  %1063 = vmatpush1.msra.mxu0 %v49
  %1064 = vmatprep.subr.mxu0 0.0
  %1065 = vmatpush1.msra.mxu0 %v52
  %1066 = vmatprep.subr.mxu0 0.0
  %1067 = vmatpush1.msra.mxu0 %v55
  %1068 = vmatprep.subr.mxu0 0.0
  %1069 = vmatpush1.msra.mxu0 %v58
  %1070 = vmatprep.subr.mxu0 0.0
  %1071 = vmatpush1.msra.mxu0 %v61
  %1072 = vmatprep.subr.mxu0 0.0
  %1073 = vmatpush1.msra.mxu0 %v64
  %1074 = vmatprep.subr.mxu0 0.0
  %1075 = vmatpush1.msra.mxu0 %v67
  %1076 = vmatprep.subr.mxu0 0.0
  %1077 = vmatpush1.msra.mxu0 0.0
  %1078 = vmatprep.subr.mxu0 0.0
  %1079 = vmatpush1.msra.mxu0 0.0
  %1080 = vmatprep.subr.mxu0 0.0
  %1081 = vmatpush1.msra.mxu0 0.0
  %1082 = vmatprep.subr.mxu0 0.0
  %1083 = vmatpush1.msra.mxu0 0.0
  %1084 = vmatprep.subr.mxu0 0.0
  %1085 = vmatpush1.msra.mxu0 0.0
  %1086 = vmatprep.subr.mxu0 0.0
  %1087 = vmatpush1.msra.mxu0 0.0
  %1088 = vmatprep.subr.mxu0 0.0
  %1089 = vmatpush1.msra.mxu0 0.0
  %1090 = vmatprep.subr.mxu0 0.0
  %1091 = vmatpush1.msra.mxu0 0.0
  %1092 = vmatprep.subr.mxu0 0.0
  %1093 = vmatpush1.msra.mxu0 0.0
  %1094 = vmatprep.subr.mxu0 0.0
  %1095 = vmatpush1.msra.mxu0 0.0
  %1096 = vmatprep.subr.mxu0 0.0
  %1097 = vmatpush1.msra.mxu0 0.0
  %1098 = vmatprep.subr.mxu0 0.0
  %1099 = vmatpush1.msra.mxu0 0.0
  %1100 = vmatprep.subr.mxu0 0.0
  %1101 = vmatpush1.msra.mxu0 0.0
  %1102 = vmatprep.subr.mxu0 0.0
  %1103 = vmatpush1.msra.mxu0 0.0
  %1104 = vmatprep.subr.mxu0 0.0
  %1105 = vmatpush1.msra.mxu0 0.0
  %1106 = vmatprep.subr.mxu0 0.0
  %1107 = vmatpush1.msra.mxu0 0.0
  %1108 = vmatprep.mubr.f32.mxu0 0.0
  %1109 = vmatmul.mubr.f32.gmra.mrb[0].mxu0 %v970
  %v1110 = vpop.f32.mrb[0].mxu0
  %v1111 = vadd.f32 0.0, %v1110
  %v1112 = vpop.f32.mrb[0].mxu0
  %1113 = vdwg.mxu0
  %s1114 = scalar_lea.vmem %s0, 200
  %v1115 = vld [vmem:[%s1114] sm:$0xff]
  %v1116 = vld [vmem:[%s1114 + $0x8] sm:$0xff]
  %v1117 = vld [vmem:[%s1114 + $0x10] sm:$0xff]
  %v1118 = vld [vmem:[%s1114 + $0x18] sm:$0xff]
  %v1119 = vld [vmem:[%s1114 + $0x20] sm:$0xff]
  %v1120 = vadd.f32 %v1115, %v1040
  %v1121 = vmul.f32 %v1120, 0.5
  %v1122 = vtanh.pop %v1121
  %v1123 = vadd.f32 %v1122, 1.0
  %v1124 = vmul.f32 %v1123, 0.5
  %v1125 = vadd.f32 %v1116, %v1042
  %v1126 = vtanh.pop %v1125
  %v1127 = vadd.f32 %v1117, %v1111
  %v1128 = vmul.f32 %v1127, 0.5
  %v1129 = vtanh.pop %v1128
  %v1130 = vadd.f32 %v1129, 1.0
  %v1131 = vmul.f32 %v1130, 0.5
  %v1132 = vmul.f32 %v1124, %v1118
  %v1133 = vsub.f32 1.0, %v1132
  %v1134 = vmul.f32 %v1133, %v968
  %v1135 = vmul.f32 %v1132, %v1126
  %v1136 = vadd.f32 %v1134, %v1135
  %v1137 = vmul.f32 %v1136, 0.5
  %v1138 = vtanh.pop %v1137
  %v1139 = vadd.f32 %v1138, 1.0
  %v1140 = vmul.f32 %v1139, 0.5
  %v1141 = vsub.f32 1.0, %v1124
  %v1142 = vmul.f32 %v1141, %v968
  %v1143 = vmul.f32 %v1124, %v1119
  %v1144 = vmul.f32 %v1143, %v1126
  %v1145 = vadd.f32 %v1142, %v1144
  %v1146 = vmul.f32 %v1145, 0.5
  %v1147 = vtanh.pop %v1146
  %v1148 = vadd.f32 %v1147, 1.0
  %v1149 = vmul.f32 %v1148, 0.5
  %v1150 = vtanh.pop %v1140
  %v1151 = vadd.f32 %v1131, %v1150
  %s1152 = scalar_lea.vmem %s2, 40
  %1153 = vst [vmem:[%s1152] sm:$0xff] %v1151
  %1154 = vmatprep.subr.mxu0 %v21
  %1155 = vmatpush1.msra.mxu0 %v20
  %1156 = vmatprep.subr.mxu0 %v24
  %1157 = vmatpush1.msra.mxu0 %v23
  %1158 = vmatprep.subr.mxu0 %v27
  %1159 = vmatpush1.msra.mxu0 %v26
  %1160 = vmatprep.subr.mxu0 %v30
  %1161 = vmatpush1.msra.mxu0 %v29
  %1162 = vmatprep.subr.mxu0 %v33
  %1163 = vmatpush1.msra.mxu0 %v32
  %1164 = vmatprep.subr.mxu0 %v36
  %1165 = vmatpush1.msra.mxu0 %v35
  %1166 = vmatprep.subr.mxu0 %v39
  %1167 = vmatpush1.msra.mxu0 %v38
  %1168 = vmatprep.subr.mxu0 %v42
  %1169 = vmatpush1.msra.mxu0 %v41
  %1170 = vmatprep.subr.mxu0 %v45
  %1171 = vmatpush1.msra.mxu0 %v44
  %1172 = vmatprep.subr.mxu0 %v48
  %1173 = vmatpush1.msra.mxu0 %v47
  %1174 = vmatprep.subr.mxu0 %v51
  %1175 = vmatpush1.msra.mxu0 %v50
  %1176 = vmatprep.subr.mxu0 %v54
  %1177 = vmatpush1.msra.mxu0 %v53
  %1178 = vmatprep.subr.mxu0 %v57
  %1179 = vmatpush1.msra.mxu0 %v56
  %1180 = vmatprep.subr.mxu0 %v60
  %1181 = vmatpush1.msra.mxu0 %v59
  %1182 = vmatprep.subr.mxu0 %v63
  %1183 = vmatpush1.msra.mxu0 %v62
  %1184 = vmatprep.subr.mxu0 %v66
  %1185 = vmatpush1.msra.mxu0 %v65
  %1186 = vmatprep.subr.mxu0 0.0
  %1187 = vmatpush1.msra.mxu0 0.0
  %1188 = vmatprep.subr.mxu0 0.0
  %1189 = vmatpush1.msra.mxu0 0.0
  %1190 = vmatprep.subr.mxu0 0.0
  %1191 = vmatpush1.msra.mxu0 0.0
  %1192 = vmatprep.subr.mxu0 0.0
  %1193 = vmatpush1.msra.mxu0 0.0
  %1194 = vmatprep.subr.mxu0 0.0
  %1195 = vmatpush1.msra.mxu0 0.0
  %1196 = vmatprep.subr.mxu0 0.0
  %1197 = vmatpush1.msra.mxu0 0.0
  %1198 = vmatprep.subr.mxu0 0.0
  %1199 = vmatpush1.msra.mxu0 0.0
  %1200 = vmatprep.subr.mxu0 0.0
  %1201 = vmatpush1.msra.mxu0 0.0
  %1202 = vmatprep.subr.mxu0 0.0
  %1203 = vmatpush1.msra.mxu0 0.0
  %1204 = vmatprep.subr.mxu0 0.0
  %1205 = vmatpush1.msra.mxu0 0.0
  %1206 = vmatprep.subr.mxu0 0.0
  %1207 = vmatpush1.msra.mxu0 0.0
  %1208 = vmatprep.subr.mxu0 0.0
  %1209 = vmatpush1.msra.mxu0 0.0
  %1210 = vmatprep.subr.mxu0 0.0
  %1211 = vmatpush1.msra.mxu0 0.0
  %1212 = vmatprep.subr.mxu0 0.0
  %1213 = vmatpush1.msra.mxu0 0.0
  %1214 = vmatprep.subr.mxu0 0.0
  %1215 = vmatpush1.msra.mxu0 0.0
  %1216 = vmatprep.subr.mxu0 0.0
  %1217 = vmatpush1.msra.mxu0 0.0
  %1218 = vmatprep.mubr.f32.mxu0 0.0
  %1219 = vmatmul.mubr.f32.gmra.mrb[0].mxu0 %v1151
  %v1220 = vpop.f32.mrb[0].mxu0
  %v1221 = vadd.f32 0.0, %v1220
  %v1222 = vpop.f32.mrb[0].mxu0
  %v1223 = vadd.f32 0.0, %v1222
  %1224 = vdwg.mxu0
  %1225 = vmatprep.subr.mxu0 0.0
  %1226 = vmatpush1.msra.mxu0 %v22
  %1227 = vmatprep.subr.mxu0 0.0
  %1228 = vmatpush1.msra.mxu0 %v25
  %1229 = vmatprep.subr.mxu0 0.0
  %1230 = vmatpush1.msra.mxu0 %v28
  %1231 = vmatprep.subr.mxu0 0.0
  %1232 = vmatpush1.msra.mxu0 %v31
  %1233 = vmatprep.subr.mxu0 0.0
  %1234 = vmatpush1.msra.mxu0 %v34
  %1235 = vmatprep.subr.mxu0 0.0
  %1236 = vmatpush1.msra.mxu0 %v37
  %1237 = vmatprep.subr.mxu0 0.0
  %1238 = vmatpush1.msra.mxu0 %v40
  %1239 = vmatprep.subr.mxu0 0.0
  %1240 = vmatpush1.msra.mxu0 %v43
  %1241 = vmatprep.subr.mxu0 0.0
  %1242 = vmatpush1.msra.mxu0 %v46
  %1243 = vmatprep.subr.mxu0 0.0
  %1244 = vmatpush1.msra.mxu0 %v49
  %1245 = vmatprep.subr.mxu0 0.0
  %1246 = vmatpush1.msra.mxu0 %v52
  %1247 = vmatprep.subr.mxu0 0.0
  %1248 = vmatpush1.msra.mxu0 %v55
  %1249 = vmatprep.subr.mxu0 0.0
  %1250 = vmatpush1.msra.mxu0 %v58
  %1251 = vmatprep.subr.mxu0 0.0
  %1252 = vmatpush1.msra.mxu0 %v61
  %1253 = vmatprep.subr.mxu0 0.0
  %1254 = vmatpush1.msra.mxu0 %v64
  %1255 = vmatprep.subr.mxu0 0.0
  %1256 = vmatpush1.msra.mxu0 %v67
  %1257 = vmatprep.subr.mxu0 0.0
  %1258 = vmatpush1.msra.mxu0 0.0
  %1259 = vmatprep.subr.mxu0 0.0
  %1260 = vmatpush1.msra.mxu0 0.0
  %1261 = vmatprep.subr.mxu0 0.0
  %1262 = vmatpush1.msra.mxu0 0.0
  %1263 = vmatprep.subr.mxu0 0.0
  %1264 = vmatpush1.msra.mxu0 0.0
  %1265 = vmatprep.subr.mxu0 0.0
  %1266 = vmatpush1.msra.mxu0 0.0
  %1267 = vmatprep.subr.mxu0 0.0
  %1268 = vmatpush1.msra.mxu0 0.0
  %1269 = vmatprep.subr.mxu0 0.0
  %1270 = vmatpush1.msra.mxu0 0.0
  %1271 = vmatprep.subr.mxu0 0.0
  %1272 = vmatpush1.msra.mxu0 0.0
  %1273 = vmatprep.subr.mxu0 0.0
  %1274 = vmatpush1.msra.mxu0 0.0
  %1275 = vmatprep.subr.mxu0 0.0
  %1276 = vmatpush1.msra.mxu0 0.0
  %1277 = vmatprep.subr.mxu0 0.0
  %1278 = vmatpush1.msra.mxu0 0.0
  %1279 = vmatprep.subr.mxu0 0.0
  %1280 = vmatpush1.msra.mxu0 0.0
  %1281 = vmatprep.subr.mxu0 0.0
  %1282 = vmatpush1.msra.mxu0 0.0
  %1283 = vmatprep.subr.mxu0 0.0
  %1284 = vmatpush1.msra.mxu0 0.0
  %1285 = vmatprep.subr.mxu0 0.0
  %1286 = vmatpush1.msra.mxu0 0.0
  %1287 = vmatprep.subr.mxu0 0.0
  %1288 = vmatpush1.msra.mxu0 0.0
  %1289 = vmatprep.mubr.f32.mxu0 0.0
  %1290 = vmatmul.mubr.f32.gmra.mrb[0].mxu0 %v1151
  %v1291 = vpop.f32.mrb[0].mxu0
  %v1292 = vadd.f32 0.0, %v1291
  %v1293 = vpop.f32.mrb[0].mxu0
  %1294 = vdwg.mxu0
  %s1295 = scalar_lea.vmem %s0, 240
  %v1296 = vld [vmem:[%s1295] sm:$0xff]
  %v1297 = vld [vmem:[%s1295 + $0x8] sm:$0xff]
  %v1298 = vld [vmem:[%s1295 + $0x10] sm:$0xff]
  %v1299 = vld [vmem:[%s1295 + $0x18] sm:$0xff]
  %v1300 = vld [vmem:[%s1295 + $0x20] sm:$0xff]
  %v1301 = vadd.f32 %v1296, %v1221
  %v1302 = vmul.f32 %v1301, 0.5
  %v1303 = vtanh.pop %v1302
  %v1304 = vadd.f32 %v1303, 1.0
  %v1305 = vmul.f32 %v1304, 0.5
  %v1306 = vadd.f32 %v1297, %v1223
  %v1307 = vtanh.pop %v1306
  %v1308 = vadd.f32 %v1298, %v1292
  %v1309 = vmul.f32 %v1308, 0.5
  %v1310 = vtanh.pop %v1309
  %v1311 = vadd.f32 %v1310, 1.0
  %v1312 = vmul.f32 %v1311, 0.5
  %v1313 = vmul.f32 %v1305, %v1299
  %v1314 = vsub.f32 1.0, %v1313
  %v1315 = vmul.f32 %v1314, %v1149
  %v1316 = vmul.f32 %v1313, %v1307
  %v1317 = vadd.f32 %v1315, %v1316
  %v1318 = vmul.f32 %v1317, 0.5
  %v1319 = vtanh.pop %v1318
  %v1320 = vadd.f32 %v1319, 1.0
  %v1321 = vmul.f32 %v1320, 0.5
  %v1322 = vsub.f32 1.0, %v1305
  %v1323 = vmul.f32 %v1322, %v1149
  %v1324 = vmul.f32 %v1305, %v1300
  %v1325 = vmul.f32 %v1324, %v1307
  %v1326 = vadd.f32 %v1323, %v1325
  %v1327 = vmul.f32 %v1326, 0.5
  %v1328 = vtanh.pop %v1327
  %v1329 = vadd.f32 %v1328, 1.0
  %v1330 = vmul.f32 %v1329, 0.5
  %v1331 = vtanh.pop %v1321
  %v1332 = vadd.f32 %v1312, %v1331
  %s1333 = scalar_lea.vmem %s2, 48
  %1334 = vst [vmem:[%s1333] sm:$0xff] %v1332
  %1335 = vmatprep.subr.mxu0 %v21
  %1336 = vmatpush1.msra.mxu0 %v20
  %1337 = vmatprep.subr.mxu0 %v24
  %1338 = vmatpush1.msra.mxu0 %v23
  %1339 = vmatprep.subr.mxu0 %v27
  %1340 = vmatpush1.msra.mxu0 %v26
  %1341 = vmatprep.subr.mxu0 %v30
  %1342 = vmatpush1.msra.mxu0 %v29
  %1343 = vmatprep.subr.mxu0 %v33
  %1344 = vmatpush1.msra.mxu0 %v32
  %1345 = vmatprep.subr.mxu0 %v36
  %1346 = vmatpush1.msra.mxu0 %v35
  %1347 = vmatprep.subr.mxu0 %v39
  %1348 = vmatpush1.msra.mxu0 %v38
  %1349 = vmatprep.subr.mxu0 %v42
  %1350 = vmatpush1.msra.mxu0 %v41
  %1351 = vmatprep.subr.mxu0 %v45
  %1352 = vmatpush1.msra.mxu0 %v44
  %1353 = vmatprep.subr.mxu0 %v48
  %1354 = vmatpush1.msra.mxu0 %v47
  %1355 = vmatprep.subr.mxu0 %v51
  %1356 = vmatpush1.msra.mxu0 %v50
  %1357 = vmatprep.subr.mxu0 %v54
  %1358 = vmatpush1.msra.mxu0 %v53
  %1359 = vmatprep.subr.mxu0 %v57
  %1360 = vmatpush1.msra.mxu0 %v56
  %1361 = vmatprep.subr.mxu0 %v60
  %1362 = vmatpush1.msra.mxu0 %v59
  %1363 = vmatprep.subr.mxu0 %v63
  %1364 = vmatpush1.msra.mxu0 %v62
  %1365 = vmatprep.subr.mxu0 %v66
  %1366 = vmatpush1.msra.mxu0 %v65
  %1367 = vmatprep.subr.mxu0 0.0
  %1368 = vmatpush1.msra.mxu0 0.0
  %1369 = vmatprep.subr.mxu0 0.0
  %1370 = vmatpush1.msra.mxu0 0.0
  %1371 = vmatprep.subr.mxu0 0.0
  %1372 = vmatpush1.msra.mxu0 0.0
  %1373 = vmatprep.subr.mxu0 0.0
  %1374 = vmatpush1.msra.mxu0 0.0
  %1375 = vmatprep.subr.mxu0 0.0
  %1376 = vmatpush1.msra.mxu0 0.0
  %1377 = vmatprep.subr.mxu0 0.0
  %1378 = vmatpush1.msra.mxu0 0.0
  %1379 = vmatprep.subr.mxu0 0.0
  %1380 = vmatpush1.msra.mxu0 0.0
  %1381 = vmatprep.subr.mxu0 0.0
  %1382 = vmatpush1.msra.mxu0 0.0
  %1383 = vmatprep.subr.mxu0 0.0
  %1384 = vmatpush1.msra.mxu0 0.0
  %1385 = vmatprep.subr.mxu0 0.0
  %1386 = vmatpush1.msra.mxu0 0.0
  %1387 = vmatprep.subr.mxu0 0.0
  %1388 = vmatpush1.msra.mxu0 0.0
  %1389 = vmatprep.subr.mxu0 0.0
  %1390 = vmatpush1.msra.mxu0 0.0
  %1391 = vmatprep.subr.mxu0 0.0
  %1392 = vmatpush1.msra.mxu0 0.0
  %1393 = vmatprep.subr.mxu0 0.0
  %1394 = vmatpush1.msra.mxu0 0.0
  %1395 = vmatprep.subr.mxu0 0.0
  %1396 = vmatpush1.msra.mxu0 0.0
  %1397 = vmatprep.subr.mxu0 0.0
  %1398 = vmatpush1.msra.mxu0 0.0
  %1399 = vmatprep.mubr.f32.mxu0 0.0
  %1400 = vmatmul.mubr.f32.gmra.mrb[0].mxu0 %v1332
  %v1401 = vpop.f32.mrb[0].mxu0
  %v1402 = vadd.f32 0.0, %v1401
  %v1403 = vpop.f32.mrb[0].mxu0
  %v1404 = vadd.f32 0.0, %v1403
  %1405 = vdwg.mxu0
  %1406 = vmatprep.subr.mxu0 0.0
  %1407 = vmatpush1.msra.mxu0 %v22
  %1408 = vmatprep.subr.mxu0 0.0
  %1409 = vmatpush1.msra.mxu0 %v25
  %1410 = vmatprep.subr.mxu0 0.0
  %1411 = vmatpush1.msra.mxu0 %v28
  %1412 = vmatprep.subr.mxu0 0.0
  %1413 = vmatpush1.msra.mxu0 %v31
  %1414 = vmatprep.subr.mxu0 0.0
  %1415 = vmatpush1.msra.mxu0 %v34
  %1416 = vmatprep.subr.mxu0 0.0
  %1417 = vmatpush1.msra.mxu0 %v37
  %1418 = vmatprep.subr.mxu0 0.0
  %1419 = vmatpush1.msra.mxu0 %v40
  %1420 = vmatprep.subr.mxu0 0.0
  %1421 = vmatpush1.msra.mxu0 %v43
  %1422 = vmatprep.subr.mxu0 0.0
  %1423 = vmatpush1.msra.mxu0 %v46
  %1424 = vmatprep.subr.mxu0 0.0
  %1425 = vmatpush1.msra.mxu0 %v49
  %1426 = vmatprep.subr.mxu0 0.0
  %1427 = vmatpush1.msra.mxu0 %v52
  %1428 = vmatprep.subr.mxu0 0.0
  %1429 = vmatpush1.msra.mxu0 %v55
  %1430 = vmatprep.subr.mxu0 0.0
  %1431 = vmatpush1.msra.mxu0 %v58
  %1432 = vmatprep.subr.mxu0 0.0
  %1433 = vmatpush1.msra.mxu0 %v61
  %1434 = vmatprep.subr.mxu0 0.0
  %1435 = vmatpush1.msra.mxu0 %v64
  %1436 = vmatprep.subr.mxu0 0.0
  %1437 = vmatpush1.msra.mxu0 %v67
  %1438 = vmatprep.subr.mxu0 0.0
  %1439 = vmatpush1.msra.mxu0 0.0
  %1440 = vmatprep.subr.mxu0 0.0
  %1441 = vmatpush1.msra.mxu0 0.0
  %1442 = vmatprep.subr.mxu0 0.0
  %1443 = vmatpush1.msra.mxu0 0.0
  %1444 = vmatprep.subr.mxu0 0.0
  %1445 = vmatpush1.msra.mxu0 0.0
  %1446 = vmatprep.subr.mxu0 0.0
  %1447 = vmatpush1.msra.mxu0 0.0
  %1448 = vmatprep.subr.mxu0 0.0
  %1449 = vmatpush1.msra.mxu0 0.0
  %1450 = vmatprep.subr.mxu0 0.0
  %1451 = vmatpush1.msra.mxu0 0.0
  %1452 = vmatprep.subr.mxu0 0.0
  %1453 = vmatpush1.msra.mxu0 0.0
  %1454 = vmatprep.subr.mxu0 0.0
  %1455 = vmatpush1.msra.mxu0 0.0
  %1456 = vmatprep.subr.mxu0 0.0
  %1457 = vmatpush1.msra.mxu0 0.0
  %1458 = vmatprep.subr.mxu0 0.0
  %1459 = vmatpush1.msra.mxu0 0.0
  %1460 = vmatprep.subr.mxu0 0.0
  %1461 = vmatpush1.msra.mxu0 0.0
  %1462 = vmatprep.subr.mxu0 0.0
  %1463 = vmatpush1.msra.mxu0 0.0
  %1464 = vmatprep.subr.mxu0 0.0
  %1465 = vmatpush1.msra.mxu0 0.0
  %1466 = vmatprep.subr.mxu0 0.0
  %1467 = vmatpush1.msra.mxu0 0.0
  %1468 = vmatprep.subr.mxu0 0.0
  %1469 = vmatpush1.msra.mxu0 0.0
  %1470 = vmatprep.mubr.f32.mxu0 0.0
  %1471 = vmatmul.mubr.f32.gmra.mrb[0].mxu0 %v1332
  %v1472 = vpop.f32.mrb[0].mxu0
  %v1473 = vadd.f32 0.0, %v1472
  %v1474 = vpop.f32.mrb[0].mxu0
  %1475 = vdwg.mxu0
  %s1476 = scalar_lea.vmem %s0, 280
  %v1477 = vld [vmem:[%s1476] sm:$0xff]
  %v1478 = vld [vmem:[%s1476 + $0x8] sm:$0xff]
  %v1479 = vld [vmem:[%s1476 + $0x10] sm:$0xff]
  %v1480 = vld [vmem:[%s1476 + $0x18] sm:$0xff]
  %v1481 = vld [vmem:[%s1476 + $0x20] sm:$0xff]
  %v1482 = vadd.f32 %v1477, %v1402
  %v1483 = vmul.f32 %v1482, 0.5
  %v1484 = vtanh.pop %v1483
  %v1485 = vadd.f32 %v1484, 1.0
  %v1486 = vmul.f32 %v1485, 0.5
  %v1487 = vadd.f32 %v1478, %v1404
  %v1488 = vtanh.pop %v1487
  %v1489 = vadd.f32 %v1479, %v1473
  %v1490 = vmul.f32 %v1489, 0.5
  %v1491 = vtanh.pop %v1490
  %v1492 = vadd.f32 %v1491, 1.0
  %v1493 = vmul.f32 %v1492, 0.5
  %v1494 = vmul.f32 %v1486, %v1480
  %v1495 = vsub.f32 1.0, %v1494
  %v1496 = vmul.f32 %v1495, %v1330
  %v1497 = vmul.f32 %v1494, %v1488
  %v1498 = vadd.f32 %v1496, %v1497
  %v1499 = vmul.f32 %v1498, 0.5
  %v1500 = vtanh.pop %v1499
  %v1501 = vadd.f32 %v1500, 1.0
  %v1502 = vmul.f32 %v1501, 0.5
  %v1503 = vsub.f32 1.0, %v1486
  %v1504 = vmul.f32 %v1503, %v1330
  %v1505 = vmul.f32 %v1486, %v1481
  %v1506 = vmul.f32 %v1505, %v1488
  %v1507 = vadd.f32 %v1504, %v1506
  %v1508 = vmul.f32 %v1507, 0.5
  %v1509 = vtanh.pop %v1508
  %v1510 = vadd.f32 %v1509, 1.0
  %v1511 = vmul.f32 %v1510, 0.5
  %v1512 = vtanh.pop %v1502
  %v1513 = vadd.f32 %v1493, %v1512
  %s1514 = scalar_lea.vmem %s2, 56
  %1515 = vst [vmem:[%s1514] sm:$0xff] %v1513
  %1516 = vst [vmem:[%s3] sm:$0xff] %v1513
  %1517 = vst [vmem:[%s4] sm:$0xff] %v1511
  // Predicated region
  $region14: #{stacked_time_lstm.3} parent=0 // pred_check
    _
  $region15: #{stacked_time_lstm.3} parent=0 // pred_check_branch
    %1519 = sbr.rel (0) target = $region17
  $region16: #{stacked_time_lstm.3} parent=0 // pred_region
    _
  $region17: #{stacked_time_lstm.3} parent=0 // pred_fallthru
    _
  // Predicated region
  $region18: #{stacked_time_lstm.3} parent=0 // pred_check
    _
  $region19: #{stacked_time_lstm.3} parent=0 // pred_check_branch
    %1521 = sbr.rel (0) target = $region21
  $region20: #{stacked_time_lstm.3} parent=0 // pred_region
    _
  $region21: #{stacked_time_lstm.3} parent=0 // pred_fallthru
    _
  // Predicated region
  $region22: #{stacked_time_lstm.3} parent=0 // pred_check
    _
  $region23: #{stacked_time_lstm.3} parent=0 // pred_check_branch
    %1523 = sbr.rel (0) target = $region25
  $region24: #{stacked_time_lstm.3} parent=0 // pred_region
    _
  $region25: #{stacked_time_lstm.3} parent=0 // pred_fallthru
    _
  // Predicated region
  $region26: #{stacked_time_lstm.3} parent=0 // pred_check
    _
  $region27: #{stacked_time_lstm.3} parent=0 // pred_check_branch
    %1525 = sbr.rel (0) target = $region29
  $region28: #{stacked_time_lstm.3} parent=0 // pred_region
    _
  $region29: #{stacked_time_lstm.3} parent=0 // pred_fallthru
    _
  // Predicated region
  $region30: #{stacked_time_lstm.3} parent=0 // pred_check
    _
  $region31: #{stacked_time_lstm.3} parent=0 // pred_check_branch
    %1527 = sbr.rel (0) target = $region33
  $region32: #{stacked_time_lstm.3} parent=0 // pred_region
    _
  $region33: #{stacked_time_lstm.3} parent=0 // pred_fallthru
    _
  // Predicated region
  $region34: #{stacked_time_lstm.3} parent=0 // pred_check
    _
  $region35: #{stacked_time_lstm.3} parent=0 // pred_check_branch
    %1529 = sbr.rel (0) target = $region37
  $region36: #{stacked_time_lstm.3} parent=0 // pred_region
    _
  $region37: #{stacked_time_lstm.3} parent=0 // pred_fallthru
    _

// kernel: stacked_time_lstm.2
$region0: #{stacked_time_lstm.2}
  #allocation0 [shape = 'u32[]', space=smem, size = 0x4, offset = 0x4, fixed_abs, tag = 'smem constant byte address 0x4 - core index']
  #allocation1 [shape = 'u32[144,128]{1,0:T(1,128)}', space=vmem, size = 0x12000, scoped, tag = 'internal scratch']
  %s0 = inlined_call_operand.vmem [shape: f32[8,8,640], index: 0, kind: input, shape index: {}]
  %s1 = inlined_call_operand.vmem [shape: f32[128,384], index: 1, kind: input, shape index: {}]
  %s2 = inlined_call_operand.vmem [shape: f32[8,8,128], index: 2, kind: output, shape index: {0}]
  %s3 = inlined_call_operand.hbm [shape: f32[8,128], index: 3, kind: output, shape index: {1}]
  %s4 = inlined_call_operand.hbm [shape: f32[8,128], index: 4, kind: output, shape index: {2}]
  %5 = xla_tuple %s2, %s3, %s4
  %s6 = sld [smem:[#allocation0]]
  $region38: #{stacked_time_lstm.2} parent=0
    _
  %s8 = ssub.s32 1, %s6
  %s9 = scalar_select 0, %s8, %s6
  $region1: #{stacked_time_lstm.2} parent=0
    #allocation2 [shape = 'u8[4096]{0}', space=vmem, size = 0x1000, scoped, tag = 'output window, operand 1, single buffered']
    #allocation3 [shape = 's32[1]{0}', space=sflag, size = 0x4, scoped, tag = 'scoped memory for stacked_time_lstm.2']
    #allocation4 [shape = 'u8[4096]{0}', space=vmem, size = 0x1000, scoped, tag = 'output window, operand 2, single buffered']
    #allocation5 [shape = 's32[1]{0}', space=sflag, size = 0x4, scoped, tag = 'scoped memory for stacked_time_lstm.2']
    %10 = vsyncpa [#allocation3], 0
    %11 = vsyncpa [#allocation5], 0
    // Predicated region
    $region2: #{stacked_time_lstm.2} parent=1 // pred_check
      _
    $region3: #{stacked_time_lstm.2} parent=1 // pred_check_branch
      %13 = sbr.rel (0) target = $region5
    $region4: #{stacked_time_lstm.2} parent=1 // pred_region
      _
    $region5: #{stacked_time_lstm.2} parent=1 // pred_fallthru
      _
    // Predicated region
    $region6: #{stacked_time_lstm.2} parent=1 // pred_check
      _
    $region7: #{stacked_time_lstm.2} parent=1 // pred_check_branch
      %15 = sbr.rel (0) target = $region9
    $region8: #{stacked_time_lstm.2} parent=1 // pred_region
      _
    $region9: #{stacked_time_lstm.2} parent=1 // pred_fallthru
      _
    %p16 = scmp.eq.s32.totalorder 0, 0
    // Predicated region
    $region10: #{stacked_time_lstm.2} parent=1 // pred_check
      %p17 = pneg %p16
    $region11: #{stacked_time_lstm.2} parent=1 // pred_check_branch
      %19 = sbr.rel (%p17) target = $region13
    $region12: #{stacked_time_lstm.2} parent=1 // pred_region
      %20 = vst [vmem:[#allocation2] sm:$0xff] 0.0
      %21 = vst [vmem:[#allocation4] sm:$0xff] 0.0
    $region13: #{stacked_time_lstm.2} parent=1 // pred_fallthru
      _
    %v22 = vld [vmem:[%s1] sm:$0xff]
    %v23 = vld [vmem:[%s1 + $0x8] sm:$0xff]
    %v24 = vld [vmem:[%s1 + $0x10] sm:$0xff]
    %v25 = vld [vmem:[%s1 + $0x18] sm:$0xff]
    %v26 = vld [vmem:[%s1 + $0x20] sm:$0xff]
    %v27 = vld [vmem:[%s1 + $0x28] sm:$0xff]
    %v28 = vld [vmem:[%s1 + $0x30] sm:$0xff]
    %v29 = vld [vmem:[%s1 + $0x38] sm:$0xff]
    %v30 = vld [vmem:[%s1 + $0x40] sm:$0xff]
    %v31 = vld [vmem:[%s1 + $0x48] sm:$0xff]
    %v32 = vld [vmem:[%s1 + $0x50] sm:$0xff]
    %v33 = vld [vmem:[%s1 + $0x58] sm:$0xff]
    %v34 = vld [vmem:[%s1 + $0x60] sm:$0xff]
    %v35 = vld [vmem:[%s1 + $0x68] sm:$0xff]
    %v36 = vld [vmem:[%s1 + $0x70] sm:$0xff]
    %v37 = vld [vmem:[%s1 + $0x78] sm:$0xff]
    %v38 = vld [vmem:[%s1 + $0x80] sm:$0xff]
    %v39 = vld [vmem:[%s1 + $0x88] sm:$0xff]
    %v40 = vld [vmem:[%s1 + $0x90] sm:$0xff]
    %v41 = vld [vmem:[%s1 + $0x98] sm:$0xff]
    %v42 = vld [vmem:[%s1 + $0xa0] sm:$0xff]
    %v43 = vld [vmem:[%s1 + $0xa8] sm:$0xff]
    %v44 = vld [vmem:[%s1 + $0xb0] sm:$0xff]
    %v45 = vld [vmem:[%s1 + $0xb8] sm:$0xff]
    %v46 = vld [vmem:[%s1 + $0xc0] sm:$0xff]
    %v47 = vld [vmem:[%s1 + $0xc8] sm:$0xff]
    %v48 = vld [vmem:[%s1 + $0xd0] sm:$0xff]
    %v49 = vld [vmem:[%s1 + $0xd8] sm:$0xff]
    %v50 = vld [vmem:[%s1 + $0xe0] sm:$0xff]
    %v51 = vld [vmem:[%s1 + $0xe8] sm:$0xff]
    %v52 = vld [vmem:[%s1 + $0xf0] sm:$0xff]
    %v53 = vld [vmem:[%s1 + $0xf8] sm:$0xff]
    %v54 = vld [vmem:[%s1 + $0x100] sm:$0xff]
    %v55 = vld [vmem:[%s1 + $0x108] sm:$0xff]
    %v56 = vld [vmem:[%s1 + $0x110] sm:$0xff]
    %v57 = vld [vmem:[%s1 + $0x118] sm:$0xff]
    %v58 = vld [vmem:[%s1 + $0x120] sm:$0xff]
    %v59 = vld [vmem:[%s1 + $0x128] sm:$0xff]
    %v60 = vld [vmem:[%s1 + $0x130] sm:$0xff]
    %v61 = vld [vmem:[%s1 + $0x138] sm:$0xff]
    %v62 = vld [vmem:[%s1 + $0x140] sm:$0xff]
    %v63 = vld [vmem:[%s1 + $0x148] sm:$0xff]
    %v64 = vld [vmem:[%s1 + $0x150] sm:$0xff]
    %v65 = vld [vmem:[%s1 + $0x158] sm:$0xff]
    %v66 = vld [vmem:[%s1 + $0x160] sm:$0xff]
    %v67 = vld [vmem:[%s1 + $0x168] sm:$0xff]
    %v68 = vld [vmem:[%s1 + $0x170] sm:$0xff]
    %v69 = vld [vmem:[%s1 + $0x178] sm:$0xff]
    %v70 = vld [vmem:[#allocation2] sm:$0xff]
    %v71 = vld [vmem:[#allocation4] sm:$0xff]
    %72 = vmatprep.subr.mxu0 %v23
    %73 = vmatpush1.msra.mxu0 %v22
    %74 = vmatprep.subr.mxu0 %v26
    %75 = vmatpush1.msra.mxu0 %v25
    %76 = vmatprep.subr.mxu0 %v29
    %77 = vmatpush1.msra.mxu0 %v28
    %78 = vmatprep.subr.mxu0 %v32
    %79 = vmatpush1.msra.mxu0 %v31
    %80 = vmatprep.subr.mxu0 %v35
    %81 = vmatpush1.msra.mxu0 %v34
    %82 = vmatprep.subr.mxu0 %v38
    %83 = vmatpush1.msra.mxu0 %v37
    %84 = vmatprep.subr.mxu0 %v41
    %85 = vmatpush1.msra.mxu0 %v40
    %86 = vmatprep.subr.mxu0 %v44
    %87 = vmatpush1.msra.mxu0 %v43
    %88 = vmatprep.subr.mxu0 %v47
    %89 = vmatpush1.msra.mxu0 %v46
    %90 = vmatprep.subr.mxu0 %v50
    %91 = vmatpush1.msra.mxu0 %v49
    %92 = vmatprep.subr.mxu0 %v53
    %93 = vmatpush1.msra.mxu0 %v52
    %94 = vmatprep.subr.mxu0 %v56
    %95 = vmatpush1.msra.mxu0 %v55
    %96 = vmatprep.subr.mxu0 %v59
    %97 = vmatpush1.msra.mxu0 %v58
    %98 = vmatprep.subr.mxu0 %v62
    %99 = vmatpush1.msra.mxu0 %v61
    %100 = vmatprep.subr.mxu0 %v65
    %101 = vmatpush1.msra.mxu0 %v64
    %102 = vmatprep.subr.mxu0 %v68
    %103 = vmatpush1.msra.mxu0 %v67
    %104 = vmatprep.subr.mxu0 0.0
    %105 = vmatpush1.msra.mxu0 0.0
    %106 = vmatprep.subr.mxu0 0.0
    %107 = vmatpush1.msra.mxu0 0.0
    %108 = vmatprep.subr.mxu0 0.0
    %109 = vmatpush1.msra.mxu0 0.0
    %110 = vmatprep.subr.mxu0 0.0
    %111 = vmatpush1.msra.mxu0 0.0
    %112 = vmatprep.subr.mxu0 0.0
    %113 = vmatpush1.msra.mxu0 0.0
    %114 = vmatprep.subr.mxu0 0.0
    %115 = vmatpush1.msra.mxu0 0.0
    %116 = vmatprep.subr.mxu0 0.0
    %117 = vmatpush1.msra.mxu0 0.0
    %118 = vmatprep.subr.mxu0 0.0
    %119 = vmatpush1.msra.mxu0 0.0
    %120 = vmatprep.subr.mxu0 0.0
    %121 = vmatpush1.msra.mxu0 0.0
    %122 = vmatprep.subr.mxu0 0.0
    %123 = vmatpush1.msra.mxu0 0.0
    %124 = vmatprep.subr.mxu0 0.0
    %125 = vmatpush1.msra.mxu0 0.0
    %126 = vmatprep.subr.mxu0 0.0
    %127 = vmatpush1.msra.mxu0 0.0
    %128 = vmatprep.subr.mxu0 0.0
    %129 = vmatpush1.msra.mxu0 0.0
    %130 = vmatprep.subr.mxu0 0.0
    %131 = vmatpush1.msra.mxu0 0.0
    %132 = vmatprep.subr.mxu0 0.0
    %133 = vmatpush1.msra.mxu0 0.0
    %134 = vmatprep.subr.mxu0 0.0
    %135 = vmatpush1.msra.mxu0 0.0
    %136 = vmatprep.mubr.f32.mxu0 0.0
    %137 = vmatmul.mubr.f32.gmra.mrb[0].mxu0 %v70
    %v138 = vpop.f32.mrb[0].mxu0
    %v139 = vadd.f32 0.0, %v138
    %v140 = vpop.f32.mrb[0].mxu0
    %v141 = vadd.f32 0.0, %v140
    %142 = vdwg.mxu0
    %143 = vmatprep.subr.mxu0 0.0
    %144 = vmatpush1.msra.mxu0 %v24
    %145 = vmatprep.subr.mxu0 0.0
    %146 = vmatpush1.msra.mxu0 %v27
    %147 = vmatprep.subr.mxu0 0.0
    %148 = vmatpush1.msra.mxu0 %v30
    %149 = vmatprep.subr.mxu0 0.0
    %150 = vmatpush1.msra.mxu0 %v33
    %151 = vmatprep.subr.mxu0 0.0
    %152 = vmatpush1.msra.mxu0 %v36
    %153 = vmatprep.subr.mxu0 0.0
    %154 = vmatpush1.msra.mxu0 %v39
    %155 = vmatprep.subr.mxu0 0.0
    %156 = vmatpush1.msra.mxu0 %v42
    %157 = vmatprep.subr.mxu0 0.0
    %158 = vmatpush1.msra.mxu0 %v45
    %159 = vmatprep.subr.mxu0 0.0
    %160 = vmatpush1.msra.mxu0 %v48
    %161 = vmatprep.subr.mxu0 0.0
    %162 = vmatpush1.msra.mxu0 %v51
    %163 = vmatprep.subr.mxu0 0.0
    %164 = vmatpush1.msra.mxu0 %v54
    %165 = vmatprep.subr.mxu0 0.0
    %166 = vmatpush1.msra.mxu0 %v57
    %167 = vmatprep.subr.mxu0 0.0
    %168 = vmatpush1.msra.mxu0 %v60
    %169 = vmatprep.subr.mxu0 0.0
    %170 = vmatpush1.msra.mxu0 %v63
    %171 = vmatprep.subr.mxu0 0.0
    %172 = vmatpush1.msra.mxu0 %v66
    %173 = vmatprep.subr.mxu0 0.0
    %174 = vmatpush1.msra.mxu0 %v69
    %175 = vmatprep.subr.mxu0 0.0
    %176 = vmatpush1.msra.mxu0 0.0
    %177 = vmatprep.subr.mxu0 0.0
    %178 = vmatpush1.msra.mxu0 0.0
    %179 = vmatprep.subr.mxu0 0.0
    %180 = vmatpush1.msra.mxu0 0.0
    %181 = vmatprep.subr.mxu0 0.0
    %182 = vmatpush1.msra.mxu0 0.0
    %183 = vmatprep.subr.mxu0 0.0
    %184 = vmatpush1.msra.mxu0 0.0
    %185 = vmatprep.subr.mxu0 0.0
    %186 = vmatpush1.msra.mxu0 0.0
    %187 = vmatprep.subr.mxu0 0.0
    %188 = vmatpush1.msra.mxu0 0.0
    %189 = vmatprep.subr.mxu0 0.0
    %190 = vmatpush1.msra.mxu0 0.0
    %191 = vmatprep.subr.mxu0 0.0
    %192 = vmatpush1.msra.mxu0 0.0
    %193 = vmatprep.subr.mxu0 0.0
    %194 = vmatpush1.msra.mxu0 0.0
    %195 = vmatprep.subr.mxu0 0.0
    %196 = vmatpush1.msra.mxu0 0.0
    %197 = vmatprep.subr.mxu0 0.0
    %198 = vmatpush1.msra.mxu0 0.0
    %199 = vmatprep.subr.mxu0 0.0
    %200 = vmatpush1.msra.mxu0 0.0
    %201 = vmatprep.subr.mxu0 0.0
    %202 = vmatpush1.msra.mxu0 0.0
    %203 = vmatprep.subr.mxu0 0.0
    %204 = vmatpush1.msra.mxu0 0.0
    %205 = vmatprep.subr.mxu0 0.0
    %206 = vmatpush1.msra.mxu0 0.0
    %207 = vmatprep.mubr.f32.mxu0 0.0
    %208 = vmatmul.mubr.f32.gmra.mrb[0].mxu0 %v70
    %v209 = vpop.f32.mrb[0].mxu0
    %v210 = vadd.f32 0.0, %v209
    %v211 = vpop.f32.mrb[0].mxu0
    %212 = vdwg.mxu0
    %v213 = vld [vmem:[%s0] sm:$0xff]
    %v214 = vld [vmem:[%s0 + $0x8] sm:$0xff]
    %v215 = vld [vmem:[%s0 + $0x10] sm:$0xff]
    %v216 = vld [vmem:[%s0 + $0x18] sm:$0xff]
    %v217 = vld [vmem:[%s0 + $0x20] sm:$0xff]
    %v218 = vadd.f32 %v213, %v139
    %v219 = vmul.f32 %v218, 0.5
    %v220 = vtanh.pop %v219
    %v221 = vadd.f32 %v220, 1.0
    %v222 = vmul.f32 %v221, 0.5
    %v223 = vadd.f32 %v214, %v141
    %v224 = vtanh.pop %v223
    %v225 = vadd.f32 %v215, %v210
    %v226 = vmul.f32 %v225, 0.5
    %v227 = vtanh.pop %v226
    %v228 = vadd.f32 %v227, 1.0
    %v229 = vmul.f32 %v228, 0.5
    %v230 = vmul.f32 %v222, %v216
    %v231 = vsub.f32 1.0, %v230
    %v232 = vmul.f32 %v231, %v71
    %v233 = vmul.f32 %v230, %v224
    %v234 = vadd.f32 %v232, %v233
    %v235 = vmul.f32 %v234, 0.5
    %v236 = vtanh.pop %v235
    %v237 = vadd.f32 %v236, 1.0
    %v238 = vmul.f32 %v237, 0.5
    %v239 = vsub.f32 1.0, %v222
    %v240 = vmul.f32 %v239, %v71
    %v241 = vmul.f32 %v222, %v217
    %v242 = vmul.f32 %v241, %v224
    %v243 = vadd.f32 %v240, %v242
    %v244 = vmul.f32 %v243, 0.5
    %v245 = vtanh.pop %v244
    %v246 = vadd.f32 %v245, 1.0
    %v247 = vmul.f32 %v246, 0.5
    %v248 = vtanh.pop %v238
    %v249 = vadd.f32 %v229, %v248
    %250 = vst [vmem:[%s2] sm:$0xff] %v249
    %251 = vmatprep.subr.mxu0 %v23
    %252 = vmatpush1.msra.mxu0 %v22
    %253 = vmatprep.subr.mxu0 %v26
    %254 = vmatpush1.msra.mxu0 %v25
    %255 = vmatprep.subr.mxu0 %v29
    %256 = vmatpush1.msra.mxu0 %v28
    %257 = vmatprep.subr.mxu0 %v32
    %258 = vmatpush1.msra.mxu0 %v31
    %259 = vmatprep.subr.mxu0 %v35
    %260 = vmatpush1.msra.mxu0 %v34
    %261 = vmatprep.subr.mxu0 %v38
    %262 = vmatpush1.msra.mxu0 %v37
    %263 = vmatprep.subr.mxu0 %v41
    %264 = vmatpush1.msra.mxu0 %v40
    %265 = vmatprep.subr.mxu0 %v44
    %266 = vmatpush1.msra.mxu0 %v43
    %267 = vmatprep.subr.mxu0 %v47
    %268 = vmatpush1.msra.mxu0 %v46
    %269 = vmatprep.subr.mxu0 %v50
    %270 = vmatpush1.msra.mxu0 %v49
    %271 = vmatprep.subr.mxu0 %v53
    %272 = vmatpush1.msra.mxu0 %v52
    %273 = vmatprep.subr.mxu0 %v56
    %274 = vmatpush1.msra.mxu0 %v55
    %275 = vmatprep.subr.mxu0 %v59
    %276 = vmatpush1.msra.mxu0 %v58
    %277 = vmatprep.subr.mxu0 %v62
    %278 = vmatpush1.msra.mxu0 %v61
    %279 = vmatprep.subr.mxu0 %v65
    %280 = vmatpush1.msra.mxu0 %v64
    %281 = vmatprep.subr.mxu0 %v68
    %282 = vmatpush1.msra.mxu0 %v67
    %283 = vmatprep.subr.mxu0 0.0
    %284 = vmatpush1.msra.mxu0 0.0
    %285 = vmatprep.subr.mxu0 0.0
    %286 = vmatpush1.msra.mxu0 0.0
    %287 = vmatprep.subr.mxu0 0.0
    %288 = vmatpush1.msra.mxu0 0.0
    %289 = vmatprep.subr.mxu0 0.0
    %290 = vmatpush1.msra.mxu0 0.0
    %291 = vmatprep.subr.mxu0 0.0
    %292 = vmatpush1.msra.mxu0 0.0
    %293 = vmatprep.subr.mxu0 0.0
    %294 = vmatpush1.msra.mxu0 0.0
    %295 = vmatprep.subr.mxu0 0.0
    %296 = vmatpush1.msra.mxu0 0.0
    %297 = vmatprep.subr.mxu0 0.0
    %298 = vmatpush1.msra.mxu0 0.0
    %299 = vmatprep.subr.mxu0 0.0
    %300 = vmatpush1.msra.mxu0 0.0
    %301 = vmatprep.subr.mxu0 0.0
    %302 = vmatpush1.msra.mxu0 0.0
    %303 = vmatprep.subr.mxu0 0.0
    %304 = vmatpush1.msra.mxu0 0.0
    %305 = vmatprep.subr.mxu0 0.0
    %306 = vmatpush1.msra.mxu0 0.0
    %307 = vmatprep.subr.mxu0 0.0
    %308 = vmatpush1.msra.mxu0 0.0
    %309 = vmatprep.subr.mxu0 0.0
    %310 = vmatpush1.msra.mxu0 0.0
    %311 = vmatprep.subr.mxu0 0.0
    %312 = vmatpush1.msra.mxu0 0.0
    %313 = vmatprep.subr.mxu0 0.0
    %314 = vmatpush1.msra.mxu0 0.0
    %315 = vmatprep.mubr.f32.mxu0 0.0
    %316 = vmatmul.mubr.f32.gmra.mrb[0].mxu0 %v249
    %v317 = vpop.f32.mrb[0].mxu0
    %v318 = vadd.f32 0.0, %v317
    %v319 = vpop.f32.mrb[0].mxu0
    %v320 = vadd.f32 0.0, %v319
    %321 = vdwg.mxu0
    %322 = vmatprep.subr.mxu0 0.0
    %323 = vmatpush1.msra.mxu0 %v24
    %324 = vmatprep.subr.mxu0 0.0
    %325 = vmatpush1.msra.mxu0 %v27
    %326 = vmatprep.subr.mxu0 0.0
    %327 = vmatpush1.msra.mxu0 %v30
    %328 = vmatprep.subr.mxu0 0.0
    %329 = vmatpush1.msra.mxu0 %v33
    %330 = vmatprep.subr.mxu0 0.0
    %331 = vmatpush1.msra.mxu0 %v36
    %332 = vmatprep.subr.mxu0 0.0
    %333 = vmatpush1.msra.mxu0 %v39
    %334 = vmatprep.subr.mxu0 0.0
    %335 = vmatpush1.msra.mxu0 %v42
    %336 = vmatprep.subr.mxu0 0.0
    %337 = vmatpush1.msra.mxu0 %v45
    %338 = vmatprep.subr.mxu0 0.0
    %339 = vmatpush1.msra.mxu0 %v48
    %340 = vmatprep.subr.mxu0 0.0
    %341 = vmatpush1.msra.mxu0 %v51
    %342 = vmatprep.subr.mxu0 0.0
    %343 = vmatpush1.msra.mxu0 %v54
    %344 = vmatprep.subr.mxu0 0.0
    %345 = vmatpush1.msra.mxu0 %v57
    %346 = vmatprep.subr.mxu0 0.0
    %347 = vmatpush1.msra.mxu0 %v60
    %348 = vmatprep.subr.mxu0 0.0
    %349 = vmatpush1.msra.mxu0 %v63
    %350 = vmatprep.subr.mxu0 0.0
    %351 = vmatpush1.msra.mxu0 %v66
    %352 = vmatprep.subr.mxu0 0.0
    %353 = vmatpush1.msra.mxu0 %v69
    %354 = vmatprep.subr.mxu0 0.0
    %355 = vmatpush1.msra.mxu0 0.0
    %356 = vmatprep.subr.mxu0 0.0
    %357 = vmatpush1.msra.mxu0 0.0
    %358 = vmatprep.subr.mxu0 0.0
    %359 = vmatpush1.msra.mxu0 0.0
    %360 = vmatprep.subr.mxu0 0.0
    %361 = vmatpush1.msra.mxu0 0.0
    %362 = vmatprep.subr.mxu0 0.0
    %363 = vmatpush1.msra.mxu0 0.0
    %364 = vmatprep.subr.mxu0 0.0
    %365 = vmatpush1.msra.mxu0 0.0
    %366 = vmatprep.subr.mxu0 0.0
    %367 = vmatpush1.msra.mxu0 0.0
    %368 = vmatprep.subr.mxu0 0.0
    %369 = vmatpush1.msra.mxu0 0.0
    %370 = vmatprep.subr.mxu0 0.0
    %371 = vmatpush1.msra.mxu0 0.0
    %372 = vmatprep.subr.mxu0 0.0
    %373 = vmatpush1.msra.mxu0 0.0
    %374 = vmatprep.subr.mxu0 0.0
    %375 = vmatpush1.msra.mxu0 0.0
    %376 = vmatprep.subr.mxu0 0.0
    %377 = vmatpush1.msra.mxu0 0.0
    %378 = vmatprep.subr.mxu0 0.0
    %379 = vmatpush1.msra.mxu0 0.0
    %380 = vmatprep.subr.mxu0 0.0
    %381 = vmatpush1.msra.mxu0 0.0
    %382 = vmatprep.subr.mxu0 0.0
    %383 = vmatpush1.msra.mxu0 0.0
    %384 = vmatprep.subr.mxu0 0.0
    %385 = vmatpush1.msra.mxu0 0.0
    %386 = vmatprep.mubr.f32.mxu0 0.0
    %387 = vmatmul.mubr.f32.gmra.mrb[0].mxu0 %v249
    %v388 = vpop.f32.mrb[0].mxu0
    %v389 = vadd.f32 0.0, %v388
    %v390 = vpop.f32.mrb[0].mxu0
    %391 = vdwg.mxu0
    %s392 = scalar_lea.vmem %s0, 40
    %v393 = vld [vmem:[%s392] sm:$0xff]
    %v394 = vld [vmem:[%s392 + $0x8] sm:$0xff]
    %v395 = vld [vmem:[%s392 + $0x10] sm:$0xff]
    %v396 = vld [vmem:[%s392 + $0x18] sm:$0xff]
    %v397 = vld [vmem:[%s392 + $0x20] sm:$0xff]
    %v398 = vadd.f32 %v393, %v318
    %v399 = vmul.f32 %v398, 0.5
    %v400 = vtanh.pop %v399
    %v401 = vadd.f32 %v400, 1.0
    %v402 = vmul.f32 %v401, 0.5
    %v403 = vadd.f32 %v394, %v320
    %v404 = vtanh.pop %v403
    %v405 = vadd.f32 %v395, %v389
    %v406 = vmul.f32 %v405, 0.5
    %v407 = vtanh.pop %v406
    %v408 = vadd.f32 %v407, 1.0
    %v409 = vmul.f32 %v408, 0.5
    %v410 = vmul.f32 %v402, %v396
    %v411 = vsub.f32 1.0, %v410
    %v412 = vmul.f32 %v411, %v247
    %v413 = vmul.f32 %v410, %v404
    %v414 = vadd.f32 %v412, %v413
    %v415 = vmul.f32 %v414, 0.5
    %v416 = vtanh.pop %v415
    %v417 = vadd.f32 %v416, 1.0
    %v418 = vmul.f32 %v417, 0.5
    %v419 = vsub.f32 1.0, %v402
    %v420 = vmul.f32 %v419, %v247
    %v421 = vmul.f32 %v402, %v397
    %v422 = vmul.f32 %v421, %v404
    %v423 = vadd.f32 %v420, %v422
    %v424 = vmul.f32 %v423, 0.5
    %v425 = vtanh.pop %v424
    %v426 = vadd.f32 %v425, 1.0
    %v427 = vmul.f32 %v426, 0.5
    %v428 = vtanh.pop %v418
    %v429 = vadd.f32 %v409, %v428
    %s430 = scalar_lea.vmem %s2, 8
    %431 = vst [vmem:[%s430] sm:$0xff] %v429
    %432 = vmatprep.subr.mxu0 %v23
    %433 = vmatpush1.msra.mxu0 %v22
    %434 = vmatprep.subr.mxu0 %v26
    %435 = vmatpush1.msra.mxu0 %v25
    %436 = vmatprep.subr.mxu0 %v29
    %437 = vmatpush1.msra.mxu0 %v28
    %438 = vmatprep.subr.mxu0 %v32
    %439 = vmatpush1.msra.mxu0 %v31
    %440 = vmatprep.subr.mxu0 %v35
    %441 = vmatpush1.msra.mxu0 %v34
    %442 = vmatprep.subr.mxu0 %v38
    %443 = vmatpush1.msra.mxu0 %v37
    %444 = vmatprep.subr.mxu0 %v41
    %445 = vmatpush1.msra.mxu0 %v40
    %446 = vmatprep.subr.mxu0 %v44
    %447 = vmatpush1.msra.mxu0 %v43
    %448 = vmatprep.subr.mxu0 %v47
    %449 = vmatpush1.msra.mxu0 %v46
    %450 = vmatprep.subr.mxu0 %v50
    %451 = vmatpush1.msra.mxu0 %v49
    %452 = vmatprep.subr.mxu0 %v53
    %453 = vmatpush1.msra.mxu0 %v52
    %454 = vmatprep.subr.mxu0 %v56
    %455 = vmatpush1.msra.mxu0 %v55
    %456 = vmatprep.subr.mxu0 %v59
    %457 = vmatpush1.msra.mxu0 %v58
    %458 = vmatprep.subr.mxu0 %v62
    %459 = vmatpush1.msra.mxu0 %v61
    %460 = vmatprep.subr.mxu0 %v65
    %461 = vmatpush1.msra.mxu0 %v64
    %462 = vmatprep.subr.mxu0 %v68
    %463 = vmatpush1.msra.mxu0 %v67
    %464 = vmatprep.subr.mxu0 0.0
    %465 = vmatpush1.msra.mxu0 0.0
    %466 = vmatprep.subr.mxu0 0.0
    %467 = vmatpush1.msra.mxu0 0.0
    %468 = vmatprep.subr.mxu0 0.0
    %469 = vmatpush1.msra.mxu0 0.0
    %470 = vmatprep.subr.mxu0 0.0
    %471 = vmatpush1.msra.mxu0 0.0
    %472 = vmatprep.subr.mxu0 0.0
    %473 = vmatpush1.msra.mxu0 0.0
    %474 = vmatprep.subr.mxu0 0.0
    %475 = vmatpush1.msra.mxu0 0.0
    %476 = vmatprep.subr.mxu0 0.0
    %477 = vmatpush1.msra.mxu0 0.0
    %478 = vmatprep.subr.mxu0 0.0
    %479 = vmatpush1.msra.mxu0 0.0
    %480 = vmatprep.subr.mxu0 0.0
    %481 = vmatpush1.msra.mxu0 0.0
    %482 = vmatprep.subr.mxu0 0.0
    %483 = vmatpush1.msra.mxu0 0.0
    %484 = vmatprep.subr.mxu0 0.0
    %485 = vmatpush1.msra.mxu0 0.0
    %486 = vmatprep.subr.mxu0 0.0
    %487 = vmatpush1.msra.mxu0 0.0
    %488 = vmatprep.subr.mxu0 0.0
    %489 = vmatpush1.msra.mxu0 0.0
    %490 = vmatprep.subr.mxu0 0.0
    %491 = vmatpush1.msra.mxu0 0.0
    %492 = vmatprep.subr.mxu0 0.0
    %493 = vmatpush1.msra.mxu0 0.0
    %494 = vmatprep.subr.mxu0 0.0
    %495 = vmatpush1.msra.mxu0 0.0
    %496 = vmatprep.mubr.f32.mxu0 0.0
    %497 = vmatmul.mubr.f32.gmra.mrb[0].mxu0 %v429
    %v498 = vpop.f32.mrb[0].mxu0
    %v499 = vadd.f32 0.0, %v498
    %v500 = vpop.f32.mrb[0].mxu0
    %v501 = vadd.f32 0.0, %v500
    %502 = vdwg.mxu0
    %503 = vmatprep.subr.mxu0 0.0
    %504 = vmatpush1.msra.mxu0 %v24
    %505 = vmatprep.subr.mxu0 0.0
    %506 = vmatpush1.msra.mxu0 %v27
    %507 = vmatprep.subr.mxu0 0.0
    %508 = vmatpush1.msra.mxu0 %v30
    %509 = vmatprep.subr.mxu0 0.0
    %510 = vmatpush1.msra.mxu0 %v33
    %511 = vmatprep.subr.mxu0 0.0
    %512 = vmatpush1.msra.mxu0 %v36
    %513 = vmatprep.subr.mxu0 0.0
    %514 = vmatpush1.msra.mxu0 %v39
    %515 = vmatprep.subr.mxu0 0.0
    %516 = vmatpush1.msra.mxu0 %v42
    %517 = vmatprep.subr.mxu0 0.0
    %518 = vmatpush1.msra.mxu0 %v45
    %519 = vmatprep.subr.mxu0 0.0
    %520 = vmatpush1.msra.mxu0 %v48
    %521 = vmatprep.subr.mxu0 0.0
    %522 = vmatpush1.msra.mxu0 %v51
    %523 = vmatprep.subr.mxu0 0.0
    %524 = vmatpush1.msra.mxu0 %v54
    %525 = vmatprep.subr.mxu0 0.0
    %526 = vmatpush1.msra.mxu0 %v57
    %527 = vmatprep.subr.mxu0 0.0
    %528 = vmatpush1.msra.mxu0 %v60
    %529 = vmatprep.subr.mxu0 0.0
    %530 = vmatpush1.msra.mxu0 %v63
    %531 = vmatprep.subr.mxu0 0.0
    %532 = vmatpush1.msra.mxu0 %v66
    %533 = vmatprep.subr.mxu0 0.0
    %534 = vmatpush1.msra.mxu0 %v69
    %535 = vmatprep.subr.mxu0 0.0
    %536 = vmatpush1.msra.mxu0 0.0
    %537 = vmatprep.subr.mxu0 0.0
    %538 = vmatpush1.msra.mxu0 0.0
    %539 = vmatprep.subr.mxu0 0.0
    %540 = vmatpush1.msra.mxu0 0.0
    %541 = vmatprep.subr.mxu0 0.0
    %542 = vmatpush1.msra.mxu0 0.0
    %543 = vmatprep.subr.mxu0 0.0
    %544 = vmatpush1.msra.mxu0 0.0
    %545 = vmatprep.subr.mxu0 0.0
    %546 = vmatpush1.msra.mxu0 0.0
    %547 = vmatprep.subr.mxu0 0.0
    %548 = vmatpush1.msra.mxu0 0.0
    %549 = vmatprep.subr.mxu0 0.0
    %550 = vmatpush1.msra.mxu0 0.0
    %551 = vmatprep.subr.mxu0 0.0
    %552 = vmatpush1.msra.mxu0 0.0
    %553 = vmatprep.subr.mxu0 0.0
    %554 = vmatpush1.msra.mxu0 0.0
    %555 = vmatprep.subr.mxu0 0.0
    %556 = vmatpush1.msra.mxu0 0.0
    %557 = vmatprep.subr.mxu0 0.0
    %558 = vmatpush1.msra.mxu0 0.0
    %559 = vmatprep.subr.mxu0 0.0
    %560 = vmatpush1.msra.mxu0 0.0
    %561 = vmatprep.subr.mxu0 0.0
    %562 = vmatpush1.msra.mxu0 0.0
    %563 = vmatprep.subr.mxu0 0.0
    %564 = vmatpush1.msra.mxu0 0.0
    %565 = vmatprep.subr.mxu0 0.0
    %566 = vmatpush1.msra.mxu0 0.0
    %567 = vmatprep.mubr.f32.mxu0 0.0
    %568 = vmatmul.mubr.f32.gmra.mrb[0].mxu0 %v429
    %v569 = vpop.f32.mrb[0].mxu0
    %v570 = vadd.f32 0.0, %v569
    %v571 = vpop.f32.mrb[0].mxu0
    %572 = vdwg.mxu0
    %s573 = scalar_lea.vmem %s0, 80
    %v574 = vld [vmem:[%s573] sm:$0xff]
    %v575 = vld [vmem:[%s573 + $0x8] sm:$0xff]
    %v576 = vld [vmem:[%s573 + $0x10] sm:$0xff]
    %v577 = vld [vmem:[%s573 + $0x18] sm:$0xff]
    %v578 = vld [vmem:[%s573 + $0x20] sm:$0xff]
    %v579 = vadd.f32 %v574, %v499
    %v580 = vmul.f32 %v579, 0.5
    %v581 = vtanh.pop %v580
    %v582 = vadd.f32 %v581, 1.0
    %v583 = vmul.f32 %v582, 0.5
    %v584 = vadd.f32 %v575, %v501
    %v585 = vtanh.pop %v584
    %v586 = vadd.f32 %v576, %v570
    %v587 = vmul.f32 %v586, 0.5
    %v588 = vtanh.pop %v587
    %v589 = vadd.f32 %v588, 1.0
    %v590 = vmul.f32 %v589, 0.5
    %v591 = vmul.f32 %v583, %v577
    %v592 = vsub.f32 1.0, %v591
    %v593 = vmul.f32 %v592, %v427
    %v594 = vmul.f32 %v591, %v585
    %v595 = vadd.f32 %v593, %v594
    %v596 = vmul.f32 %v595, 0.5
    %v597 = vtanh.pop %v596
    %v598 = vadd.f32 %v597, 1.0
    %v599 = vmul.f32 %v598, 0.5
    %v600 = vsub.f32 1.0, %v583
    %v601 = vmul.f32 %v600, %v427
    %v602 = vmul.f32 %v583, %v578
    %v603 = vmul.f32 %v602, %v585
    %v604 = vadd.f32 %v601, %v603
    %v605 = vmul.f32 %v604, 0.5
    %v606 = vtanh.pop %v605
    %v607 = vadd.f32 %v606, 1.0
    %v608 = vmul.f32 %v607, 0.5
    %v609 = vtanh.pop %v599
    %v610 = vadd.f32 %v590, %v609
    %s611 = scalar_lea.vmem %s2, 16
    %612 = vst [vmem:[%s611] sm:$0xff] %v610
    %613 = vmatprep.subr.mxu0 %v23
    %614 = vmatpush1.msra.mxu0 %v22
    %615 = vmatprep.subr.mxu0 %v26
    %616 = vmatpush1.msra.mxu0 %v25
    %617 = vmatprep.subr.mxu0 %v29
    %618 = vmatpush1.msra.mxu0 %v28
    %619 = vmatprep.subr.mxu0 %v32
    %620 = vmatpush1.msra.mxu0 %v31
    %621 = vmatprep.subr.mxu0 %v35
    %622 = vmatpush1.msra.mxu0 %v34
    %623 = vmatprep.subr.mxu0 %v38
    %624 = vmatpush1.msra.mxu0 %v37
    %625 = vmatprep.subr.mxu0 %v41
    %626 = vmatpush1.msra.mxu0 %v40
    %627 = vmatprep.subr.mxu0 %v44
    %628 = vmatpush1.msra.mxu0 %v43
    %629 = vmatprep.subr.mxu0 %v47
    %630 = vmatpush1.msra.mxu0 %v46
    %631 = vmatprep.subr.mxu0 %v50
    %632 = vmatpush1.msra.mxu0 %v49
    %633 = vmatprep.subr.mxu0 %v53
    %634 = vmatpush1.msra.mxu0 %v52
    %635 = vmatprep.subr.mxu0 %v56
    %636 = vmatpush1.msra.mxu0 %v55
    %637 = vmatprep.subr.mxu0 %v59
    %638 = vmatpush1.msra.mxu0 %v58
    %639 = vmatprep.subr.mxu0 %v62
    %640 = vmatpush1.msra.mxu0 %v61
    %641 = vmatprep.subr.mxu0 %v65
    %642 = vmatpush1.msra.mxu0 %v64
    %643 = vmatprep.subr.mxu0 %v68
    %644 = vmatpush1.msra.mxu0 %v67
    %645 = vmatprep.subr.mxu0 0.0
    %646 = vmatpush1.msra.mxu0 0.0
    %647 = vmatprep.subr.mxu0 0.0
    %648 = vmatpush1.msra.mxu0 0.0
    %649 = vmatprep.subr.mxu0 0.0
    %650 = vmatpush1.msra.mxu0 0.0
    %651 = vmatprep.subr.mxu0 0.0
    %652 = vmatpush1.msra.mxu0 0.0
    %653 = vmatprep.subr.mxu0 0.0
    %654 = vmatpush1.msra.mxu0 0.0
    %655 = vmatprep.subr.mxu0 0.0
    %656 = vmatpush1.msra.mxu0 0.0
    %657 = vmatprep.subr.mxu0 0.0
    %658 = vmatpush1.msra.mxu0 0.0
    %659 = vmatprep.subr.mxu0 0.0
    %660 = vmatpush1.msra.mxu0 0.0
    %661 = vmatprep.subr.mxu0 0.0
    %662 = vmatpush1.msra.mxu0 0.0
    %663 = vmatprep.subr.mxu0 0.0
    %664 = vmatpush1.msra.mxu0 0.0
    %665 = vmatprep.subr.mxu0 0.0
    %666 = vmatpush1.msra.mxu0 0.0
    %667 = vmatprep.subr.mxu0 0.0
    %668 = vmatpush1.msra.mxu0 0.0
    %669 = vmatprep.subr.mxu0 0.0
    %670 = vmatpush1.msra.mxu0 0.0
    %671 = vmatprep.subr.mxu0 0.0
    %672 = vmatpush1.msra.mxu0 0.0
    %673 = vmatprep.subr.mxu0 0.0
    %674 = vmatpush1.msra.mxu0 0.0
    %675 = vmatprep.subr.mxu0 0.0
    %676 = vmatpush1.msra.mxu0 0.0
    %677 = vmatprep.mubr.f32.mxu0 0.0
    %678 = vmatmul.mubr.f32.gmra.mrb[0].mxu0 %v610
    %v679 = vpop.f32.mrb[0].mxu0
    %v680 = vadd.f32 0.0, %v679
    %v681 = vpop.f32.mrb[0].mxu0
    %v682 = vadd.f32 0.0, %v681
    %683 = vdwg.mxu0
    %684 = vmatprep.subr.mxu0 0.0
    %685 = vmatpush1.msra.mxu0 %v24
    %686 = vmatprep.subr.mxu0 0.0
    %687 = vmatpush1.msra.mxu0 %v27
    %688 = vmatprep.subr.mxu0 0.0
    %689 = vmatpush1.msra.mxu0 %v30
    %690 = vmatprep.subr.mxu0 0.0
    %691 = vmatpush1.msra.mxu0 %v33
    %692 = vmatprep.subr.mxu0 0.0
    %693 = vmatpush1.msra.mxu0 %v36
    %694 = vmatprep.subr.mxu0 0.0
    %695 = vmatpush1.msra.mxu0 %v39
    %696 = vmatprep.subr.mxu0 0.0
    %697 = vmatpush1.msra.mxu0 %v42
    %698 = vmatprep.subr.mxu0 0.0
    %699 = vmatpush1.msra.mxu0 %v45
    %700 = vmatprep.subr.mxu0 0.0
    %701 = vmatpush1.msra.mxu0 %v48
    %702 = vmatprep.subr.mxu0 0.0
    %703 = vmatpush1.msra.mxu0 %v51
    %704 = vmatprep.subr.mxu0 0.0
    %705 = vmatpush1.msra.mxu0 %v54
    %706 = vmatprep.subr.mxu0 0.0
    %707 = vmatpush1.msra.mxu0 %v57
    %708 = vmatprep.subr.mxu0 0.0
    %709 = vmatpush1.msra.mxu0 %v60
    %710 = vmatprep.subr.mxu0 0.0
    %711 = vmatpush1.msra.mxu0 %v63
    %712 = vmatprep.subr.mxu0 0.0
    %713 = vmatpush1.msra.mxu0 %v66
    %714 = vmatprep.subr.mxu0 0.0
    %715 = vmatpush1.msra.mxu0 %v69
    %716 = vmatprep.subr.mxu0 0.0
    %717 = vmatpush1.msra.mxu0 0.0
    %718 = vmatprep.subr.mxu0 0.0
    %719 = vmatpush1.msra.mxu0 0.0
    %720 = vmatprep.subr.mxu0 0.0
    %721 = vmatpush1.msra.mxu0 0.0
    %722 = vmatprep.subr.mxu0 0.0
    %723 = vmatpush1.msra.mxu0 0.0
    %724 = vmatprep.subr.mxu0 0.0
    %725 = vmatpush1.msra.mxu0 0.0
    %726 = vmatprep.subr.mxu0 0.0
    %727 = vmatpush1.msra.mxu0 0.0
    %728 = vmatprep.subr.mxu0 0.0
    %729 = vmatpush1.msra.mxu0 0.0
    %730 = vmatprep.subr.mxu0 0.0
    %731 = vmatpush1.msra.mxu0 0.0
    %732 = vmatprep.subr.mxu0 0.0
    %733 = vmatpush1.msra.mxu0 0.0
    %734 = vmatprep.subr.mxu0 0.0
    %735 = vmatpush1.msra.mxu0 0.0
    %736 = vmatprep.subr.mxu0 0.0
    %737 = vmatpush1.msra.mxu0 0.0
    %738 = vmatprep.subr.mxu0 0.0
    %739 = vmatpush1.msra.mxu0 0.0
    %740 = vmatprep.subr.mxu0 0.0
    %741 = vmatpush1.msra.mxu0 0.0
    %742 = vmatprep.subr.mxu0 0.0
    %743 = vmatpush1.msra.mxu0 0.0
    %744 = vmatprep.subr.mxu0 0.0
    %745 = vmatpush1.msra.mxu0 0.0
    %746 = vmatprep.subr.mxu0 0.0
    %747 = vmatpush1.msra.mxu0 0.0
    %748 = vmatprep.mubr.f32.mxu0 0.0
    %749 = vmatmul.mubr.f32.gmra.mrb[0].mxu0 %v610
    %v750 = vpop.f32.mrb[0].mxu0
    %v751 = vadd.f32 0.0, %v750
    %v752 = vpop.f32.mrb[0].mxu0
    %753 = vdwg.mxu0
    %s754 = scalar_lea.vmem %s0, 120
    %v755 = vld [vmem:[%s754] sm:$0xff]
    %v756 = vld [vmem:[%s754 + $0x8] sm:$0xff]
    %v757 = vld [vmem:[%s754 + $0x10] sm:$0xff]
    %v758 = vld [vmem:[%s754 + $0x18] sm:$0xff]
    %v759 = vld [vmem:[%s754 + $0x20] sm:$0xff]
    %v760 = vadd.f32 %v755, %v680
    %v761 = vmul.f32 %v760, 0.5
    %v762 = vtanh.pop %v761
    %v763 = vadd.f32 %v762, 1.0
    %v764 = vmul.f32 %v763, 0.5
    %v765 = vadd.f32 %v756, %v682
    %v766 = vtanh.pop %v765
    %v767 = vadd.f32 %v757, %v751
    %v768 = vmul.f32 %v767, 0.5
    %v769 = vtanh.pop %v768
    %v770 = vadd.f32 %v769, 1.0
    %v771 = vmul.f32 %v770, 0.5
    %v772 = vmul.f32 %v764, %v758
    %v773 = vsub.f32 1.0, %v772
    %v774 = vmul.f32 %v773, %v608
    %v775 = vmul.f32 %v772, %v766
    %v776 = vadd.f32 %v774, %v775
    %v777 = vmul.f32 %v776, 0.5
    %v778 = vtanh.pop %v777
    %v779 = vadd.f32 %v778, 1.0
    %v780 = vmul.f32 %v779, 0.5
    %v781 = vsub.f32 1.0, %v764
    %v782 = vmul.f32 %v781, %v608
    %v783 = vmul.f32 %v764, %v759
    %v784 = vmul.f32 %v783, %v766
    %v785 = vadd.f32 %v782, %v784
    %v786 = vmul.f32 %v785, 0.5
    %v787 = vtanh.pop %v786
    %v788 = vadd.f32 %v787, 1.0
    %v789 = vmul.f32 %v788, 0.5
    %v790 = vtanh.pop %v780
    %v791 = vadd.f32 %v771, %v790
    %s792 = scalar_lea.vmem %s2, 24
    %793 = vst [vmem:[%s792] sm:$0xff] %v791
    %794 = vmatprep.subr.mxu0 %v23
    %795 = vmatpush1.msra.mxu0 %v22
    %796 = vmatprep.subr.mxu0 %v26
    %797 = vmatpush1.msra.mxu0 %v25
    %798 = vmatprep.subr.mxu0 %v29
    %799 = vmatpush1.msra.mxu0 %v28
    %800 = vmatprep.subr.mxu0 %v32
    %801 = vmatpush1.msra.mxu0 %v31
    %802 = vmatprep.subr.mxu0 %v35
    %803 = vmatpush1.msra.mxu0 %v34
    %804 = vmatprep.subr.mxu0 %v38
    %805 = vmatpush1.msra.mxu0 %v37
    %806 = vmatprep.subr.mxu0 %v41
    %807 = vmatpush1.msra.mxu0 %v40
    %808 = vmatprep.subr.mxu0 %v44
    %809 = vmatpush1.msra.mxu0 %v43
    %810 = vmatprep.subr.mxu0 %v47
    %811 = vmatpush1.msra.mxu0 %v46
    %812 = vmatprep.subr.mxu0 %v50
    %813 = vmatpush1.msra.mxu0 %v49
    %814 = vmatprep.subr.mxu0 %v53
    %815 = vmatpush1.msra.mxu0 %v52
    %816 = vmatprep.subr.mxu0 %v56
    %817 = vmatpush1.msra.mxu0 %v55
    %818 = vmatprep.subr.mxu0 %v59
    %819 = vmatpush1.msra.mxu0 %v58
    %820 = vmatprep.subr.mxu0 %v62
    %821 = vmatpush1.msra.mxu0 %v61
    %822 = vmatprep.subr.mxu0 %v65
    %823 = vmatpush1.msra.mxu0 %v64
    %824 = vmatprep.subr.mxu0 %v68
    %825 = vmatpush1.msra.mxu0 %v67
    %826 = vmatprep.subr.mxu0 0.0
    %827 = vmatpush1.msra.mxu0 0.0
    %828 = vmatprep.subr.mxu0 0.0
    %829 = vmatpush1.msra.mxu0 0.0
    %830 = vmatprep.subr.mxu0 0.0
    %831 = vmatpush1.msra.mxu0 0.0
    %832 = vmatprep.subr.mxu0 0.0
    %833 = vmatpush1.msra.mxu0 0.0
    %834 = vmatprep.subr.mxu0 0.0
    %835 = vmatpush1.msra.mxu0 0.0
    %836 = vmatprep.subr.mxu0 0.0
    %837 = vmatpush1.msra.mxu0 0.0
    %838 = vmatprep.subr.mxu0 0.0
    %839 = vmatpush1.msra.mxu0 0.0
    %840 = vmatprep.subr.mxu0 0.0
    %841 = vmatpush1.msra.mxu0 0.0
    %842 = vmatprep.subr.mxu0 0.0
    %843 = vmatpush1.msra.mxu0 0.0
    %844 = vmatprep.subr.mxu0 0.0
    %845 = vmatpush1.msra.mxu0 0.0
    %846 = vmatprep.subr.mxu0 0.0
    %847 = vmatpush1.msra.mxu0 0.0
    %848 = vmatprep.subr.mxu0 0.0
    %849 = vmatpush1.msra.mxu0 0.0
    %850 = vmatprep.subr.mxu0 0.0
    %851 = vmatpush1.msra.mxu0 0.0
    %852 = vmatprep.subr.mxu0 0.0
    %853 = vmatpush1.msra.mxu0 0.0
    %854 = vmatprep.subr.mxu0 0.0
    %855 = vmatpush1.msra.mxu0 0.0
    %856 = vmatprep.subr.mxu0 0.0
    %857 = vmatpush1.msra.mxu0 0.0
    %858 = vmatprep.mubr.f32.mxu0 0.0
    %859 = vmatmul.mubr.f32.gmra.mrb[0].mxu0 %v791
    %v860 = vpop.f32.mrb[0].mxu0
    %v861 = vadd.f32 0.0, %v860
    %v862 = vpop.f32.mrb[0].mxu0
    %v863 = vadd.f32 0.0, %v862
    %864 = vdwg.mxu0
    %865 = vmatprep.subr.mxu0 0.0
    %866 = vmatpush1.msra.mxu0 %v24
    %867 = vmatprep.subr.mxu0 0.0
    %868 = vmatpush1.msra.mxu0 %v27
    %869 = vmatprep.subr.mxu0 0.0
    %870 = vmatpush1.msra.mxu0 %v30
    %871 = vmatprep.subr.mxu0 0.0
    %872 = vmatpush1.msra.mxu0 %v33
    %873 = vmatprep.subr.mxu0 0.0
    %874 = vmatpush1.msra.mxu0 %v36
    %875 = vmatprep.subr.mxu0 0.0
    %876 = vmatpush1.msra.mxu0 %v39
    %877 = vmatprep.subr.mxu0 0.0
    %878 = vmatpush1.msra.mxu0 %v42
    %879 = vmatprep.subr.mxu0 0.0
    %880 = vmatpush1.msra.mxu0 %v45
    %881 = vmatprep.subr.mxu0 0.0
    %882 = vmatpush1.msra.mxu0 %v48
    %883 = vmatprep.subr.mxu0 0.0
    %884 = vmatpush1.msra.mxu0 %v51
    %885 = vmatprep.subr.mxu0 0.0
    %886 = vmatpush1.msra.mxu0 %v54
    %887 = vmatprep.subr.mxu0 0.0
    %888 = vmatpush1.msra.mxu0 %v57
    %889 = vmatprep.subr.mxu0 0.0
    %890 = vmatpush1.msra.mxu0 %v60
    %891 = vmatprep.subr.mxu0 0.0
    %892 = vmatpush1.msra.mxu0 %v63
    %893 = vmatprep.subr.mxu0 0.0
    %894 = vmatpush1.msra.mxu0 %v66
    %895 = vmatprep.subr.mxu0 0.0
    %896 = vmatpush1.msra.mxu0 %v69
    %897 = vmatprep.subr.mxu0 0.0
    %898 = vmatpush1.msra.mxu0 0.0
    %899 = vmatprep.subr.mxu0 0.0
    %900 = vmatpush1.msra.mxu0 0.0
    %901 = vmatprep.subr.mxu0 0.0
    %902 = vmatpush1.msra.mxu0 0.0
    %903 = vmatprep.subr.mxu0 0.0
    %904 = vmatpush1.msra.mxu0 0.0
    %905 = vmatprep.subr.mxu0 0.0
    %906 = vmatpush1.msra.mxu0 0.0
    %907 = vmatprep.subr.mxu0 0.0
    %908 = vmatpush1.msra.mxu0 0.0
    %909 = vmatprep.subr.mxu0 0.0
    %910 = vmatpush1.msra.mxu0 0.0
    %911 = vmatprep.subr.mxu0 0.0
    %912 = vmatpush1.msra.mxu0 0.0
    %913 = vmatprep.subr.mxu0 0.0
    %914 = vmatpush1.msra.mxu0 0.0
    %915 = vmatprep.subr.mxu0 0.0
    %916 = vmatpush1.msra.mxu0 0.0
    %917 = vmatprep.subr.mxu0 0.0
    %918 = vmatpush1.msra.mxu0 0.0
    %919 = vmatprep.subr.mxu0 0.0
    %920 = vmatpush1.msra.mxu0 0.0
    %921 = vmatprep.subr.mxu0 0.0
    %922 = vmatpush1.msra.mxu0 0.0
    %923 = vmatprep.subr.mxu0 0.0
    %924 = vmatpush1.msra.mxu0 0.0
    %925 = vmatprep.subr.mxu0 0.0
    %926 = vmatpush1.msra.mxu0 0.0
    %927 = vmatprep.subr.mxu0 0.0
    %928 = vmatpush1.msra.mxu0 0.0
    %929 = vmatprep.mubr.f32.mxu0 0.0
    %930 = vmatmul.mubr.f32.gmra.mrb[0].mxu0 %v791
    %v931 = vpop.f32.mrb[0].mxu0
    %v932 = vadd.f32 0.0, %v931
    %v933 = vpop.f32.mrb[0].mxu0
    %934 = vdwg.mxu0
    %s935 = scalar_lea.vmem %s0, 160
    %v936 = vld [vmem:[%s935] sm:$0xff]
    %v937 = vld [vmem:[%s935 + $0x8] sm:$0xff]
    %v938 = vld [vmem:[%s935 + $0x10] sm:$0xff]
    %v939 = vld [vmem:[%s935 + $0x18] sm:$0xff]
    %v940 = vld [vmem:[%s935 + $0x20] sm:$0xff]
    %v941 = vadd.f32 %v936, %v861
    %v942 = vmul.f32 %v941, 0.5
    %v943 = vtanh.pop %v942
    %v944 = vadd.f32 %v943, 1.0
    %v945 = vmul.f32 %v944, 0.5
    %v946 = vadd.f32 %v937, %v863
    %v947 = vtanh.pop %v946
    %v948 = vadd.f32 %v938, %v932
    %v949 = vmul.f32 %v948, 0.5
    %v950 = vtanh.pop %v949
    %v951 = vadd.f32 %v950, 1.0
    %v952 = vmul.f32 %v951, 0.5
    %v953 = vmul.f32 %v945, %v939
    %v954 = vsub.f32 1.0, %v953
    %v955 = vmul.f32 %v954, %v789
    %v956 = vmul.f32 %v953, %v947
    %v957 = vadd.f32 %v955, %v956
    %v958 = vmul.f32 %v957, 0.5
    %v959 = vtanh.pop %v958
    %v960 = vadd.f32 %v959, 1.0
    %v961 = vmul.f32 %v960, 0.5
    %v962 = vsub.f32 1.0, %v945
    %v963 = vmul.f32 %v962, %v789
    %v964 = vmul.f32 %v945, %v940
    %v965 = vmul.f32 %v964, %v947
    %v966 = vadd.f32 %v963, %v965
    %v967 = vmul.f32 %v966, 0.5
    %v968 = vtanh.pop %v967
    %v969 = vadd.f32 %v968, 1.0
    %v970 = vmul.f32 %v969, 0.5
    %v971 = vtanh.pop %v961
    %v972 = vadd.f32 %v952, %v971
    %s973 = scalar_lea.vmem %s2, 32
    %974 = vst [vmem:[%s973] sm:$0xff] %v972
    %975 = vmatprep.subr.mxu0 %v23
    %976 = vmatpush1.msra.mxu0 %v22
    %977 = vmatprep.subr.mxu0 %v26
    %978 = vmatpush1.msra.mxu0 %v25
    %979 = vmatprep.subr.mxu0 %v29
    %980 = vmatpush1.msra.mxu0 %v28
    %981 = vmatprep.subr.mxu0 %v32
    %982 = vmatpush1.msra.mxu0 %v31
    %983 = vmatprep.subr.mxu0 %v35
    %984 = vmatpush1.msra.mxu0 %v34
    %985 = vmatprep.subr.mxu0 %v38
    %986 = vmatpush1.msra.mxu0 %v37
    %987 = vmatprep.subr.mxu0 %v41
    %988 = vmatpush1.msra.mxu0 %v40
    %989 = vmatprep.subr.mxu0 %v44
    %990 = vmatpush1.msra.mxu0 %v43
    %991 = vmatprep.subr.mxu0 %v47
    %992 = vmatpush1.msra.mxu0 %v46
    %993 = vmatprep.subr.mxu0 %v50
    %994 = vmatpush1.msra.mxu0 %v49
    %995 = vmatprep.subr.mxu0 %v53
    %996 = vmatpush1.msra.mxu0 %v52
    %997 = vmatprep.subr.mxu0 %v56
    %998 = vmatpush1.msra.mxu0 %v55
    %999 = vmatprep.subr.mxu0 %v59
    %1000 = vmatpush1.msra.mxu0 %v58
    %1001 = vmatprep.subr.mxu0 %v62
    %1002 = vmatpush1.msra.mxu0 %v61
    %1003 = vmatprep.subr.mxu0 %v65
    %1004 = vmatpush1.msra.mxu0 %v64
    %1005 = vmatprep.subr.mxu0 %v68
    %1006 = vmatpush1.msra.mxu0 %v67
    %1007 = vmatprep.subr.mxu0 0.0
    %1008 = vmatpush1.msra.mxu0 0.0
    %1009 = vmatprep.subr.mxu0 0.0
    %1010 = vmatpush1.msra.mxu0 0.0
    %1011 = vmatprep.subr.mxu0 0.0
    %1012 = vmatpush1.msra.mxu0 0.0
    %1013 = vmatprep.subr.mxu0 0.0
    %1014 = vmatpush1.msra.mxu0 0.0
    %1015 = vmatprep.subr.mxu0 0.0
    %1016 = vmatpush1.msra.mxu0 0.0
    %1017 = vmatprep.subr.mxu0 0.0
    %1018 = vmatpush1.msra.mxu0 0.0
    %1019 = vmatprep.subr.mxu0 0.0
    %1020 = vmatpush1.msra.mxu0 0.0
    %1021 = vmatprep.subr.mxu0 0.0
    %1022 = vmatpush1.msra.mxu0 0.0
    %1023 = vmatprep.subr.mxu0 0.0
    %1024 = vmatpush1.msra.mxu0 0.0
    %1025 = vmatprep.subr.mxu0 0.0
    %1026 = vmatpush1.msra.mxu0 0.0
    %1027 = vmatprep.subr.mxu0 0.0
    %1028 = vmatpush1.msra.mxu0 0.0
    %1029 = vmatprep.subr.mxu0 0.0
    %1030 = vmatpush1.msra.mxu0 0.0
    %1031 = vmatprep.subr.mxu0 0.0
    %1032 = vmatpush1.msra.mxu0 0.0
    %1033 = vmatprep.subr.mxu0 0.0
    %1034 = vmatpush1.msra.mxu0 0.0
    %1035 = vmatprep.subr.mxu0 0.0
    %1036 = vmatpush1.msra.mxu0 0.0
    %1037 = vmatprep.subr.mxu0 0.0
    %1038 = vmatpush1.msra.mxu0 0.0
    %1039 = vmatprep.mubr.f32.mxu0 0.0
    %1040 = vmatmul.mubr.f32.gmra.mrb[0].mxu0 %v972
    %v1041 = vpop.f32.mrb[0].mxu0
    %v1042 = vadd.f32 0.0, %v1041
    %v1043 = vpop.f32.mrb[0].mxu0
    %v1044 = vadd.f32 0.0, %v1043
    %1045 = vdwg.mxu0
    %1046 = vmatprep.subr.mxu0 0.0
    %1047 = vmatpush1.msra.mxu0 %v24
    %1048 = vmatprep.subr.mxu0 0.0
    %1049 = vmatpush1.msra.mxu0 %v27
    %1050 = vmatprep.subr.mxu0 0.0
    %1051 = vmatpush1.msra.mxu0 %v30
    %1052 = vmatprep.subr.mxu0 0.0
    %1053 = vmatpush1.msra.mxu0 %v33
    %1054 = vmatprep.subr.mxu0 0.0
    %1055 = vmatpush1.msra.mxu0 %v36
    %1056 = vmatprep.subr.mxu0 0.0
    %1057 = vmatpush1.msra.mxu0 %v39
    %1058 = vmatprep.subr.mxu0 0.0
    %1059 = vmatpush1.msra.mxu0 %v42
    %1060 = vmatprep.subr.mxu0 0.0
    %1061 = vmatpush1.msra.mxu0 %v45
    %1062 = vmatprep.subr.mxu0 0.0
    %1063 = vmatpush1.msra.mxu0 %v48
    %1064 = vmatprep.subr.mxu0 0.0
    %1065 = vmatpush1.msra.mxu0 %v51
    %1066 = vmatprep.subr.mxu0 0.0
    %1067 = vmatpush1.msra.mxu0 %v54
    %1068 = vmatprep.subr.mxu0 0.0
    %1069 = vmatpush1.msra.mxu0 %v57
    %1070 = vmatprep.subr.mxu0 0.0
    %1071 = vmatpush1.msra.mxu0 %v60
    %1072 = vmatprep.subr.mxu0 0.0
    %1073 = vmatpush1.msra.mxu0 %v63
    %1074 = vmatprep.subr.mxu0 0.0
    %1075 = vmatpush1.msra.mxu0 %v66
    %1076 = vmatprep.subr.mxu0 0.0
    %1077 = vmatpush1.msra.mxu0 %v69
    %1078 = vmatprep.subr.mxu0 0.0
    %1079 = vmatpush1.msra.mxu0 0.0
    %1080 = vmatprep.subr.mxu0 0.0
    %1081 = vmatpush1.msra.mxu0 0.0
    %1082 = vmatprep.subr.mxu0 0.0
    %1083 = vmatpush1.msra.mxu0 0.0
    %1084 = vmatprep.subr.mxu0 0.0
    %1085 = vmatpush1.msra.mxu0 0.0
    %1086 = vmatprep.subr.mxu0 0.0
    %1087 = vmatpush1.msra.mxu0 0.0
    %1088 = vmatprep.subr.mxu0 0.0
    %1089 = vmatpush1.msra.mxu0 0.0
    %1090 = vmatprep.subr.mxu0 0.0
    %1091 = vmatpush1.msra.mxu0 0.0
    %1092 = vmatprep.subr.mxu0 0.0
    %1093 = vmatpush1.msra.mxu0 0.0
    %1094 = vmatprep.subr.mxu0 0.0
    %1095 = vmatpush1.msra.mxu0 0.0
    %1096 = vmatprep.subr.mxu0 0.0
    %1097 = vmatpush1.msra.mxu0 0.0
    %1098 = vmatprep.subr.mxu0 0.0
    %1099 = vmatpush1.msra.mxu0 0.0
    %1100 = vmatprep.subr.mxu0 0.0
    %1101 = vmatpush1.msra.mxu0 0.0
    %1102 = vmatprep.subr.mxu0 0.0
    %1103 = vmatpush1.msra.mxu0 0.0
    %1104 = vmatprep.subr.mxu0 0.0
    %1105 = vmatpush1.msra.mxu0 0.0
    %1106 = vmatprep.subr.mxu0 0.0
    %1107 = vmatpush1.msra.mxu0 0.0
    %1108 = vmatprep.subr.mxu0 0.0
    %1109 = vmatpush1.msra.mxu0 0.0
    %1110 = vmatprep.mubr.f32.mxu0 0.0
    %1111 = vmatmul.mubr.f32.gmra.mrb[0].mxu0 %v972
    %v1112 = vpop.f32.mrb[0].mxu0
    %v1113 = vadd.f32 0.0, %v1112
    %v1114 = vpop.f32.mrb[0].mxu0
    %1115 = vdwg.mxu0
    %s1116 = scalar_lea.vmem %s0, 200
    %v1117 = vld [vmem:[%s1116] sm:$0xff]
    %v1118 = vld [vmem:[%s1116 + $0x8] sm:$0xff]
    %v1119 = vld [vmem:[%s1116 + $0x10] sm:$0xff]
    %v1120 = vld [vmem:[%s1116 + $0x18] sm:$0xff]
    %v1121 = vld [vmem:[%s1116 + $0x20] sm:$0xff]
    %v1122 = vadd.f32 %v1117, %v1042
    %v1123 = vmul.f32 %v1122, 0.5
    %v1124 = vtanh.pop %v1123
    %v1125 = vadd.f32 %v1124, 1.0
    %v1126 = vmul.f32 %v1125, 0.5
    %v1127 = vadd.f32 %v1118, %v1044
    %v1128 = vtanh.pop %v1127
    %v1129 = vadd.f32 %v1119, %v1113
    %v1130 = vmul.f32 %v1129, 0.5
    %v1131 = vtanh.pop %v1130
    %v1132 = vadd.f32 %v1131, 1.0
    %v1133 = vmul.f32 %v1132, 0.5
    %v1134 = vmul.f32 %v1126, %v1120
    %v1135 = vsub.f32 1.0, %v1134
    %v1136 = vmul.f32 %v1135, %v970
    %v1137 = vmul.f32 %v1134, %v1128
    %v1138 = vadd.f32 %v1136, %v1137
    %v1139 = vmul.f32 %v1138, 0.5
    %v1140 = vtanh.pop %v1139
    %v1141 = vadd.f32 %v1140, 1.0
    %v1142 = vmul.f32 %v1141, 0.5
    %v1143 = vsub.f32 1.0, %v1126
    %v1144 = vmul.f32 %v1143, %v970
    %v1145 = vmul.f32 %v1126, %v1121
    %v1146 = vmul.f32 %v1145, %v1128
    %v1147 = vadd.f32 %v1144, %v1146
    %v1148 = vmul.f32 %v1147, 0.5
    %v1149 = vtanh.pop %v1148
    %v1150 = vadd.f32 %v1149, 1.0
    %v1151 = vmul.f32 %v1150, 0.5
    %v1152 = vtanh.pop %v1142
    %v1153 = vadd.f32 %v1133, %v1152
    %s1154 = scalar_lea.vmem %s2, 40
    %1155 = vst [vmem:[%s1154] sm:$0xff] %v1153
    %1156 = vmatprep.subr.mxu0 %v23
    %1157 = vmatpush1.msra.mxu0 %v22
    %1158 = vmatprep.subr.mxu0 %v26
    %1159 = vmatpush1.msra.mxu0 %v25
    %1160 = vmatprep.subr.mxu0 %v29
    %1161 = vmatpush1.msra.mxu0 %v28
    %1162 = vmatprep.subr.mxu0 %v32
    %1163 = vmatpush1.msra.mxu0 %v31
    %1164 = vmatprep.subr.mxu0 %v35
    %1165 = vmatpush1.msra.mxu0 %v34
    %1166 = vmatprep.subr.mxu0 %v38
    %1167 = vmatpush1.msra.mxu0 %v37
    %1168 = vmatprep.subr.mxu0 %v41
    %1169 = vmatpush1.msra.mxu0 %v40
    %1170 = vmatprep.subr.mxu0 %v44
    %1171 = vmatpush1.msra.mxu0 %v43
    %1172 = vmatprep.subr.mxu0 %v47
    %1173 = vmatpush1.msra.mxu0 %v46
    %1174 = vmatprep.subr.mxu0 %v50
    %1175 = vmatpush1.msra.mxu0 %v49
    %1176 = vmatprep.subr.mxu0 %v53
    %1177 = vmatpush1.msra.mxu0 %v52
    %1178 = vmatprep.subr.mxu0 %v56
    %1179 = vmatpush1.msra.mxu0 %v55
    %1180 = vmatprep.subr.mxu0 %v59
    %1181 = vmatpush1.msra.mxu0 %v58
    %1182 = vmatprep.subr.mxu0 %v62
    %1183 = vmatpush1.msra.mxu0 %v61
    %1184 = vmatprep.subr.mxu0 %v65
    %1185 = vmatpush1.msra.mxu0 %v64
    %1186 = vmatprep.subr.mxu0 %v68
    %1187 = vmatpush1.msra.mxu0 %v67
    %1188 = vmatprep.subr.mxu0 0.0
    %1189 = vmatpush1.msra.mxu0 0.0
    %1190 = vmatprep.subr.mxu0 0.0
    %1191 = vmatpush1.msra.mxu0 0.0
    %1192 = vmatprep.subr.mxu0 0.0
    %1193 = vmatpush1.msra.mxu0 0.0
    %1194 = vmatprep.subr.mxu0 0.0
    %1195 = vmatpush1.msra.mxu0 0.0
    %1196 = vmatprep.subr.mxu0 0.0
    %1197 = vmatpush1.msra.mxu0 0.0
    %1198 = vmatprep.subr.mxu0 0.0
    %1199 = vmatpush1.msra.mxu0 0.0
    %1200 = vmatprep.subr.mxu0 0.0
    %1201 = vmatpush1.msra.mxu0 0.0
    %1202 = vmatprep.subr.mxu0 0.0
    %1203 = vmatpush1.msra.mxu0 0.0
    %1204 = vmatprep.subr.mxu0 0.0
    %1205 = vmatpush1.msra.mxu0 0.0
    %1206 = vmatprep.subr.mxu0 0.0
    %1207 = vmatpush1.msra.mxu0 0.0
    %1208 = vmatprep.subr.mxu0 0.0
    %1209 = vmatpush1.msra.mxu0 0.0
    %1210 = vmatprep.subr.mxu0 0.0
    %1211 = vmatpush1.msra.mxu0 0.0
    %1212 = vmatprep.subr.mxu0 0.0
    %1213 = vmatpush1.msra.mxu0 0.0
    %1214 = vmatprep.subr.mxu0 0.0
    %1215 = vmatpush1.msra.mxu0 0.0
    %1216 = vmatprep.subr.mxu0 0.0
    %1217 = vmatpush1.msra.mxu0 0.0
    %1218 = vmatprep.subr.mxu0 0.0
    %1219 = vmatpush1.msra.mxu0 0.0
    %1220 = vmatprep.mubr.f32.mxu0 0.0
    %1221 = vmatmul.mubr.f32.gmra.mrb[0].mxu0 %v1153
    %v1222 = vpop.f32.mrb[0].mxu0
    %v1223 = vadd.f32 0.0, %v1222
    %v1224 = vpop.f32.mrb[0].mxu0
    %v1225 = vadd.f32 0.0, %v1224
    %1226 = vdwg.mxu0
    %1227 = vmatprep.subr.mxu0 0.0
    %1228 = vmatpush1.msra.mxu0 %v24
    %1229 = vmatprep.subr.mxu0 0.0
    %1230 = vmatpush1.msra.mxu0 %v27
    %1231 = vmatprep.subr.mxu0 0.0
    %1232 = vmatpush1.msra.mxu0 %v30
    %1233 = vmatprep.subr.mxu0 0.0
    %1234 = vmatpush1.msra.mxu0 %v33
    %1235 = vmatprep.subr.mxu0 0.0
    %1236 = vmatpush1.msra.mxu0 %v36
    %1237 = vmatprep.subr.mxu0 0.0
    %1238 = vmatpush1.msra.mxu0 %v39
    %1239 = vmatprep.subr.mxu0 0.0
    %1240 = vmatpush1.msra.mxu0 %v42
    %1241 = vmatprep.subr.mxu0 0.0
    %1242 = vmatpush1.msra.mxu0 %v45
    %1243 = vmatprep.subr.mxu0 0.0
    %1244 = vmatpush1.msra.mxu0 %v48
    %1245 = vmatprep.subr.mxu0 0.0
    %1246 = vmatpush1.msra.mxu0 %v51
    %1247 = vmatprep.subr.mxu0 0.0
    %1248 = vmatpush1.msra.mxu0 %v54
    %1249 = vmatprep.subr.mxu0 0.0
    %1250 = vmatpush1.msra.mxu0 %v57
    %1251 = vmatprep.subr.mxu0 0.0
    %1252 = vmatpush1.msra.mxu0 %v60
    %1253 = vmatprep.subr.mxu0 0.0
    %1254 = vmatpush1.msra.mxu0 %v63
    %1255 = vmatprep.subr.mxu0 0.0
    %1256 = vmatpush1.msra.mxu0 %v66
    %1257 = vmatprep.subr.mxu0 0.0
    %1258 = vmatpush1.msra.mxu0 %v69
    %1259 = vmatprep.subr.mxu0 0.0
    %1260 = vmatpush1.msra.mxu0 0.0
    %1261 = vmatprep.subr.mxu0 0.0
    %1262 = vmatpush1.msra.mxu0 0.0
    %1263 = vmatprep.subr.mxu0 0.0
    %1264 = vmatpush1.msra.mxu0 0.0
    %1265 = vmatprep.subr.mxu0 0.0
    %1266 = vmatpush1.msra.mxu0 0.0
    %1267 = vmatprep.subr.mxu0 0.0
    %1268 = vmatpush1.msra.mxu0 0.0
    %1269 = vmatprep.subr.mxu0 0.0
    %1270 = vmatpush1.msra.mxu0 0.0
    %1271 = vmatprep.subr.mxu0 0.0
    %1272 = vmatpush1.msra.mxu0 0.0
    %1273 = vmatprep.subr.mxu0 0.0
    %1274 = vmatpush1.msra.mxu0 0.0
    %1275 = vmatprep.subr.mxu0 0.0
    %1276 = vmatpush1.msra.mxu0 0.0
    %1277 = vmatprep.subr.mxu0 0.0
    %1278 = vmatpush1.msra.mxu0 0.0
    %1279 = vmatprep.subr.mxu0 0.0
    %1280 = vmatpush1.msra.mxu0 0.0
    %1281 = vmatprep.subr.mxu0 0.0
    %1282 = vmatpush1.msra.mxu0 0.0
    %1283 = vmatprep.subr.mxu0 0.0
    %1284 = vmatpush1.msra.mxu0 0.0
    %1285 = vmatprep.subr.mxu0 0.0
    %1286 = vmatpush1.msra.mxu0 0.0
    %1287 = vmatprep.subr.mxu0 0.0
    %1288 = vmatpush1.msra.mxu0 0.0
    %1289 = vmatprep.subr.mxu0 0.0
    %1290 = vmatpush1.msra.mxu0 0.0
    %1291 = vmatprep.mubr.f32.mxu0 0.0
    %1292 = vmatmul.mubr.f32.gmra.mrb[0].mxu0 %v1153
    %v1293 = vpop.f32.mrb[0].mxu0
    %v1294 = vadd.f32 0.0, %v1293
    %v1295 = vpop.f32.mrb[0].mxu0
    %1296 = vdwg.mxu0
    %s1297 = scalar_lea.vmem %s0, 240
    %v1298 = vld [vmem:[%s1297] sm:$0xff]
    %v1299 = vld [vmem:[%s1297 + $0x8] sm:$0xff]
    %v1300 = vld [vmem:[%s1297 + $0x10] sm:$0xff]
    %v1301 = vld [vmem:[%s1297 + $0x18] sm:$0xff]
    %v1302 = vld [vmem:[%s1297 + $0x20] sm:$0xff]
    %v1303 = vadd.f32 %v1298, %v1223
    %v1304 = vmul.f32 %v1303, 0.5
    %v1305 = vtanh.pop %v1304
    %v1306 = vadd.f32 %v1305, 1.0
    %v1307 = vmul.f32 %v1306, 0.5
    %v1308 = vadd.f32 %v1299, %v1225
    %v1309 = vtanh.pop %v1308
    %v1310 = vadd.f32 %v1300, %v1294
    %v1311 = vmul.f32 %v1310, 0.5
    %v1312 = vtanh.pop %v1311
    %v1313 = vadd.f32 %v1312, 1.0
    %v1314 = vmul.f32 %v1313, 0.5
    %v1315 = vmul.f32 %v1307, %v1301
    %v1316 = vsub.f32 1.0, %v1315
    %v1317 = vmul.f32 %v1316, %v1151
    %v1318 = vmul.f32 %v1315, %v1309
    %v1319 = vadd.f32 %v1317, %v1318
    %v1320 = vmul.f32 %v1319, 0.5
    %v1321 = vtanh.pop %v1320
    %v1322 = vadd.f32 %v1321, 1.0
    %v1323 = vmul.f32 %v1322, 0.5
    %v1324 = vsub.f32 1.0, %v1307
    %v1325 = vmul.f32 %v1324, %v1151
    %v1326 = vmul.f32 %v1307, %v1302
    %v1327 = vmul.f32 %v1326, %v1309
    %v1328 = vadd.f32 %v1325, %v1327
    %v1329 = vmul.f32 %v1328, 0.5
    %v1330 = vtanh.pop %v1329
    %v1331 = vadd.f32 %v1330, 1.0
    %v1332 = vmul.f32 %v1331, 0.5
    %v1333 = vtanh.pop %v1323
    %v1334 = vadd.f32 %v1314, %v1333
    %s1335 = scalar_lea.vmem %s2, 48
    %1336 = vst [vmem:[%s1335] sm:$0xff] %v1334
    %1337 = vmatprep.subr.mxu0 %v23
    %1338 = vmatpush1.msra.mxu0 %v22
    %1339 = vmatprep.subr.mxu0 %v26
    %1340 = vmatpush1.msra.mxu0 %v25
    %1341 = vmatprep.subr.mxu0 %v29
    %1342 = vmatpush1.msra.mxu0 %v28
    %1343 = vmatprep.subr.mxu0 %v32
    %1344 = vmatpush1.msra.mxu0 %v31
    %1345 = vmatprep.subr.mxu0 %v35
    %1346 = vmatpush1.msra.mxu0 %v34
    %1347 = vmatprep.subr.mxu0 %v38
    %1348 = vmatpush1.msra.mxu0 %v37
    %1349 = vmatprep.subr.mxu0 %v41
    %1350 = vmatpush1.msra.mxu0 %v40
    %1351 = vmatprep.subr.mxu0 %v44
    %1352 = vmatpush1.msra.mxu0 %v43
    %1353 = vmatprep.subr.mxu0 %v47
    %1354 = vmatpush1.msra.mxu0 %v46
    %1355 = vmatprep.subr.mxu0 %v50
    %1356 = vmatpush1.msra.mxu0 %v49
    %1357 = vmatprep.subr.mxu0 %v53
    %1358 = vmatpush1.msra.mxu0 %v52
    %1359 = vmatprep.subr.mxu0 %v56
    %1360 = vmatpush1.msra.mxu0 %v55
    %1361 = vmatprep.subr.mxu0 %v59
    %1362 = vmatpush1.msra.mxu0 %v58
    %1363 = vmatprep.subr.mxu0 %v62
    %1364 = vmatpush1.msra.mxu0 %v61
    %1365 = vmatprep.subr.mxu0 %v65
    %1366 = vmatpush1.msra.mxu0 %v64
    %1367 = vmatprep.subr.mxu0 %v68
    %1368 = vmatpush1.msra.mxu0 %v67
    %1369 = vmatprep.subr.mxu0 0.0
    %1370 = vmatpush1.msra.mxu0 0.0
    %1371 = vmatprep.subr.mxu0 0.0
    %1372 = vmatpush1.msra.mxu0 0.0
    %1373 = vmatprep.subr.mxu0 0.0
    %1374 = vmatpush1.msra.mxu0 0.0
    %1375 = vmatprep.subr.mxu0 0.0
    %1376 = vmatpush1.msra.mxu0 0.0
    %1377 = vmatprep.subr.mxu0 0.0
    %1378 = vmatpush1.msra.mxu0 0.0
    %1379 = vmatprep.subr.mxu0 0.0
    %1380 = vmatpush1.msra.mxu0 0.0
    %1381 = vmatprep.subr.mxu0 0.0
    %1382 = vmatpush1.msra.mxu0 0.0
    %1383 = vmatprep.subr.mxu0 0.0
    %1384 = vmatpush1.msra.mxu0 0.0
    %1385 = vmatprep.subr.mxu0 0.0
    %1386 = vmatpush1.msra.mxu0 0.0
    %1387 = vmatprep.subr.mxu0 0.0
    %1388 = vmatpush1.msra.mxu0 0.0
    %1389 = vmatprep.subr.mxu0 0.0
    %1390 = vmatpush1.msra.mxu0 0.0
    %1391 = vmatprep.subr.mxu0 0.0
    %1392 = vmatpush1.msra.mxu0 0.0
    %1393 = vmatprep.subr.mxu0 0.0
    %1394 = vmatpush1.msra.mxu0 0.0
    %1395 = vmatprep.subr.mxu0 0.0
    %1396 = vmatpush1.msra.mxu0 0.0
    %1397 = vmatprep.subr.mxu0 0.0
    %1398 = vmatpush1.msra.mxu0 0.0
    %1399 = vmatprep.subr.mxu0 0.0
    %1400 = vmatpush1.msra.mxu0 0.0
    %1401 = vmatprep.mubr.f32.mxu0 0.0
    %1402 = vmatmul.mubr.f32.gmra.mrb[0].mxu0 %v1334
    %v1403 = vpop.f32.mrb[0].mxu0
    %v1404 = vadd.f32 0.0, %v1403
    %v1405 = vpop.f32.mrb[0].mxu0
    %v1406 = vadd.f32 0.0, %v1405
    %1407 = vdwg.mxu0
    %1408 = vmatprep.subr.mxu0 0.0
    %1409 = vmatpush1.msra.mxu0 %v24
    %1410 = vmatprep.subr.mxu0 0.0
    %1411 = vmatpush1.msra.mxu0 %v27
    %1412 = vmatprep.subr.mxu0 0.0
    %1413 = vmatpush1.msra.mxu0 %v30
    %1414 = vmatprep.subr.mxu0 0.0
    %1415 = vmatpush1.msra.mxu0 %v33
    %1416 = vmatprep.subr.mxu0 0.0
    %1417 = vmatpush1.msra.mxu0 %v36
    %1418 = vmatprep.subr.mxu0 0.0
    %1419 = vmatpush1.msra.mxu0 %v39
    %1420 = vmatprep.subr.mxu0 0.0
    %1421 = vmatpush1.msra.mxu0 %v42
    %1422 = vmatprep.subr.mxu0 0.0
    %1423 = vmatpush1.msra.mxu0 %v45
    %1424 = vmatprep.subr.mxu0 0.0
    %1425 = vmatpush1.msra.mxu0 %v48
    %1426 = vmatprep.subr.mxu0 0.0
    %1427 = vmatpush1.msra.mxu0 %v51
    %1428 = vmatprep.subr.mxu0 0.0
    %1429 = vmatpush1.msra.mxu0 %v54
    %1430 = vmatprep.subr.mxu0 0.0
    %1431 = vmatpush1.msra.mxu0 %v57
    %1432 = vmatprep.subr.mxu0 0.0
    %1433 = vmatpush1.msra.mxu0 %v60
    %1434 = vmatprep.subr.mxu0 0.0
    %1435 = vmatpush1.msra.mxu0 %v63
    %1436 = vmatprep.subr.mxu0 0.0
    %1437 = vmatpush1.msra.mxu0 %v66
    %1438 = vmatprep.subr.mxu0 0.0
    %1439 = vmatpush1.msra.mxu0 %v69
    %1440 = vmatprep.subr.mxu0 0.0
    %1441 = vmatpush1.msra.mxu0 0.0
    %1442 = vmatprep.subr.mxu0 0.0
    %1443 = vmatpush1.msra.mxu0 0.0
    %1444 = vmatprep.subr.mxu0 0.0
    %1445 = vmatpush1.msra.mxu0 0.0
    %1446 = vmatprep.subr.mxu0 0.0
    %1447 = vmatpush1.msra.mxu0 0.0
    %1448 = vmatprep.subr.mxu0 0.0
    %1449 = vmatpush1.msra.mxu0 0.0
    %1450 = vmatprep.subr.mxu0 0.0
    %1451 = vmatpush1.msra.mxu0 0.0
    %1452 = vmatprep.subr.mxu0 0.0
    %1453 = vmatpush1.msra.mxu0 0.0
    %1454 = vmatprep.subr.mxu0 0.0
    %1455 = vmatpush1.msra.mxu0 0.0
    %1456 = vmatprep.subr.mxu0 0.0
    %1457 = vmatpush1.msra.mxu0 0.0
    %1458 = vmatprep.subr.mxu0 0.0
    %1459 = vmatpush1.msra.mxu0 0.0
    %1460 = vmatprep.subr.mxu0 0.0
    %1461 = vmatpush1.msra.mxu0 0.0
    %1462 = vmatprep.subr.mxu0 0.0
    %1463 = vmatpush1.msra.mxu0 0.0
    %1464 = vmatprep.subr.mxu0 0.0
    %1465 = vmatpush1.msra.mxu0 0.0
    %1466 = vmatprep.subr.mxu0 0.0
    %1467 = vmatpush1.msra.mxu0 0.0
    %1468 = vmatprep.subr.mxu0 0.0
    %1469 = vmatpush1.msra.mxu0 0.0
    %1470 = vmatprep.subr.mxu0 0.0
    %1471 = vmatpush1.msra.mxu0 0.0
    %1472 = vmatprep.mubr.f32.mxu0 0.0
    %1473 = vmatmul.mubr.f32.gmra.mrb[0].mxu0 %v1334
    %v1474 = vpop.f32.mrb[0].mxu0
    %v1475 = vadd.f32 0.0, %v1474
    %v1476 = vpop.f32.mrb[0].mxu0
    %1477 = vdwg.mxu0
    %s1478 = scalar_lea.vmem %s0, 280
    %v1479 = vld [vmem:[%s1478] sm:$0xff]
    %v1480 = vld [vmem:[%s1478 + $0x8] sm:$0xff]
    %v1481 = vld [vmem:[%s1478 + $0x10] sm:$0xff]
    %v1482 = vld [vmem:[%s1478 + $0x18] sm:$0xff]
    %v1483 = vld [vmem:[%s1478 + $0x20] sm:$0xff]
    %v1484 = vadd.f32 %v1479, %v1404
    %v1485 = vmul.f32 %v1484, 0.5
    %v1486 = vtanh.pop %v1485
    %v1487 = vadd.f32 %v1486, 1.0
    %v1488 = vmul.f32 %v1487, 0.5
    %v1489 = vadd.f32 %v1480, %v1406
    %v1490 = vtanh.pop %v1489
    %v1491 = vadd.f32 %v1481, %v1475
    %v1492 = vmul.f32 %v1491, 0.5
    %v1493 = vtanh.pop %v1492
    %v1494 = vadd.f32 %v1493, 1.0
    %v1495 = vmul.f32 %v1494, 0.5
    %v1496 = vmul.f32 %v1488, %v1482
    %v1497 = vsub.f32 1.0, %v1496
    %v1498 = vmul.f32 %v1497, %v1332
    %v1499 = vmul.f32 %v1496, %v1490
    %v1500 = vadd.f32 %v1498, %v1499
    %v1501 = vmul.f32 %v1500, 0.5
    %v1502 = vtanh.pop %v1501
    %v1503 = vadd.f32 %v1502, 1.0
    %v1504 = vmul.f32 %v1503, 0.5
    %v1505 = vsub.f32 1.0, %v1488
    %v1506 = vmul.f32 %v1505, %v1332
    %v1507 = vmul.f32 %v1488, %v1483
    %v1508 = vmul.f32 %v1507, %v1490
    %v1509 = vadd.f32 %v1506, %v1508
    %v1510 = vmul.f32 %v1509, 0.5
    %v1511 = vtanh.pop %v1510
    %v1512 = vadd.f32 %v1511, 1.0
    %v1513 = vmul.f32 %v1512, 0.5
    %v1514 = vtanh.pop %v1504
    %v1515 = vadd.f32 %v1495, %v1514
    %s1516 = scalar_lea.vmem %s2, 56
    %1517 = vst [vmem:[%s1516] sm:$0xff] %v1515
    %1518 = vst [vmem:[#allocation2] sm:$0xff] %v1515
    %1519 = vst [vmem:[#allocation4] sm:$0xff] %v1513
    // Predicated region
    $region14: #{stacked_time_lstm.2} parent=1 // pred_check
      _
    $region15: #{stacked_time_lstm.2} parent=1 // pred_check_branch
      %1521 = sbr.rel (0) target = $region17
    $region16: #{stacked_time_lstm.2} parent=1 // pred_region
      _
    $region17: #{stacked_time_lstm.2} parent=1 // pred_fallthru
      _
    // Predicated region
    $region18: #{stacked_time_lstm.2} parent=1 // pred_check
      _
    $region19: #{stacked_time_lstm.2} parent=1 // pred_check_branch
      %1523 = sbr.rel (0) target = $region21
    $region20: #{stacked_time_lstm.2} parent=1 // pred_region
      %s1525 = ssub.s32 128, 128
      %1526 = vsyncadd [#allocation3], %s1525
      %s1528 = sshll.u32 [#allocation2], 4
      %s1529 = int_to_ptr.vmem [resolvable:$true] %s1528
      %1531 = dma.vmem_to_hbm [thread:$0]  %s1529, 128, %s3, [#allocation3]
    $region21: #{stacked_time_lstm.2} parent=1 // pred_fallthru
      _
    // Predicated region
    $region22: #{stacked_time_lstm.2} parent=1 // pred_check
      _
    $region23: #{stacked_time_lstm.2} parent=1 // pred_check_branch
      %1533 = sbr.rel (0) target = $region25
    $region24: #{stacked_time_lstm.2} parent=1 // pred_region
      %s1535 = ssub.s32 128, 128
      %1536 = vsyncadd [#allocation5], %s1535
      %s1538 = sshll.u32 [#allocation4], 4
      %s1539 = int_to_ptr.vmem [resolvable:$true] %s1538
      %1541 = dma.vmem_to_hbm [thread:$0]  %s1539, 128, %s4, [#allocation5]
    $region25: #{stacked_time_lstm.2} parent=1 // pred_fallthru
      _
    // Predicated region
    $region26: #{stacked_time_lstm.2} parent=1 // pred_check
      _
    $region27: #{stacked_time_lstm.2} parent=1 // pred_check_branch
      %1543 = sbr.rel (0) target = $region29
    $region28: #{stacked_time_lstm.2} parent=1 // pred_region
      _
    $region29: #{stacked_time_lstm.2} parent=1 // pred_fallthru
      _
    // Predicated region
    $region30: #{stacked_time_lstm.2} parent=1 // pred_check
      _
    $region31: #{stacked_time_lstm.2} parent=1 // pred_check_branch
      %1545 = sbr.rel (0) target = $region33
    $region32: #{stacked_time_lstm.2} parent=1 // pred_region
      %1546 = dma.done [#allocation3], 128
    $region33: #{stacked_time_lstm.2} parent=1 // pred_fallthru
      _
    // Predicated region
    $region34: #{stacked_time_lstm.2} parent=1 // pred_check
      _
    $region35: #{stacked_time_lstm.2} parent=1 // pred_check_branch
      %1548 = sbr.rel (0) target = $region37
    $region36: #{stacked_time_lstm.2} parent=1 // pred_region
      %1549 = dma.done [#allocation5], 128
    $region37: #{stacked_time_lstm.2} parent=1 // pred_fallthru
      _
    %1550 = vsyncpa [#allocation3], 1
    %1551 = vsyncpa [#allocation5], 1

</llo_original>
